<compile_context>
chip_gen: v6e
topology: v6e:2x2x1
jax: 0.10.0
libtpu: 0.0.40
codegen_flags: <defaults>
</compile_context>

<pallas_src>
import functools

import jax
import jax.numpy as jnp
from jax.experimental import pallas as pl
from jax.experimental.pallas import tpu as pltpu

_VMEM_LIMIT = 32 * 1024 * 1024  # safe on v5e / v6e / v7x


def _round_up(v, m):
    return (v + m - 1) // m * m


def _largest_divisor(total, per_unit_bytes, budget):
    """Largest divisor `pb` of `total` with pb * per_unit_bytes <= budget."""
    best = 1
    for cand in range(1, total + 1):
        if total % cand == 0 and cand * per_unit_bytes <= budget:
            best = cand
    return best


# ------------------------------ kernels --------------------------------------

def _stage1_kernel(x_ref, m_ref, s_ref, t_ref, w_ref, o_ref, stats_ref):
    """BN1 + ReLU + 1x1x1 conv over a group of depth planes, plus sum/sumsq."""
    x = x_ref[0]                                                  # (Cin, Pb*Rp)
    # mask keeps the conv zero-padding positions exactly zero (relu(bn(0))!=0),
    # which also keeps the emitted BN statistics exact.
    act = jnp.maximum(x * s_ref[...] + t_ref[...], 0.0) * m_ref[...]
    y = jnp.dot(w_ref[...], act.astype(jnp.bfloat16),
                preferred_element_type=jnp.float32)               # (Cmid, Pb*Rp)
    o_ref[0] = y.astype(o_ref.dtype)
    ssum = jnp.sum(y, axis=1, keepdims=True)                      # (Cmid, 1)
    ssq = jnp.sum(y * y, axis=1, keepdims=True)                   # (Cmid, 1)
    stats_ref[0, 0] = jnp.concatenate([ssum, ssq], axis=1)        # (Cmid, 2)


def _stage2_kernel(y1_ref, mf_ref, mo_ref, s_ref, t_ref, w_ref, o_ref,
                   stats_ref, *, rp, pb, win_lanes, offsets):
    """Fused BN2 + ReLU + 3x3x3 conv (stride 1, pad 1) for Pb output planes.

    y1_ref holds the whole padded volume of one batch element (block index is
    constant along the plane-group axis -> DMA'd once per batch element).  The
    conv is ONE im2col GEMM: (Cmid, 27*Cmid) @ (27*Cmid, Pb*Rp).  The tap
    offsets already include the recentering shift, so the GEMM output columns
    line up with the stored (centered) layout directly.
    """
    d = pl.program_id(1)
    base = pl.multiple_of(d * (pb * rp), 128)
    win = y1_ref[0, :, pl.ds(base, win_lanes)].astype(jnp.float32)  # (Cmid, WL)
    mwin = mf_ref[:, pl.ds(base, win_lanes)]                        # (1,    WL)
    # cast to bf16 once, BEFORE building the 27-slice slab (half the bytes).
    act = (jnp.maximum(win * s_ref[...] + t_ref[...], 0.0) * mwin
           ).astype(jnp.bfloat16)
    cols = pb * rp
    slab = jnp.concatenate([act[:, off:off + cols] for off in offsets], axis=0)
    y = jnp.dot(w_ref[...], slab, preferred_element_type=jnp.float32)
    y = y * mo_ref[...]                      # exact zeros at padding positions
    o_ref[0] = y.astype(o_ref.dtype)
    ssum = jnp.sum(y, axis=1, keepdims=True)
    ssq = jnp.sum(y * y, axis=1, keepdims=True)
    stats_ref[0, 0] = jnp.concatenate([ssum, ssq], axis=1)


def _stage3_kernel(y2_ref, s_ref, t_ref, w_ref, o_ref):
    """BN3 + ReLU + 1x1x1 conv over Pb planes (padding lanes cropped later)."""
    x = y2_ref[0].astype(jnp.float32)                             # (Cmid, Pb*Rp)
    act = jnp.maximum(x * s_ref[...] + t_ref[...], 0.0)
    o_ref[0] = jnp.dot(w_ref[...], act.astype(jnp.bfloat16),
                       preferred_element_type=jnp.float32)        # (Cout, Pb*Rp)


# ------------------------------ wrapper --------------------------------------

def _bn_fold(gamma, beta, mean, var, eps):
    s = gamma / jnp.sqrt(var + eps)
    return (s.reshape(-1, 1).astype(jnp.float32),
            (beta - mean * s).reshape(-1, 1).astype(jnp.float32))


def _moments_from_stats(stats, cnt):
    """stats: (N, G, C, 2) per-step [sum, sumsq] partials -> (mean, var)."""
    ssum = jnp.sum(stats[..., 0], axis=(0, 1))
    ssq = jnp.sum(stats[..., 1], axis=(0, 1))
    mean = ssum / cnt
    # one-pass variance; clamp guards tiny negative values from rounding.
    var = jnp.maximum(ssq / cnt - mean * mean, 0.0)
    return mean, var


def pre_activation_bottleneck(x, g1, b1, w1, g2, b2, w2, g3, b3, w3, eps=1e-5):
    """Forward of PreActivationBottleneck (stride=1, downsample=None), NCDHW."""
    N, Cin, D, H, W = x.shape
    Cmid = w1.shape[0]
    Cout = w3.shape[0]
    assert Cout == Cin, "stride=1/downsample=None requires inplanes == planes*4"

    Hp, Wp = H + 2, W + 2
    Rp = _round_up(Hp * Wp, 128)          # lanes per padded depth plane
    Dy = D + 4                            # 2 leading + 2 trailing zero planes

    f32 = jnp.float32
    x = x.astype(f32)
    cnt = float(N * D * H * W)

    # ---- pack x: real (d, h, w) -> plane d+2, lane (h+1)*Wp + (w+1) ----------
    xp = jnp.pad(x, ((0, 0), (0, 0), (2, 2), (1, 1), (1, 1)))
    xp = xp.reshape(N, Cin, Dy, Hp * Wp)
    xp = jnp.pad(xp, ((0, 0), (0, 0), (0, 0), (0, Rp - Hp * Wp)))
    xp = xp.reshape(N, Cin, Dy * Rp)

    m = jnp.pad(jnp.ones((1, D, H, W), f32), ((0, 0), (2, 2), (1, 1), (1, 1)))
    m = jnp.pad(m.reshape(1, Dy, Hp * Wp), ((0, 0), (0, 0), (0, Rp - Hp * Wp)))
    mask_in = m[:, 2, :]                   # (1, Rp): interior mask, real plane
    mask_full = m.reshape(1, Dy * Rp)      # (1, Dy*Rp): plane validity*interior

    # ---- weights -> GEMM matrices (bf16 operands for the MXU) ----------------
    w1m = w1.reshape(Cmid, Cin).astype(jnp.bfloat16)
    w2m = jnp.transpose(w2, (0, 2, 3, 4, 1)).reshape(Cmid, 27 * Cmid)
    w2m = w2m.astype(jnp.bfloat16)         # tap t = kd*9 + kh*3 + kw, i fastest
    w3m = w3.reshape(Cout, Cmid).astype(jnp.bfloat16)

    # ---- plane-group sizes: widen lane blocks to amortize per-step overhead --
    budget = 2 * 1024 * 1024
    Pb1 = _largest_divisor(Dy, (Cin * 4 + Cmid * 2) * Rp, budget)
    Pb2 = _largest_divisor(D, (27 * Cmid * 2 + Cmid * 12) * Rp, 2 * budget)
    Pb3 = _largest_divisor(D, (Cmid * 2 + Cout * 4) * Rp, budget)
    G1, G2, G3 = Dy // Pb1, D // Pb2, D // Pb3

    params_par = pltpu.CompilerParams(
        dimension_semantics=("parallel", "parallel"),
        vmem_limit_bytes=_VMEM_LIMIT)
    params_s2 = pltpu.CompilerParams(
        dimension_semantics=("parallel", "arbitrary"),   # megacore split on N
        vmem_limit_bytes=_VMEM_LIMIT)

    # ---- bn1 batch stats of x (single fused sum/sumsq pass) ------------------
    mu1 = jnp.sum(x, axis=(0, 2, 3, 4)) / cnt
    var1 = jnp.maximum(jnp.sum(x * x, axis=(0, 2, 3, 4)) / cnt - mu1 * mu1, 0.0)
    s1, t1 = _bn_fold(g1, b1, mu1, var1, eps)

    # ---- stage 1: y1 = conv1(relu(bn1(x))), pointwise, Pb1 planes / step -----
    y1, st1 = pl.pallas_call(
        _stage1_kernel,
        out_shape=(jax.ShapeDtypeStruct((N, Cmid, Dy * Rp), jnp.bfloat16),
                   jax.ShapeDtypeStruct((N, G1, Cmid, 2), f32)),
        grid=(N, G1),
        in_specs=[
            pl.BlockSpec((1, Cin, Pb1 * Rp), lambda n, d: (n, 0, d)),
            pl.BlockSpec((1, Pb1 * Rp), lambda n, d: (0, d)),
            pl.BlockSpec((Cin, 1), lambda n, d: (0, 0)),
            pl.BlockSpec((Cin, 1), lambda n, d: (0, 0)),
            pl.BlockSpec((Cmid, Cin), lambda n, d: (0, 0)),
        ],
        out_specs=(pl.BlockSpec((1, Cmid, Pb1 * Rp), lambda n, d: (n, 0, d)),
                   pl.BlockSpec((1, 1, Cmid, 2), lambda n, d: (n, d, 0, 0))),
        compiler_params=params_par,
    )(xp, mask_full, s1, t1, w1m)

    mu2, var2 = _moments_from_stats(st1, cnt)
    s2, t2 = _bn_fold(g2, b2, mu2, var2, eps)

    # ---- stage 2: y2 = conv2(relu(bn2(y1))), 3x3x3, Pb2 output planes / step -
    extra = _round_up(Wp + 1, 128)
    win_lanes = (Pb2 + 3) * Rp + extra
    assert (G2 - 1) * Pb2 * Rp + win_lanes <= Dy * Rp
    # tap offset already folds the (Wp+1)-lane recentering shift.
    offsets = tuple((kd + 1) * Rp + (kh - 1) * Wp + (kw - 1)
                    for kd in range(3) for kh in range(3) for kw in range(3))
    mask_out = jnp.tile(mask_in, (1, Pb2))            # (1, Pb2*Rp)

    y2, st2 = pl.pallas_call(
        functools.partial(_stage2_kernel, rp=Rp, pb=Pb2,
                          win_lanes=win_lanes, offsets=offsets),
        out_shape=(jax.ShapeDtypeStruct((N, Cmid, D * Rp), jnp.bfloat16),
                   jax.ShapeDtypeStruct((N, G2, Cmid, 2), f32)),
        grid=(N, G2),
        in_specs=[
            pl.BlockSpec((1, Cmid, Dy * Rp), lambda n, d: (n, 0, 0)),
            pl.BlockSpec((1, Dy * Rp), lambda n, d: (0, 0)),
            pl.BlockSpec((1, Pb2 * Rp), lambda n, d: (0, 0)),
            pl.BlockSpec((Cmid, 1), lambda n, d: (0, 0)),
            pl.BlockSpec((Cmid, 1), lambda n, d: (0, 0)),
            pl.BlockSpec((Cmid, 27 * Cmid), lambda n, d: (0, 0)),
        ],
        out_specs=(pl.BlockSpec((1, Cmid, Pb2 * Rp), lambda n, d: (n, 0, d)),
                   pl.BlockSpec((1, 1, Cmid, 2), lambda n, d: (n, d, 0, 0))),
        compiler_params=params_s2,
    )(y1, mask_full, mask_out, s2, t2, w2m)

    mu3, var3 = _moments_from_stats(st2, cnt)
    s3, t3 = _bn_fold(g3, b3, mu3, var3, eps)

    # ---- stage 3: conv3(relu(bn3(y2))), pointwise, Pb3 planes / step ---------
    out = pl.pallas_call(
        _stage3_kernel,
        out_shape=jax.ShapeDtypeStruct((N, Cout, D * Rp), f32),
        grid=(N, G3),
        in_specs=[
            pl.BlockSpec((1, Cmid, Pb3 * Rp), lambda n, d: (n, 0, d)),
            pl.BlockSpec((Cmid, 1), lambda n, d: (0, 0)),
            pl.BlockSpec((Cmid, 1), lambda n, d: (0, 0)),
            pl.BlockSpec((Cout, Cmid), lambda n, d: (0, 0)),
        ],
        out_specs=pl.BlockSpec((1, Cout, Pb3 * Rp), lambda n, d: (n, 0, d)),
        compiler_params=params_par,
    )(y2, s3, t3, w3m)

    # ---- unpack (crop padding) + residual add ---------------------------------
    out = out.reshape(N, Cout, D, Rp)[:, :, :, :Hp * Wp]
    out = out.reshape(N, Cout, D, Hp, Wp)[:, :, :, 1:H + 1, 1:W + 1]
    return out + x


# ------------------------ pure-JAX reference (sanity) -------------------------

def reference_forward(x, g1, b1, w1, g2, b2, w2, g3, b3, w3, eps=1e-5):
    def bn_relu(t, g, b):
        mean = t.mean(axis=(0, 2, 3, 4), keepdims=True)
        var = t.var(axis=(0, 2, 3, 4), keepdims=True)
        tn = (t - mean) / jnp.sqrt(var + eps)
        return jax.nn.relu(tn * g.reshape(1, -1, 1, 1, 1) +
                           b.reshape(1, -1, 1, 1, 1))

    def conv(t, w, pad):
        return jax.lax.conv_general_dilated(
            t, w, window_strides=(1, 1, 1), padding=[(pad, pad)] * 3,
            dimension_numbers=("NCDHW", "OIDHW", "NCDHW"),
            precision=jax.lax.Precision.HIGHEST)

    out = conv(bn_relu(x, g1, b1), w1, 0)
    out = conv(bn_relu(out, g2, b2), w2, 1)
    out = conv(bn_relu(out, g3, b3), w3, 0)
    return out + x


if __name__ == "__main__":
    # PreActivationBottleneck(inplanes=32, planes=8, stride=1, downsample=None)
    N, planes, D, H, W = 2, 8, 8, 8, 8
    inplanes = planes * 4
    key = jax.random.PRNGKey(0)
    ks = jax.random.split(key, 10)

    x = jax.random.normal(ks[0], (N, inplanes, D, H, W), jnp.float32)
    w1 = 0.1 * jax.random.normal(ks[1], (planes, inplanes, 1, 1, 1), jnp.float32)
    w2 = 0.1 * jax.random.normal(ks[2], (planes, planes, 3, 3, 3), jnp.float32)
    w3 = 0.1 * jax.random.normal(ks[3], (inplanes, planes, 1, 1, 1), jnp.float32)
    g1 = 1.0 + 0.1 * jax.random.normal(ks[4], (inplanes,), jnp.float32)
    b1 = 0.1 * jax.random.normal(ks[5], (inplanes,), jnp.float32)
    g2 = 1.0 + 0.1 * jax.random.normal(ks[6], (planes,), jnp.float32)
    b2 = 0.1 * jax.random.normal(ks[7], (planes,), jnp.float32)
    g3 = 1.0 + 0.1 * jax.random.normal(ks[8], (planes,), jnp.float32)
    b3 = 0.1 * jax.random.normal(ks[9], (planes,), jnp.float32)

    fwd = jax.jit(pre_activation_bottleneck)
    out = fwd(x, g1, b1, w1, g2, b2, w2, g3, b3, w3)
    out = jax.block_until_ready(out)

    ref = reference_forward(x, g1, b1, w1, g2, b2, w2, g3, b3, w3)
    assert out.shape == (N, inplanes, D, H, W), out.shape
    # bf16 matmul operands + bf16-stored intermediates vs HIGHEST-precision
    # reference -> allow a little more slack than pure-f32 would need.
    max_err = float(jnp.max(jnp.abs(out - ref)))
    assert max_err < 4e-2, f"max abs error too large: {max_err}"

    print("KERNEL_OK")
</pallas_src>

<mosaic_0001>
module attributes {stable_mosaic.version = 11 : i64} {
  func.func @_stage1_kernel(%arg0: i32, %arg1: i32, %arg2: memref<1x32x1536xf32, #tpu.memory_space<vmem>>, %arg3: memref<1x1536xf32, #tpu.memory_space<vmem>>, %arg4: memref<32x1xf32, #tpu.memory_space<vmem>>, %arg5: memref<32x1xf32, #tpu.memory_space<vmem>>, %arg6: memref<8x32xbf16, #tpu.memory_space<vmem>>, %arg7: memref<1x8x1536xbf16, #tpu.memory_space<vmem>>, %arg8: memref<1x1x8x2xf32, #tpu.memory_space<vmem>>) attributes {dimension_semantics = [#tpu.dimension_semantics<parallel>, #tpu.dimension_semantics<parallel>], iteration_bounds = array<i64: 2, 1>, scalar_prefetch = 0 : i64, scratch_operands = 0 : i64, tpu.core_type = #tpu.core_type<tc>, window_params = [{transform_indices = @transform_0, window_bounds = array<i64: 1, 32, 1536>}, {transform_indices = @transform_1, window_bounds = array<i64: 1, 1536>}, {pipeline_mode = #tpu.pipeline_mode<synchronous>, transform_indices = @transform_2, window_bounds = array<i64: 32, 1>}, {pipeline_mode = #tpu.pipeline_mode<synchronous>, transform_indices = @transform_3, window_bounds = array<i64: 32, 1>}, {pipeline_mode = #tpu.pipeline_mode<synchronous>, transform_indices = @transform_4, window_bounds = array<i64: 8, 32>}, {transform_indices = @transform_5, window_bounds = array<i64: 1, 8, 1536>}, {transform_indices = @transform_6, window_bounds = array<i64: 1, 1, 8, 2>}]} {
    %c0 = arith.constant 0 : index
    %c0_0 = arith.constant 0 : index
    %c0_1 = arith.constant 0 : index
    %0 = vector.load %arg2[%c0, %c0_0, %c0_1] : memref<1x32x1536xf32, #tpu.memory_space<vmem>>, vector<1x32x1536xf32>
    %1 = vector.shape_cast %0 : vector<1x32x1536xf32> to vector<32x1536xf32>
    %c0_2 = arith.constant 0 : index
    %c0_3 = arith.constant 0 : index
    %2 = vector.load %arg4[%c0_2, %c0_3] : memref<32x1xf32, #tpu.memory_space<vmem>>, vector<32x1xf32>
    %3 = vector.broadcast %2 : vector<32x1xf32> to vector<32x1536xf32>
    %4 = arith.mulf %1, %3 : vector<32x1536xf32>
    %c0_4 = arith.constant 0 : index
    %c0_5 = arith.constant 0 : index
    %5 = vector.load %arg5[%c0_4, %c0_5] : memref<32x1xf32, #tpu.memory_space<vmem>>, vector<32x1xf32>
    %6 = vector.broadcast %5 : vector<32x1xf32> to vector<32x1536xf32>
    %7 = arith.addf %4, %6 : vector<32x1536xf32>
    %cst = arith.constant 0.000000e+00 : f32
    %8 = vector.broadcast %cst : f32 to vector<32x1536xf32>
    %9 = arith.maximumf %7, %8 : vector<32x1536xf32>
    %c0_6 = arith.constant 0 : index
    %c0_7 = arith.constant 0 : index
    %10 = vector.load %arg3[%c0_6, %c0_7] : memref<1x1536xf32, #tpu.memory_space<vmem>>, vector<1x1536xf32>
    %11 = vector.broadcast %10 : vector<1x1536xf32> to vector<32x1536xf32>
    %12 = arith.mulf %9, %11 : vector<32x1536xf32>
    %c0_8 = arith.constant 0 : index
    %c0_9 = arith.constant 0 : index
    %13 = vector.load %arg6[%c0_8, %c0_9] : memref<8x32xbf16, #tpu.memory_space<vmem>>, vector<8x32xbf16>
    %14 = arith.truncf %12 : vector<32x1536xf32> to vector<32x1536xbf16>
    %cst_10 = arith.constant dense<0.000000e+00> : vector<8x1536xf32>
    %15 = tpu.matmul %13, %14, %cst_10 {dimension_numbers = #tpu.dot_dimension_numbers<[1], [0], [0], [1], [0, 0, 1, 1], [], []>} : vector<8x32xbf16>, vector<32x1536xbf16>, vector<8x1536xf32> -> vector<8x1536xf32>
    %16 = arith.truncf %15 : vector<8x1536xf32> to vector<8x1536xbf16>
    %c0_11 = arith.constant 0 : index
    %c0_12 = arith.constant 0 : index
    %c0_13 = arith.constant 0 : index
    %17 = vector.load %arg7[%c0_11, %c0_12, %c0_13] : memref<1x8x1536xbf16, #tpu.memory_space<vmem>>, vector<1x8x1536xbf16>
    %18 = vector.shape_cast %17 : vector<1x8x1536xbf16> to vector<8x1536xbf16>
    %19 = vector.shape_cast %16 : vector<8x1536xbf16> to vector<1x8x1536xbf16>
    tpu.vector_store %arg7[%c0_11, %c0_12, %c0_13], %19 {strides = array<i32>} : memref<1x8x1536xbf16, #tpu.memory_space<vmem>>, vector<1x8x1536xbf16>,
    %cst_14 = arith.constant dense<0.000000e+00> : vector<8xf32>
    %20 = vector.multi_reduction <add>, %15, %cst_14 [1] : vector<8x1536xf32> to vector<8xf32>
    %21 = vector.shape_cast %20 : vector<8xf32> to vector<8x1xf32>
    %22 = arith.mulf %15, %15 : vector<8x1536xf32>
    %cst_15 = arith.constant dense<0.000000e+00> : vector<8xf32>
    %23 = vector.multi_reduction <add>, %22, %cst_15 [1] : vector<8x1536xf32> to vector<8xf32>
    %24 = vector.shape_cast %23 : vector<8xf32> to vector<8x1xf32>
    %25 = tpu.concatenate %21, %24 in 1 : vector<8x1xf32>, vector<8x1xf32> -> vector<8x2xf32>
    %c0_16 = arith.constant 0 : index
    %c0_17 = arith.constant 0 : index
    %c0_18 = arith.constant 0 : index
    %c0_19 = arith.constant 0 : index
    %26 = vector.load %arg8[%c0_16, %c0_17, %c0_18, %c0_19] : memref<1x1x8x2xf32, #tpu.memory_space<vmem>>, vector<1x1x8x2xf32>
    %27 = vector.shape_cast %26 : vector<1x1x8x2xf32> to vector<8x2xf32>
    %28 = vector.shape_cast %25 : vector<8x2xf32> to vector<1x1x8x2xf32>
    tpu.vector_store %arg8[%c0_16, %c0_17, %c0_18, %c0_19], %28 {strides = array<i32>} : memref<1x1x8x2xf32, #tpu.memory_space<vmem>>, vector<1x1x8x2xf32>,
    return
  }
  func.func @transform_0(%arg0: i32, %arg1: i32) -> (i32, i32, i32) {
    %c0_i32 = arith.constant 0 : i32
    %c0_i32_0 = arith.constant 0 : i32
    return %arg0, %c0_i32, %arg1 : i32, i32, i32
  }
  func.func @transform_1(%arg0: i32, %arg1: i32) -> (i32, i32) {
    %c0_i32 = arith.constant 0 : i32
    %c0_i32_0 = arith.constant 0 : i32
    return %c0_i32, %arg1 : i32, i32
  }
  func.func @transform_2(%arg0: i32, %arg1: i32) -> (i32, i32) {
    %c0_i32 = arith.constant 0 : i32
    %c0_i32_0 = arith.constant 0 : i32
    %c0_i32_1 = arith.constant 0 : i32
    return %c0_i32, %c0_i32_0 : i32, i32
  }
  func.func @transform_3(%arg0: i32, %arg1: i32) -> (i32, i32) {
    %c0_i32 = arith.constant 0 : i32
    %c0_i32_0 = arith.constant 0 : i32
    %c0_i32_1 = arith.constant 0 : i32
    return %c0_i32, %c0_i32_0 : i32, i32
  }
  func.func @transform_4(%arg0: i32, %arg1: i32) -> (i32, i32) {
    %c0_i32 = arith.constant 0 : i32
    %c0_i32_0 = arith.constant 0 : i32
    %c0_i32_1 = arith.constant 0 : i32
    return %c0_i32, %c0_i32_0 : i32, i32
  }
  func.func @transform_5(%arg0: i32, %arg1: i32) -> (i32, i32, i32) {
    %c0_i32 = arith.constant 0 : i32
    %c0_i32_0 = arith.constant 0 : i32
    return %arg0, %c0_i32, %arg1 : i32, i32, i32
  }
  func.func @transform_6(%arg0: i32, %arg1: i32) -> (i32, i32, i32, i32) {
    %c0_i32 = arith.constant 0 : i32
    %c0_i32_0 = arith.constant 0 : i32
    %c0_i32_1 = arith.constant 0 : i32
    return %arg0, %arg1, %c0_i32, %c0_i32_0 : i32, i32, i32, i32
  }
}

module attributes {stable_mosaic.version = 11 : i64} {
  func.func @_stage3_kernel(%arg0: i32, %arg1: i32, %arg2: memref<1x8x1024xbf16, #tpu.memory_space<vmem>>, %arg3: memref<8x1xf32, #tpu.memory_space<vmem>>, %arg4: memref<8x1xf32, #tpu.memory_space<vmem>>, %arg5: memref<32x8xbf16, #tpu.memory_space<vmem>>, %arg6: memref<1x32x1024xf32, #tpu.memory_space<vmem>>) attributes {dimension_semantics = [#tpu.dimension_semantics<parallel>, #tpu.dimension_semantics<parallel>], iteration_bounds = array<i64: 2, 1>, scalar_prefetch = 0 : i64, scratch_operands = 0 : i64, tpu.core_type = #tpu.core_type<tc>, window_params = [{transform_indices = @transform_0, window_bounds = array<i64: 1, 8, 1024>}, {pipeline_mode = #tpu.pipeline_mode<synchronous>, transform_indices = @transform_1, window_bounds = array<i64: 8, 1>}, {pipeline_mode = #tpu.pipeline_mode<synchronous>, transform_indices = @transform_2, window_bounds = array<i64: 8, 1>}, {pipeline_mode = #tpu.pipeline_mode<synchronous>, transform_indices = @transform_3, window_bounds = array<i64: 32, 8>}, {transform_indices = @transform_4, window_bounds = array<i64: 1, 32, 1024>}]} {
    %c0 = arith.constant 0 : index
    %c0_0 = arith.constant 0 : index
    %c0_1 = arith.constant 0 : index
    %0 = vector.load %arg2[%c0, %c0_0, %c0_1] : memref<1x8x1024xbf16, #tpu.memory_space<vmem>>, vector<1x8x1024xbf16>
    %1 = vector.shape_cast %0 : vector<1x8x1024xbf16> to vector<8x1024xbf16>
    %2 = arith.extf %1 : vector<8x1024xbf16> to vector<8x1024xf32>
    %c0_2 = arith.constant 0 : index
    %c0_3 = arith.constant 0 : index
    %3 = vector.load %arg3[%c0_2, %c0_3] : memref<8x1xf32, #tpu.memory_space<vmem>>, vector<8x1xf32>
    %4 = vector.broadcast %3 : vector<8x1xf32> to vector<8x1024xf32>
    %5 = arith.mulf %2, %4 : vector<8x1024xf32>
    %c0_4 = arith.constant 0 : index
    %c0_5 = arith.constant 0 : index
    %6 = vector.load %arg4[%c0_4, %c0_5] : memref<8x1xf32, #tpu.memory_space<vmem>>, vector<8x1xf32>
    %7 = vector.broadcast %6 : vector<8x1xf32> to vector<8x1024xf32>
    %8 = arith.addf %5, %7 : vector<8x1024xf32>
    %cst = arith.constant 0.000000e+00 : f32
    %9 = vector.broadcast %cst : f32 to vector<8x1024xf32>
    %10 = arith.maximumf %8, %9 : vector<8x1024xf32>
    %c0_6 = arith.constant 0 : index
    %c0_7 = arith.constant 0 : index
    %11 = vector.load %arg5[%c0_6, %c0_7] : memref<32x8xbf16, #tpu.memory_space<vmem>>, vector<32x8xbf16>
    %12 = arith.truncf %10 : vector<8x1024xf32> to vector<8x1024xbf16>
    %cst_8 = arith.constant dense<0.000000e+00> : vector<32x1024xf32>
    %13 = tpu.matmul %11, %12, %cst_8 {dimension_numbers = #tpu.dot_dimension_numbers<[1], [0], [0], [1], [0, 0, 1, 1], [], []>} : vector<32x8xbf16>, vector<8x1024xbf16>, vector<32x1024xf32> -> vector<32x1024xf32>
    %c0_9 = arith.constant 0 : index
    %c0_10 = arith.constant 0 : index
    %c0_11 = arith.constant 0 : index
    %14 = vector.load %arg6[%c0_9, %c0_10, %c0_11] : memref<1x32x1024xf32, #tpu.memory_space<vmem>>, vector<1x32x1024xf32>
    %15 = vector.shape_cast %14 : vector<1x32x1024xf32> to vector<32x1024xf32>
    %16 = vector.shape_cast %13 : vector<32x1024xf32> to vector<1x32x1024xf32>
    tpu.vector_store %arg6[%c0_9, %c0_10, %c0_11], %16 {strides = array<i32>} : memref<1x32x1024xf32, #tpu.memory_space<vmem>>, vector<1x32x1024xf32>,
    return
  }
  func.func @transform_0(%arg0: i32, %arg1: i32) -> (i32, i32, i32) {
    %c0_i32 = arith.constant 0 : i32
    %c0_i32_0 = arith.constant 0 : i32
    return %arg0, %c0_i32, %arg1 : i32, i32, i32
  }
  func.func @transform_1(%arg0: i32, %arg1: i32) -> (i32, i32) {
    %c0_i32 = arith.constant 0 : i32
    %c0_i32_0 = arith.constant 0 : i32
    %c0_i32_1 = arith.constant 0 : i32
    return %c0_i32, %c0_i32_0 : i32, i32
  }
  func.func @transform_2(%arg0: i32, %arg1: i32) -> (i32, i32) {
    %c0_i32 = arith.constant 0 : i32
    %c0_i32_0 = arith.constant 0 : i32
    %c0_i32_1 = arith.constant 0 : i32
    return %c0_i32, %c0_i32_0 : i32, i32
  }
  func.func @transform_3(%arg0: i32, %arg1: i32) -> (i32, i32) {
    %c0_i32 = arith.constant 0 : i32
    %c0_i32_0 = arith.constant 0 : i32
    %c0_i32_1 = arith.constant 0 : i32
    return %c0_i32, %c0_i32_0 : i32, i32
  }
  func.func @transform_4(%arg0: i32, %arg1: i32) -> (i32, i32, i32) {
    %c0_i32 = arith.constant 0 : i32
    %c0_i32_0 = arith.constant 0 : i32
    return %arg0, %c0_i32, %arg1 : i32, i32, i32
  }
}

module attributes {stable_mosaic.version = 11 : i64} {
  func.func @_stage2_kernel(%arg0: i32, %arg1: i32, %arg2: memref<1x8x1536xbf16, #tpu.memory_space<vmem>>, %arg3: memref<1x1536xf32, #tpu.memory_space<vmem>>, %arg4: memref<1x1024xf32, #tpu.memory_space<vmem>>, %arg5: memref<8x1xf32, #tpu.memory_space<vmem>>, %arg6: memref<8x1xf32, #tpu.memory_space<vmem>>, %arg7: memref<8x216xbf16, #tpu.memory_space<vmem>>, %arg8: memref<1x8x1024xbf16, #tpu.memory_space<vmem>>, %arg9: memref<1x1x8x2xf32, #tpu.memory_space<vmem>>) attributes {dimension_semantics = [#tpu.dimension_semantics<parallel>, #tpu.dimension_semantics<arbitrary>], iteration_bounds = array<i64: 2, 1>, scalar_prefetch = 0 : i64, scratch_operands = 0 : i64, tpu.core_type = #tpu.core_type<tc>, window_params = [{transform_indices = @transform_0, window_bounds = array<i64: 1, 8, 1536>}, {pipeline_mode = #tpu.pipeline_mode<synchronous>, transform_indices = @transform_1, window_bounds = array<i64: 1, 1536>}, {pipeline_mode = #tpu.pipeline_mode<synchronous>, transform_indices = @transform_2, window_bounds = array<i64: 1, 1024>}, {pipeline_mode = #tpu.pipeline_mode<synchronous>, transform_indices = @transform_3, window_bounds = array<i64: 8, 1>}, {pipeline_mode = #tpu.pipeline_mode<synchronous>, transform_indices = @transform_4, window_bounds = array<i64: 8, 1>}, {pipeline_mode = #tpu.pipeline_mode<synchronous>, transform_indices = @transform_5, window_bounds = array<i64: 8, 216>}, {transform_indices = @transform_6, window_bounds = array<i64: 1, 8, 1024>}, {transform_indices = @transform_7, window_bounds = array<i64: 1, 1, 8, 2>}]} {
    %c1024_i32 = arith.constant 1024 : i32
    %0 = arith.muli %arg1, %c1024_i32 : i32
    %1 = tpu.assume_multiple %0, 128 : i32
    %c0 = arith.constant 0 : index
    %c0_0 = arith.constant 0 : index
    %2 = arith.index_cast %1 : i32 to index
    %3 = vector.load %arg2[%c0, %c0_0, %2] : memref<1x8x1536xbf16, #tpu.memory_space<vmem>>, vector<1x8x1536xbf16>
    %4 = vector.shape_cast %3 : vector<1x8x1536xbf16> to vector<8x1536xbf16>
    %5 = arith.extf %4 : vector<8x1536xbf16> to vector<8x1536xf32>
    %c0_1 = arith.constant 0 : index
    %6 = arith.index_cast %1 : i32 to index
    %7 = vector.load %arg3[%c0_1, %6] : memref<1x1536xf32, #tpu.memory_space<vmem>>, vector<1x1536xf32>
    %c0_2 = arith.constant 0 : index
    %c0_3 = arith.constant 0 : index
    %8 = vector.load %arg5[%c0_2, %c0_3] : memref<8x1xf32, #tpu.memory_space<vmem>>, vector<8x1xf32>
    %9 = vector.broadcast %8 : vector<8x1xf32> to vector<8x1536xf32>
    %10 = arith.mulf %5, %9 : vector<8x1536xf32>
    %c0_4 = arith.constant 0 : index
    %c0_5 = arith.constant 0 : index
    %11 = vector.load %arg6[%c0_4, %c0_5] : memref<8x1xf32, #tpu.memory_space<vmem>>, vector<8x1xf32>
    %12 = vector.broadcast %11 : vector<8x1xf32> to vector<8x1536xf32>
    %13 = arith.addf %10, %12 : vector<8x1536xf32>
    %cst = arith.constant 0.000000e+00 : f32
    %14 = vector.broadcast %cst : f32 to vector<8x1536xf32>
    %15 = arith.maximumf %13, %14 : vector<8x1536xf32>
    %16 = vector.broadcast %7 : vector<1x1536xf32> to vector<8x1536xf32>
    %17 = arith.mulf %15, %16 : vector<8x1536xf32>
    %18 = arith.truncf %17 : vector<8x1536xf32> to vector<8x1536xbf16>
    %19 = vector.extract_strided_slice %18 {offsets = [0, 117], sizes = [8, 1024], strides = [1, 1]} : vector<8x1536xbf16> to vector<8x1024xbf16>
    %20 = vector.extract_strided_slice %18 {offsets = [0, 118], sizes = [8, 1024], strides = [1, 1]} : vector<8x1536xbf16> to vector<8x1024xbf16>
    %21 = vector.extract_strided_slice %18 {offsets = [0, 119], sizes = [8, 1024], strides = [1, 1]} : vector<8x1536xbf16> to vector<8x1024xbf16>
    %22 = vector.extract_strided_slice %18 {offsets = [0, 127], sizes = [8, 1024], strides = [1, 1]} : vector<8x1536xbf16> to vector<8x1024xbf16>
    %23 = vector.extract_strided_slice %18 {offsets = [0, 128], sizes = [8, 1024], strides = [1, 1]} : vector<8x1536xbf16> to vector<8x1024xbf16>
    %24 = vector.extract_strided_slice %18 {offsets = [0, 129], sizes = [8, 1024], strides = [1, 1]} : vector<8x1536xbf16> to vector<8x1024xbf16>
    %25 = vector.extract_strided_slice %18 {offsets = [0, 137], sizes = [8, 1024], strides = [1, 1]} : vector<8x1536xbf16> to vector<8x1024xbf16>
    %26 = vector.extract_strided_slice %18 {offsets = [0, 138], sizes = [8, 1024], strides = [1, 1]} : vector<8x1536xbf16> to vector<8x1024xbf16>
    %27 = vector.extract_strided_slice %18 {offsets = [0, 139], sizes = [8, 1024], strides = [1, 1]} : vector<8x1536xbf16> to vector<8x1024xbf16>
    %28 = vector.extract_strided_slice %18 {offsets = [0, 245], sizes = [8, 1024], strides = [1, 1]} : vector<8x1536xbf16> to vector<8x1024xbf16>
    %29 = vector.extract_strided_slice %18 {offsets = [0, 246], sizes = [8, 1024], strides = [1, 1]} : vector<8x1536xbf16> to vector<8x1024xbf16>
    %30 = vector.extract_strided_slice %18 {offsets = [0, 247], sizes = [8, 1024], strides = [1, 1]} : vector<8x1536xbf16> to vector<8x1024xbf16>
    %31 = vector.extract_strided_slice %18 {offsets = [0, 255], sizes = [8, 1024], strides = [1, 1]} : vector<8x1536xbf16> to vector<8x1024xbf16>
    %32 = vector.extract_strided_slice %18 {offsets = [0, 256], sizes = [8, 1024], strides = [1, 1]} : vector<8x1536xbf16> to vector<8x1024xbf16>
    %33 = vector.extract_strided_slice %18 {offsets = [0, 257], sizes = [8, 1024], strides = [1, 1]} : vector<8x1536xbf16> to vector<8x1024xbf16>
    %34 = vector.extract_strided_slice %18 {offsets = [0, 265], sizes = [8, 1024], strides = [1, 1]} : vector<8x1536xbf16> to vector<8x1024xbf16>
    %35 = vector.extract_strided_slice %18 {offsets = [0, 266], sizes = [8, 1024], strides = [1, 1]} : vector<8x1536xbf16> to vector<8x1024xbf16>
    %36 = vector.extract_strided_slice %18 {offsets = [0, 267], sizes = [8, 1024], strides = [1, 1]} : vector<8x1536xbf16> to vector<8x1024xbf16>
    %37 = vector.extract_strided_slice %18 {offsets = [0, 373], sizes = [8, 1024], strides = [1, 1]} : vector<8x1536xbf16> to vector<8x1024xbf16>
    %38 = vector.extract_strided_slice %18 {offsets = [0, 374], sizes = [8, 1024], strides = [1, 1]} : vector<8x1536xbf16> to vector<8x1024xbf16>
    %39 = vector.extract_strided_slice %18 {offsets = [0, 375], sizes = [8, 1024], strides = [1, 1]} : vector<8x1536xbf16> to vector<8x1024xbf16>
    %40 = vector.extract_strided_slice %18 {offsets = [0, 383], sizes = [8, 1024], strides = [1, 1]} : vector<8x1536xbf16> to vector<8x1024xbf16>
    %41 = vector.extract_strided_slice %18 {offsets = [0, 384], sizes = [8, 1024], strides = [1, 1]} : vector<8x1536xbf16> to vector<8x1024xbf16>
    %42 = vector.extract_strided_slice %18 {offsets = [0, 385], sizes = [8, 1024], strides = [1, 1]} : vector<8x1536xbf16> to vector<8x1024xbf16>
    %43 = vector.extract_strided_slice %18 {offsets = [0, 393], sizes = [8, 1024], strides = [1, 1]} : vector<8x1536xbf16> to vector<8x1024xbf16>
    %44 = vector.extract_strided_slice %18 {offsets = [0, 394], sizes = [8, 1024], strides = [1, 1]} : vector<8x1536xbf16> to vector<8x1024xbf16>
    %45 = vector.extract_strided_slice %18 {offsets = [0, 395], sizes = [8, 1024], strides = [1, 1]} : vector<8x1536xbf16> to vector<8x1024xbf16>
    %46 = tpu.concatenate %19, %20, %21, %22, %23, %24, %25, %26, %27, %28, %29, %30, %31, %32, %33, %34 in 0 : vector<8x1024xbf16>, vector<8x1024xbf16>, vector<8x1024xbf16>, vector<8x1024xbf16>, vector<8x1024xbf16>, vector<8x1024xbf16>, vector<8x1024xbf16>, vector<8x1024xbf16>, vector<8x1024xbf16>, vector<8x1024xbf16>, vector<8x1024xbf16>, vector<8x1024xbf16>, vector<8x1024xbf16>, vector<8x1024xbf16>, vector<8x1024xbf16>, vector<8x1024xbf16> -> vector<128x1024xbf16>
    %47 = tpu.concatenate %35, %36, %37, %38, %39, %40, %41, %42, %43, %44, %45 in 0 : vector<8x1024xbf16>, vector<8x1024xbf16>, vector<8x1024xbf16>, vector<8x1024xbf16>, vector<8x1024xbf16>, vector<8x1024xbf16>, vector<8x1024xbf16>, vector<8x1024xbf16>, vector<8x1024xbf16>, vector<8x1024xbf16>, vector<8x1024xbf16> -> vector<88x1024xbf16>
    %48 = tpu.concatenate %46, %47 in 0 : vector<128x1024xbf16>, vector<88x1024xbf16> -> vector<216x1024xbf16>
    %c0_6 = arith.constant 0 : index
    %c0_7 = arith.constant 0 : index
    %49 = vector.load %arg7[%c0_6, %c0_7] : memref<8x216xbf16, #tpu.memory_space<vmem>>, vector<8x216xbf16>
    %cst_8 = arith.constant dense<0.000000e+00> : vector<8x1024xf32>
    %50 = tpu.matmul %49, %48, %cst_8 {dimension_numbers = #tpu.dot_dimension_numbers<[1], [0], [0], [1], [0, 0, 1, 1], [], []>} : vector<8x216xbf16>, vector<216x1024xbf16>, vector<8x1024xf32> -> vector<8x1024xf32>
    %c0_9 = arith.constant 0 : index
    %c0_10 = arith.constant 0 : index
    %51 = vector.load %arg4[%c0_9, %c0_10] : memref<1x1024xf32, #tpu.memory_space<vmem>>, vector<1x1024xf32>
    %52 = vector.broadcast %51 : vector<1x1024xf32> to vector<8x1024xf32>
    %53 = arith.mulf %50, %52 : vector<8x1024xf32>
    %54 = arith.truncf %53 : vector<8x1024xf32> to vector<8x1024xbf16>
    %c0_11 = arith.constant 0 : index
    %c0_12 = arith.constant 0 : index
    %c0_13 = arith.constant 0 : index
    %55 = vector.load %arg8[%c0_11, %c0_12, %c0_13] : memref<1x8x1024xbf16, #tpu.memory_space<vmem>>, vector<1x8x1024xbf16>
    %56 = vector.shape_cast %55 : vector<1x8x1024xbf16> to vector<8x1024xbf16>
    %57 = vector.shape_cast %54 : vector<8x1024xbf16> to vector<1x8x1024xbf16>
    tpu.vector_store %arg8[%c0_11, %c0_12, %c0_13], %57 {strides = array<i32>} : memref<1x8x1024xbf16, #tpu.memory_space<vmem>>, vector<1x8x1024xbf16>,
    %cst_14 = arith.constant dense<0.000000e+00> : vector<8xf32>
    %58 = vector.multi_reduction <add>, %53, %cst_14 [1] : vector<8x1024xf32> to vector<8xf32>
    %59 = vector.shape_cast %58 : vector<8xf32> to vector<8x1xf32>
    %60 = arith.mulf %53, %53 : vector<8x1024xf32>
    %cst_15 = arith.constant dense<0.000000e+00> : vector<8xf32>
    %61 = vector.multi_reduction <add>, %60, %cst_15 [1] : vector<8x1024xf32> to vector<8xf32>
    %62 = vector.shape_cast %61 : vector<8xf32> to vector<8x1xf32>
    %63 = tpu.concatenate %59, %62 in 1 : vector<8x1xf32>, vector<8x1xf32> -> vector<8x2xf32>
    %c0_16 = arith.constant 0 : index
    %c0_17 = arith.constant 0 : index
    %c0_18 = arith.constant 0 : index
    %c0_19 = arith.constant 0 : index
    %64 = vector.load %arg9[%c0_16, %c0_17, %c0_18, %c0_19] : memref<1x1x8x2xf32, #tpu.memory_space<vmem>>, vector<1x1x8x2xf32>
    %65 = vector.shape_cast %64 : vector<1x1x8x2xf32> to vector<8x2xf32>
    %66 = vector.shape_cast %63 : vector<8x2xf32> to vector<1x1x8x2xf32>
    tpu.vector_store %arg9[%c0_16, %c0_17, %c0_18, %c0_19], %66 {strides = array<i32>} : memref<1x1x8x2xf32, #tpu.memory_space<vmem>>, vector<1x1x8x2xf32>,
    return
  }
  func.func @transform_0(%arg0: i32, %arg1: i32) -> (i32, i32, i32) {
    %c0_i32 = arith.constant 0 : i32
    %c0_i32_0 = arith.constant 0 : i32
    %c0_i32_1 = arith.constant 0 : i32
    return %arg0, %c0_i32, %c0_i32_0 : i32, i32, i32
  }
  func.func @transform_1(%arg0: i32, %arg1: i32) -> (i32, i32) {
    %c0_i32 = arith.constant 0 : i32
    %c0_i32_0 = arith.constant 0 : i32
    %c0_i32_1 = arith.constant 0 : i32
    return %c0_i32, %c0_i32_0 : i32, i32
  }
  func.func @transform_2(%arg0: i32, %arg1: i32) -> (i32, i32) {
    %c0_i32 = arith.constant 0 : i32
    %c0_i32_0 = arith.constant 0 : i32
    %c0_i32_1 = arith.constant 0 : i32
    return %c0_i32, %c0_i32_0 : i32, i32
  }
  func.func @transform_3(%arg0: i32, %arg1: i32) -> (i32, i32) {
    %c0_i32 = arith.constant 0 : i32
    %c0_i32_0 = arith.constant 0 : i32
    %c0_i32_1 = arith.constant 0 : i32
    return %c0_i32, %c0_i32_0 : i32, i32
  }
  func.func @transform_4(%arg0: i32, %arg1: i32) -> (i32, i32) {
    %c0_i32 = arith.constant 0 : i32
    %c0_i32_0 = arith.constant 0 : i32
    %c0_i32_1 = arith.constant 0 : i32
    return %c0_i32, %c0_i32_0 : i32, i32
  }
  func.func @transform_5(%arg0: i32, %arg1: i32) -> (i32, i32) {
    %c0_i32 = arith.constant 0 : i32
    %c0_i32_0 = arith.constant 0 : i32
    %c0_i32_1 = arith.constant 0 : i32
    return %c0_i32, %c0_i32_0 : i32, i32
  }
  func.func @transform_6(%arg0: i32, %arg1: i32) -> (i32, i32, i32) {
    %c0_i32 = arith.constant 0 : i32
    %c0_i32_0 = arith.constant 0 : i32
    return %arg0, %c0_i32, %arg1 : i32, i32, i32
  }
  func.func @transform_7(%arg0: i32, %arg1: i32) -> (i32, i32, i32, i32) {
    %c0_i32 = arith.constant 0 : i32
    %c0_i32_0 = arith.constant 0 : i32
    %c0_i32_1 = arith.constant 0 : i32
    return %arg0, %arg1, %c0_i32, %c0_i32_0 : i32, i32, i32, i32
  }
}

</mosaic_0001>

<llo_original>
// kernel: pre_activation_bottleneck.3
$region0: #{pre_activation_bottleneck.3}
  #allocation0 [shape = 'u32[]', space=smem, size = 0x4, offset = 0x4, fixed_abs, tag = 'smem constant byte address 0x4 - core index']
  #allocation1 [shape = 'u32[144,128]{1,0:T(1,128)}', space=vmem, size = 0x12000, scoped, tag = 'internal scratch']
  %s0 = inlined_call_operand.vmem [shape: f32[2,32,1536], index: 0, kind: input, shape index: {}]
  %s1 = inlined_call_operand.vmem [shape: f32[1,1536], index: 1, kind: input, shape index: {}]
  %s2 = inlined_call_operand.vmem [shape: f32[32,1], index: 2, kind: input, shape index: {}]
  %s3 = inlined_call_operand.vmem [shape: f32[32,1], index: 3, kind: input, shape index: {}]
  %s4 = inlined_call_operand.vmem [shape: bf16[8,32], index: 4, kind: input, shape index: {}]
  %s5 = inlined_call_operand.vmem [shape: bf16[2,8,1536], index: 5, kind: output, shape index: {0}]
  %s6 = inlined_call_operand.vmem [shape: f32[2,1,8,2], index: 6, kind: output, shape index: {1}]
  %7 = xla_tuple %s5, %s6
  %s8 = sld [smem:[#allocation0]]
  $region61: #{pre_activation_bottleneck.3} parent=0
    _
  %s10 = ssub.s32 1, %s8
  %s11 = scalar_select 0, %s10, %s8
  loop: start=0, step=1, limit=4
  $region2: #{pre_activation_bottleneck.3} parent=0 // loop_pre_header
    _
  $region3: #{pre_activation_bottleneck.3} parent=0 // loop_header
    %s13 = sphi 0, %s17
    %p14 = scmp.ge.s32.totalorder %s13, 4
    %s20 = sphi 0, %s32
    %s21 = sphi 0, %s28
    %s22 = sphi 0, %s20
    %s23 = sphi 0, %s21
    %s24 = sphi 0, %s22
    %s25 = sphi 0, %s23
    %s37 = sphi 0, %s39
    %s40 = sphi 0, %s37
    %s41 = sphi 0, %s40
    %s57 = sphi 0, %s41
    %s63 = sphi 0, %s65
    %s66 = sphi 0, %s63
    %s67 = sphi 0, %s66
    %s83 = sphi 0, %s67
    %s87 = sphi 0, %s87
    %s89 = sphi 0, %s87
    %s90 = sphi 0, %s89
    %s104 = sphi 0, %s90
    %s108 = sphi 0, %s108
    %s110 = sphi 0, %s108
    %s111 = sphi 0, %s110
    %s125 = sphi 0, %s111
    %s129 = sphi 0, %s129
    %s131 = sphi 0, %s129
    %s132 = sphi 0, %s131
    %s146 = sphi 0, %s132
    %s154 = sphi 0, %s156
    %s157 = sphi 0, %s154
    %s158 = sphi 0, %s157
    %s174 = sphi 0, %s158
    %s182 = sphi 0, %s184
    %s185 = sphi 0, %s182
    %s186 = sphi 0, %s185
    %s202 = sphi 0, %s186
  $region4: #{pre_activation_bottleneck.3} parent=0 // loop_header_branch
    %16 = sbr.rel (%p14) target = $region8
  $region5: #{pre_activation_bottleneck.3} parent=0 // loop_body
    %s18 = ssub.s32 %s13, 1
    %s19 = ssub.s32 %s13, 2
    %s26 = sadd.s32 1, %s21
    %p27 = scmp.ge.s32.totalorder %s26, 1
    %s28 = scalar_select %p27, 0, %s26
    %s29 = sadd.s32 1, %s20
    %s30 = scalar_select %p27, %s29, %s20
    %p31 = scmp.ge.s32.totalorder %s30, 2
    %s32 = scalar_select %p31, 0, %s30
    %s33 = ssub.s32 %s20, %s32
    %s34 = ssub.s32 %s21, %s28
    %s35 = sor.u32 %s33, %s34
    %p36 = scmp.eq.s32.totalorder %s35, 0
    %s38 = sadd.s32 %s37, 1
    %s39 = scalar_select %p36, %s37, %s38
    %p42 = pneg %p36
    %p43 = scmp.eq.s32.totalorder %s13, 1
    %p44 = por %p42, %p43
    %p45 = scmp.ne.s32.totalorder %s37, %s40
    %p46 = scmp.eq.s32.totalorder %s13, 0
    %p47 = por %p45, %p46
    %p48 = scmp.ne.s32.totalorder %s37, %s40
    %p49 = scmp.eq.s32.totalorder %s18, 1
    %p50 = por %p48, %p49
    %p51 = scmp.ne.s32.totalorder %s40, %s41
    %p52 = scmp.eq.s32.totalorder %s18, 0
    %p53 = por %p51, %p52
    %p54 = scmp.ne.s32.totalorder %s40, %s41
    %p55 = scmp.eq.s32.totalorder %s19, 1
    %p56 = por %p54, %p55
    %p58 = scmp.ne.s32.totalorder %s41, %s57
    %p59 = scmp.eq.s32.totalorder %s19, 0
    %p60 = por %p58, %p59
    %s61 = ssub.s32 %s21, %s28
    %p62 = scmp.eq.s32.totalorder %s61, 0
    %s64 = sadd.s32 %s63, 1
    %s65 = scalar_select %p62, %s63, %s64
    %p68 = pneg %p62
    %p69 = scmp.eq.s32.totalorder %s13, 1
    %p70 = por %p68, %p69
    %p71 = scmp.ne.s32.totalorder %s63, %s66
    %p72 = scmp.eq.s32.totalorder %s13, 0
    %p73 = por %p71, %p72
    %p74 = scmp.ne.s32.totalorder %s63, %s66
    %p75 = scmp.eq.s32.totalorder %s18, 1
    %p76 = por %p74, %p75
    %p77 = scmp.ne.s32.totalorder %s66, %s67
    %p78 = scmp.eq.s32.totalorder %s18, 0
    %p79 = por %p77, %p78
    %p80 = scmp.ne.s32.totalorder %s66, %s67
    %p81 = scmp.eq.s32.totalorder %s19, 1
    %p82 = por %p80, %p81
    %p84 = scmp.ne.s32.totalorder %s67, %s83
    %p85 = scmp.eq.s32.totalorder %s19, 0
    %p86 = por %p84, %p85
    %s88 = sadd.s32 %s87, 1
    %p91 = scmp.eq.s32.totalorder %s13, 1
    %p92 = scmp.ne.s32.totalorder %s87, %s89
    %p93 = scmp.eq.s32.totalorder %s13, 0
    %p94 = por %p92, %p93
    %p95 = scmp.ne.s32.totalorder %s87, %s89
    %p96 = scmp.eq.s32.totalorder %s18, 1
    %p97 = por %p95, %p96
    %p98 = scmp.ne.s32.totalorder %s89, %s90
    %p99 = scmp.eq.s32.totalorder %s18, 0
    %p100 = por %p98, %p99
    %p101 = scmp.ne.s32.totalorder %s89, %s90
    %p102 = scmp.eq.s32.totalorder %s19, 1
    %p103 = por %p101, %p102
    %p105 = scmp.ne.s32.totalorder %s90, %s104
    %p106 = scmp.eq.s32.totalorder %s19, 0
    %p107 = por %p105, %p106
    %s109 = sadd.s32 %s108, 1
    %p112 = scmp.eq.s32.totalorder %s13, 1
    %p113 = scmp.ne.s32.totalorder %s108, %s110
    %p114 = scmp.eq.s32.totalorder %s13, 0
    %p115 = por %p113, %p114
    %p116 = scmp.ne.s32.totalorder %s108, %s110
    %p117 = scmp.eq.s32.totalorder %s18, 1
    %p118 = por %p116, %p117
    %p119 = scmp.ne.s32.totalorder %s110, %s111
    %p120 = scmp.eq.s32.totalorder %s18, 0
    %p121 = por %p119, %p120
    %p122 = scmp.ne.s32.totalorder %s110, %s111
    %p123 = scmp.eq.s32.totalorder %s19, 1
    %p124 = por %p122, %p123
    %p126 = scmp.ne.s32.totalorder %s111, %s125
    %p127 = scmp.eq.s32.totalorder %s19, 0
    %p128 = por %p126, %p127
    %s130 = sadd.s32 %s129, 1
    %p133 = scmp.eq.s32.totalorder %s13, 1
    %p134 = scmp.ne.s32.totalorder %s129, %s131
    %p135 = scmp.eq.s32.totalorder %s13, 0
    %p136 = por %p134, %p135
    %p137 = scmp.ne.s32.totalorder %s129, %s131
    %p138 = scmp.eq.s32.totalorder %s18, 1
    %p139 = por %p137, %p138
    %p140 = scmp.ne.s32.totalorder %s131, %s132
    %p141 = scmp.eq.s32.totalorder %s18, 0
    %p142 = por %p140, %p141
    %p143 = scmp.ne.s32.totalorder %s131, %s132
    %p144 = scmp.eq.s32.totalorder %s19, 1
    %p145 = por %p143, %p144
    %p147 = scmp.ne.s32.totalorder %s132, %s146
    %p148 = scmp.eq.s32.totalorder %s19, 0
    %p149 = por %p147, %p148
    %s150 = ssub.s32 %s20, %s32
    %s151 = ssub.s32 %s21, %s28
    %s152 = sor.u32 %s150, %s151
    %p153 = scmp.eq.s32.totalorder %s152, 0
    %s155 = sadd.s32 %s154, 1
    %s156 = scalar_select %p153, %s154, %s155
    %p159 = pneg %p153
    %p160 = scmp.eq.s32.totalorder %s13, 1
    %p161 = por %p159, %p160
    %p162 = scmp.ne.s32.totalorder %s154, %s157
    %p163 = scmp.eq.s32.totalorder %s13, 0
    %p164 = por %p162, %p163
    %p165 = scmp.ne.s32.totalorder %s154, %s157
    %p166 = scmp.eq.s32.totalorder %s18, 1
    %p167 = por %p165, %p166
    %p168 = scmp.ne.s32.totalorder %s157, %s158
    %p169 = scmp.eq.s32.totalorder %s18, 0
    %p170 = por %p168, %p169
    %p171 = scmp.ne.s32.totalorder %s157, %s158
    %p172 = scmp.eq.s32.totalorder %s19, 1
    %p173 = por %p171, %p172
    %p175 = scmp.ne.s32.totalorder %s158, %s174
    %p176 = scmp.eq.s32.totalorder %s19, 0
    %p177 = por %p175, %p176
    %s178 = ssub.s32 %s20, %s32
    %s179 = ssub.s32 %s21, %s28
    %s180 = sor.u32 %s178, %s179
    %p181 = scmp.eq.s32.totalorder %s180, 0
    %s183 = sadd.s32 %s182, 1
    %s184 = scalar_select %p181, %s182, %s183
    %p187 = pneg %p181
    %p188 = scmp.eq.s32.totalorder %s13, 1
    %p189 = por %p187, %p188
    %p190 = scmp.ne.s32.totalorder %s182, %s185
    %p191 = scmp.eq.s32.totalorder %s13, 0
    %p192 = por %p190, %p191
    %p193 = scmp.ne.s32.totalorder %s182, %s185
    %p194 = scmp.eq.s32.totalorder %s18, 1
    %p195 = por %p193, %p194
    %p196 = scmp.ne.s32.totalorder %s185, %s186
    %p197 = scmp.eq.s32.totalorder %s18, 0
    %p198 = por %p196, %p197
    %p199 = scmp.ne.s32.totalorder %s185, %s186
    %p200 = scmp.eq.s32.totalorder %s19, 1
    %p201 = por %p199, %p200
    %p203 = scmp.ne.s32.totalorder %s186, %s202
    %p204 = scmp.eq.s32.totalorder %s19, 0
    %p205 = por %p203, %p204
    %p206 = scmp.le.s32.totalorder 1, %s13
    %p207 = scmp.lt.s32.totalorder %s13, 3
    %p208 = pnand %p206, %p207
    %p209 = pneg %p208
    // Predicated region
    $region9: #{pre_activation_bottleneck.3} parent=5 // pred_check
      _
    $region10: #{pre_activation_bottleneck.3} parent=5 // pred_check_branch
      %211 = sbr.rel (%p208) target = $region12
    $region11: #{pre_activation_bottleneck.3} parent=5 // pred_region
      %s212 = ssub.s32 %s13, 1
      // Predicated region
      $region13: #{pre_activation_bottleneck.3} parent=11 // pred_check
        %p213 = pneg %p79
      $region14: #{pre_activation_bottleneck.3} parent=11 // pred_check_branch
        %215 = sbr.rel (%p213) target = $region16
      $region15: #{pre_activation_bottleneck.3} parent=11 // pred_region
        %s216 = smul.u32 12, %s23
        %p217 = scmp.lt.s32.totalorder %s216, 11
        %s218 = scalar_select %p217, %s216, 11
        %s219 = scalar_lea.vmem %s1, %s218
        %s220 = smul.u32 12, %s23
      $region16: #{pre_activation_bottleneck.3} parent=11 // pred_fallthru
        _
      // Predicated region
      $region17: #{pre_activation_bottleneck.3} parent=11 // pred_check
        %p221 = pneg %p100
      $region18: #{pre_activation_bottleneck.3} parent=11 // pred_check_branch
        %223 = sbr.rel (%p221) target = $region20
      $region19: #{pre_activation_bottleneck.3} parent=11 // pred_region
        _
      $region20: #{pre_activation_bottleneck.3} parent=11 // pred_fallthru
        _
      // Predicated region
      $region21: #{pre_activation_bottleneck.3} parent=11 // pred_check
        %p224 = pneg %p121
      $region22: #{pre_activation_bottleneck.3} parent=11 // pred_check_branch
        %226 = sbr.rel (%p224) target = $region24
      $region23: #{pre_activation_bottleneck.3} parent=11 // pred_region
        _
      $region24: #{pre_activation_bottleneck.3} parent=11 // pred_fallthru
        _
      // Predicated region
      $region25: #{pre_activation_bottleneck.3} parent=11 // pred_check
        %p227 = pneg %p142
      $region26: #{pre_activation_bottleneck.3} parent=11 // pred_check_branch
        %229 = sbr.rel (%p227) target = $region28
      $region27: #{pre_activation_bottleneck.3} parent=11 // pred_region
        _
      $region28: #{pre_activation_bottleneck.3} parent=11 // pred_fallthru
        _
    $region12: #{pre_activation_bottleneck.3} parent=5 // pred_fallthru
      _
    %p230 = scmp.lt.s32.totalorder %s13, 2
    // Predicated region
    $region29: #{pre_activation_bottleneck.3} parent=5 // pred_check
      %p231 = pneg %p230
    $region30: #{pre_activation_bottleneck.3} parent=5 // pred_check_branch
      %233 = sbr.rel (%p231) target = $region32
    $region31: #{pre_activation_bottleneck.3} parent=5 // pred_region
      // Predicated region
      $region33: #{pre_activation_bottleneck.3} parent=31 // pred_check
        %p234 = pneg %p47
      $region34: #{pre_activation_bottleneck.3} parent=31 // pred_check_branch
        %236 = sbr.rel (%p234) target = $region36
      $region35: #{pre_activation_bottleneck.3} parent=31 // pred_region
        %s237 = smul.u32 12, %s21
        %p238 = scmp.lt.s32.totalorder %s20, 1
        %s239 = scalar_select %p238, %s20, 1
        %p240 = scmp.lt.s32.totalorder %s237, 11
        %s241 = scalar_select %p240, %s237, 11
        %s242 = smul.addr %s239, 48
        %s243 = sadd.s32 %s241, %s242
        %s244 = smul.addr %s243, 8
        %s245 = scalar_lea.vmem %s0, %s244
        %s246 = smul.u32 12, %s21
      $region36: #{pre_activation_bottleneck.3} parent=31 // pred_fallthru
        _
    $region32: #{pre_activation_bottleneck.3} parent=5 // pred_fallthru
      _
    %p247 = scmp.le.s32.totalorder 1, %s13
    %p248 = scmp.lt.s32.totalorder %s13, 3
    %p249 = pnand %p247, %p248
    %p250 = pneg %p249
    // Predicated region
    $region37: #{pre_activation_bottleneck.3} parent=5 // pred_check
      _
    $region38: #{pre_activation_bottleneck.3} parent=5 // pred_check_branch
      %252 = sbr.rel (%p249) target = $region40
    $region39: #{pre_activation_bottleneck.3} parent=5 // pred_region
      %s253 = ssub.s32 %s13, 1
      %s254 = smul.u32 12, %s23
      %p255 = scmp.lt.s32.totalorder %s22, 1
      %s256 = scalar_select %p255, %s22, 1
      %p257 = scmp.lt.s32.totalorder %s254, 11
      %s258 = scalar_select %p257, %s254, 11
      %s259 = smul.addr %s256, 48
      %s260 = sadd.s32 %s258, %s259
      %s261 = smul.addr %s260, 8
      %s262 = scalar_lea.vmem %s0, %s261
      %p263 = pneg %p53
      %p264 = pneg %p50
      %s265 = smul.u32 12, %s23
      %p266 = scmp.lt.s32.totalorder %s265, 11
      %s267 = scalar_select %p266, %s265, 11
      %s268 = scalar_lea.vmem %s1, %s267
      %p269 = pneg %p79
      %p270 = pneg %p76
      %p271 = pneg %p100
      %p272 = pneg %p97
      %p273 = pneg %p121
      %p274 = pneg %p118
      %p275 = pneg %p142
      %p276 = pneg %p139
      %p277 = pneg %p170
      %p278 = pneg %p167
      %s279 = smul.u32 12, %s23
      %p280 = scmp.lt.s32.totalorder %s22, 1
      %s281 = scalar_select %p280, %s22, 1
      %p282 = scmp.lt.s32.totalorder %s279, 11
      %s283 = scalar_select %p282, %s279, 11
      %s284 = smul.addr %s281, 12
      %s285 = sadd.s32 %s283, %s284
      %s286 = smul.addr %s285, 4
      %s287 = scalar_lea.vmem %s5, %s286
      %p288 = pneg %p198
      %p289 = pneg %p195
      %p290 = scmp.lt.s32.totalorder %s22, 1
      %s291 = scalar_select %p290, %s22, 1
      %p292 = scmp.lt.s32.totalorder %s23, 0
      %s293 = scalar_select %p292, %s23, 0
      %s294 = sadd.s32 %s293, %s291
      %s295 = smul.addr %s294, 8
      %s296 = scalar_lea.vmem %s6, %s295
      %s297 = smul.u32 12, %s23
      %p298 = scmp.lt.s32.totalorder %s22, 1
      %s299 = scalar_select %p298, %s22, 1
      %p300 = scmp.lt.s32.totalorder %s297, 11
      %s301 = scalar_select %p300, %s297, 11
      %s302 = smul.addr %s299, 48
      %s303 = sadd.s32 %s301, %s302
      %s304 = smul.addr %s303, 8
      %s305 = scalar_lea.vmem %s0, %s304
      %s306 = smul.u32 12, %s23
      %s307 = smul.u32 12, %s23
      %p308 = scmp.lt.s32.totalorder %s307, 11
      %s309 = scalar_select %p308, %s307, 11
      %s310 = scalar_lea.vmem %s1, %s309
      %s311 = smul.u32 12, %s23
      %s312 = smul.u32 12, %s23
      %p313 = scmp.lt.s32.totalorder %s22, 1
      %s314 = scalar_select %p313, %s22, 1
      %p315 = scmp.lt.s32.totalorder %s312, 11
      %s316 = scalar_select %p315, %s312, 11
      %s317 = smul.addr %s314, 12
      %s318 = sadd.s32 %s316, %s317
      %s319 = smul.addr %s318, 4
      %s320 = scalar_lea.vmem %s5, %s319
      %s321 = smul.u32 12, %s23
      %p322 = scmp.lt.s32.totalorder %s22, 1
      %s323 = scalar_select %p322, %s22, 1
      %p324 = scmp.lt.s32.totalorder %s23, 0
      %s325 = scalar_select %p324, %s23, 0
      %s326 = sadd.s32 %s325, %s323
      %s327 = smul.addr %s326, 8
      %s328 = scalar_lea.vmem %s6, %s327
      %v330 = vld [vmem:[%s305] sm:$0xff]
      %v331 = vld [vmem:[%s305 + $0x8] sm:$0xff]
      %v332 = vld [vmem:[%s305 + $0x10] sm:$0xff]
      %v333 = vld [vmem:[%s305 + $0x18] sm:$0xff]
      %v334 = vld [vmem:[%s305 + $0x20] sm:$0xff]
      %v335 = vld [vmem:[%s305 + $0x28] sm:$0xff]
      %v336 = vld [vmem:[%s305 + $0x30] sm:$0xff]
      %v337 = vld [vmem:[%s305 + $0x38] sm:$0xff]
      %v338 = vld [vmem:[%s305 + $0x40] sm:$0xff]
      %v339 = vld [vmem:[%s305 + $0x48] sm:$0xff]
      %v340 = vld [vmem:[%s305 + $0x50] sm:$0xff]
      %v341 = vld [vmem:[%s305 + $0x58] sm:$0xff]
      %v342 = vld [vmem:[%s305 + $0x60] sm:$0xff]
      %v343 = vld [vmem:[%s305 + $0x68] sm:$0xff]
      %v344 = vld [vmem:[%s305 + $0x70] sm:$0xff]
      %v345 = vld [vmem:[%s305 + $0x78] sm:$0xff]
      %v346 = vld [vmem:[%s305 + $0x80] sm:$0xff]
      %v347 = vld [vmem:[%s305 + $0x88] sm:$0xff]
      %v348 = vld [vmem:[%s305 + $0x90] sm:$0xff]
      %v349 = vld [vmem:[%s305 + $0x98] sm:$0xff]
      %v350 = vld [vmem:[%s305 + $0xa0] sm:$0xff]
      %v351 = vld [vmem:[%s305 + $0xa8] sm:$0xff]
      %v352 = vld [vmem:[%s305 + $0xb0] sm:$0xff]
      %v353 = vld [vmem:[%s305 + $0xb8] sm:$0xff]
      %v354 = vld [vmem:[%s305 + $0xc0] sm:$0xff]
      %v355 = vld [vmem:[%s305 + $0xc8] sm:$0xff]
      %v356 = vld [vmem:[%s305 + $0xd0] sm:$0xff]
      %v357 = vld [vmem:[%s305 + $0xd8] sm:$0xff]
      %v358 = vld [vmem:[%s305 + $0xe0] sm:$0xff]
      %v359 = vld [vmem:[%s305 + $0xe8] sm:$0xff]
      %v360 = vld [vmem:[%s305 + $0xf0] sm:$0xff]
      %v361 = vld [vmem:[%s305 + $0xf8] sm:$0xff]
      %v362 = vld [vmem:[%s305 + $0x100] sm:$0xff]
      %v363 = vld [vmem:[%s305 + $0x108] sm:$0xff]
      %v364 = vld [vmem:[%s305 + $0x110] sm:$0xff]
      %v365 = vld [vmem:[%s305 + $0x118] sm:$0xff]
      %v366 = vld [vmem:[%s305 + $0x120] sm:$0xff]
      %v367 = vld [vmem:[%s305 + $0x128] sm:$0xff]
      %v368 = vld [vmem:[%s305 + $0x130] sm:$0xff]
      %v369 = vld [vmem:[%s305 + $0x138] sm:$0xff]
      %v370 = vld [vmem:[%s305 + $0x140] sm:$0xff]
      %v371 = vld [vmem:[%s305 + $0x148] sm:$0xff]
      %v372 = vld [vmem:[%s305 + $0x150] sm:$0xff]
      %v373 = vld [vmem:[%s305 + $0x158] sm:$0xff]
      %v374 = vld [vmem:[%s305 + $0x160] sm:$0xff]
      %v375 = vld [vmem:[%s305 + $0x168] sm:$0xff]
      %v376 = vld [vmem:[%s305 + $0x170] sm:$0xff]
      %v377 = vld [vmem:[%s305 + $0x178] sm:$0xff]
      %v378 = vld [vmem:[%s2] sm:$0xff]
      %v379 = vld [vmem:[%s2 + $0x8] sm:$0xff]
      %v380 = vld [vmem:[%s2 + $0x10] sm:$0xff]
      %v381 = vld [vmem:[%s2 + $0x18] sm:$0xff]
      %383 = vset.pattern.permute.xlu0 0
      %384 = vperm.xlu0 %383, %v378
      %v385 = vpop.permute.xlu0 %384
      %388 = vset.pattern.permute.xlu0 0
      %389 = vperm.xlu0 %388, %v379
      %v390 = vpop.permute.xlu0 %389
      %393 = vset.pattern.permute.xlu0 0
      %394 = vperm.xlu0 %393, %v380
      %v395 = vpop.permute.xlu0 %394
      %398 = vset.pattern.permute.xlu0 0
      %399 = vperm.xlu0 %398, %v381
      %v400 = vpop.permute.xlu0 %399
      %v402 = vmul.f32 %v330, %v385
      %v403 = vmul.f32 %v331, %v385
      %v404 = vmul.f32 %v332, %v385
      %v405 = vmul.f32 %v333, %v385
      %v406 = vmul.f32 %v334, %v385
      %v407 = vmul.f32 %v335, %v385
      %v408 = vmul.f32 %v336, %v385
      %v409 = vmul.f32 %v337, %v385
      %v410 = vmul.f32 %v338, %v385
      %v411 = vmul.f32 %v339, %v385
      %v412 = vmul.f32 %v340, %v385
      %v413 = vmul.f32 %v341, %v385
      %v414 = vmul.f32 %v342, %v390
      %v415 = vmul.f32 %v343, %v390
      %v416 = vmul.f32 %v344, %v390
      %v417 = vmul.f32 %v345, %v390
      %v418 = vmul.f32 %v346, %v390
      %v419 = vmul.f32 %v347, %v390
      %v420 = vmul.f32 %v348, %v390
      %v421 = vmul.f32 %v349, %v390
      %v422 = vmul.f32 %v350, %v390
      %v423 = vmul.f32 %v351, %v390
      %v424 = vmul.f32 %v352, %v390
      %v425 = vmul.f32 %v353, %v390
      %v426 = vmul.f32 %v354, %v395
      %v427 = vmul.f32 %v355, %v395
      %v428 = vmul.f32 %v356, %v395
      %v429 = vmul.f32 %v357, %v395
      %v430 = vmul.f32 %v358, %v395
      %v431 = vmul.f32 %v359, %v395
      %v432 = vmul.f32 %v360, %v395
      %v433 = vmul.f32 %v361, %v395
      %v434 = vmul.f32 %v362, %v395
      %v435 = vmul.f32 %v363, %v395
      %v436 = vmul.f32 %v364, %v395
      %v437 = vmul.f32 %v365, %v395
      %v438 = vmul.f32 %v366, %v400
      %v439 = vmul.f32 %v367, %v400
      %v440 = vmul.f32 %v368, %v400
      %v441 = vmul.f32 %v369, %v400
      %v442 = vmul.f32 %v370, %v400
      %v443 = vmul.f32 %v371, %v400
      %v444 = vmul.f32 %v372, %v400
      %v445 = vmul.f32 %v373, %v400
      %v446 = vmul.f32 %v374, %v400
      %v447 = vmul.f32 %v375, %v400
      %v448 = vmul.f32 %v376, %v400
      %v449 = vmul.f32 %v377, %v400
      %v450 = vld [vmem:[%s3] sm:$0xff]
      %v451 = vld [vmem:[%s3 + $0x8] sm:$0xff]
      %v452 = vld [vmem:[%s3 + $0x10] sm:$0xff]
      %v453 = vld [vmem:[%s3 + $0x18] sm:$0xff]
      %455 = vset.pattern.permute.xlu0 0
      %456 = vperm.xlu0 %455, %v450
      %v457 = vpop.permute.xlu0 %456
      %460 = vset.pattern.permute.xlu0 0
      %461 = vperm.xlu0 %460, %v451
      %v462 = vpop.permute.xlu0 %461
      %465 = vset.pattern.permute.xlu0 0
      %466 = vperm.xlu0 %465, %v452
      %v467 = vpop.permute.xlu0 %466
      %470 = vset.pattern.permute.xlu0 0
      %471 = vperm.xlu0 %470, %v453
      %v472 = vpop.permute.xlu0 %471
      %v474 = vadd.f32 %v402, %v457
      %v475 = vadd.f32 %v403, %v457
      %v476 = vadd.f32 %v404, %v457
      %v477 = vadd.f32 %v405, %v457
      %v478 = vadd.f32 %v406, %v457
      %v479 = vadd.f32 %v407, %v457
      %v480 = vadd.f32 %v408, %v457
      %v481 = vadd.f32 %v409, %v457
      %v482 = vadd.f32 %v410, %v457
      %v483 = vadd.f32 %v411, %v457
      %v484 = vadd.f32 %v412, %v457
      %v485 = vadd.f32 %v413, %v457
      %v486 = vadd.f32 %v414, %v462
      %v487 = vadd.f32 %v415, %v462
      %v488 = vadd.f32 %v416, %v462
      %v489 = vadd.f32 %v417, %v462
      %v490 = vadd.f32 %v418, %v462
      %v491 = vadd.f32 %v419, %v462
      %v492 = vadd.f32 %v420, %v462
      %v493 = vadd.f32 %v421, %v462
      %v494 = vadd.f32 %v422, %v462
      %v495 = vadd.f32 %v423, %v462
      %v496 = vadd.f32 %v424, %v462
      %v497 = vadd.f32 %v425, %v462
      %v498 = vadd.f32 %v426, %v467
      %v499 = vadd.f32 %v427, %v467
      %v500 = vadd.f32 %v428, %v467
      %v501 = vadd.f32 %v429, %v467
      %v502 = vadd.f32 %v430, %v467
      %v503 = vadd.f32 %v431, %v467
      %v504 = vadd.f32 %v432, %v467
      %v505 = vadd.f32 %v433, %v467
      %v506 = vadd.f32 %v434, %v467
      %v507 = vadd.f32 %v435, %v467
      %v508 = vadd.f32 %v436, %v467
      %v509 = vadd.f32 %v437, %v467
      %v510 = vadd.f32 %v438, %v472
      %v511 = vadd.f32 %v439, %v472
      %v512 = vadd.f32 %v440, %v472
      %v513 = vadd.f32 %v441, %v472
      %v514 = vadd.f32 %v442, %v472
      %v515 = vadd.f32 %v443, %v472
      %v516 = vadd.f32 %v444, %v472
      %v517 = vadd.f32 %v445, %v472
      %v518 = vadd.f32 %v446, %v472
      %v519 = vadd.f32 %v447, %v472
      %v520 = vadd.f32 %v448, %v472
      %v521 = vadd.f32 %v449, %v472
      %v522 = vmax.f32 %v474, 0.0
      %v523 = vmax.f32 %v475, 0.0
      %v524 = vmax.f32 %v476, 0.0
      %v525 = vmax.f32 %v477, 0.0
      %v526 = vmax.f32 %v478, 0.0
      %v527 = vmax.f32 %v479, 0.0
      %v528 = vmax.f32 %v480, 0.0
      %v529 = vmax.f32 %v481, 0.0
      %v530 = vmax.f32 %v482, 0.0
      %v531 = vmax.f32 %v483, 0.0
      %v532 = vmax.f32 %v484, 0.0
      %v533 = vmax.f32 %v485, 0.0
      %v534 = vmax.f32 %v486, 0.0
      %v535 = vmax.f32 %v487, 0.0
      %v536 = vmax.f32 %v488, 0.0
      %v537 = vmax.f32 %v489, 0.0
      %v538 = vmax.f32 %v490, 0.0
      %v539 = vmax.f32 %v491, 0.0
      %v540 = vmax.f32 %v492, 0.0
      %v541 = vmax.f32 %v493, 0.0
      %v542 = vmax.f32 %v494, 0.0
      %v543 = vmax.f32 %v495, 0.0
      %v544 = vmax.f32 %v496, 0.0
      %v545 = vmax.f32 %v497, 0.0
      %v546 = vmax.f32 %v498, 0.0
      %v547 = vmax.f32 %v499, 0.0
      %v548 = vmax.f32 %v500, 0.0
      %v549 = vmax.f32 %v501, 0.0
      %v550 = vmax.f32 %v502, 0.0
      %v551 = vmax.f32 %v503, 0.0
      %v552 = vmax.f32 %v504, 0.0
      %v553 = vmax.f32 %v505, 0.0
      %v554 = vmax.f32 %v506, 0.0
      %v555 = vmax.f32 %v507, 0.0
      %v556 = vmax.f32 %v508, 0.0
      %v557 = vmax.f32 %v509, 0.0
      %v558 = vmax.f32 %v510, 0.0
      %v559 = vmax.f32 %v511, 0.0
      %v560 = vmax.f32 %v512, 0.0
      %v561 = vmax.f32 %v513, 0.0
      %v562 = vmax.f32 %v514, 0.0
      %v563 = vmax.f32 %v515, 0.0
      %v564 = vmax.f32 %v516, 0.0
      %v565 = vmax.f32 %v517, 0.0
      %v566 = vmax.f32 %v518, 0.0
      %v567 = vmax.f32 %v519, 0.0
      %v568 = vmax.f32 %v520, 0.0
      %v569 = vmax.f32 %v521, 0.0
      %v570 = vld [vmem:[%s310] sm:$0xff]
      %v571 = vld [vmem:[%s310 + $0x8] sm:$0xf]
      %v574 = vlaneseq
      %v575 = vshrl.u32 %v574, 7
      %v576 = vsub.s32 0, %v575
      %v577 = vrot.slane %v570, %v576
      %v578 = vlaneseq
      %v579 = vshrl.u32 %v578, 7
      %v580 = vsub.s32 1, %v579
      %v581 = vrot.slane %v570, %v580
      %v582 = vlaneseq
      %v583 = vshrl.u32 %v582, 7
      %v584 = vsub.s32 2, %v583
      %v585 = vrot.slane %v570, %v584
      %v586 = vlaneseq
      %v587 = vshrl.u32 %v586, 7
      %v588 = vsub.s32 3, %v587
      %v589 = vrot.slane %v570, %v588
      %v590 = vlaneseq
      %v591 = vshrl.u32 %v590, 7
      %v592 = vsub.s32 4, %v591
      %v593 = vrot.slane %v570, %v592
      %v594 = vlaneseq
      %v595 = vshrl.u32 %v594, 7
      %v596 = vsub.s32 5, %v595
      %v597 = vrot.slane %v570, %v596
      %v598 = vlaneseq
      %v599 = vshrl.u32 %v598, 7
      %v600 = vsub.s32 6, %v599
      %v601 = vrot.slane %v570, %v600
      %v602 = vlaneseq
      %v603 = vshrl.u32 %v602, 7
      %v604 = vsub.s32 7, %v603
      %v605 = vrot.slane %v570, %v604
      %v606 = vlaneseq
      %v607 = vshrl.u32 %v606, 7
      %v608 = vsub.s32 0, %v607
      %v609 = vrot.slane %v571, %v608
      %v610 = vlaneseq
      %v611 = vshrl.u32 %v610, 7
      %v612 = vsub.s32 1, %v611
      %v613 = vrot.slane %v571, %v612
      %v614 = vlaneseq
      %v615 = vshrl.u32 %v614, 7
      %v616 = vsub.s32 2, %v615
      %v617 = vrot.slane %v571, %v616
      %v618 = vlaneseq
      %v619 = vshrl.u32 %v618, 7
      %v620 = vsub.s32 3, %v619
      %v621 = vrot.slane %v571, %v620
      %v634 = vmul.f32 %v522, %v577
      %v635 = vmul.f32 %v523, %v581
      %v636 = vmul.f32 %v524, %v585
      %v637 = vmul.f32 %v525, %v589
      %v638 = vmul.f32 %v526, %v593
      %v639 = vmul.f32 %v527, %v597
      %v640 = vmul.f32 %v528, %v601
      %v641 = vmul.f32 %v529, %v605
      %v642 = vmul.f32 %v530, %v609
      %v643 = vmul.f32 %v531, %v613
      %v644 = vmul.f32 %v532, %v617
      %v645 = vmul.f32 %v533, %v621
      %v646 = vmul.f32 %v534, %v577
      %v647 = vmul.f32 %v535, %v581
      %v648 = vmul.f32 %v536, %v585
      %v649 = vmul.f32 %v537, %v589
      %v650 = vmul.f32 %v538, %v593
      %v651 = vmul.f32 %v539, %v597
      %v652 = vmul.f32 %v540, %v601
      %v653 = vmul.f32 %v541, %v605
      %v654 = vmul.f32 %v542, %v609
      %v655 = vmul.f32 %v543, %v613
      %v656 = vmul.f32 %v544, %v617
      %v657 = vmul.f32 %v545, %v621
      %v658 = vmul.f32 %v546, %v577
      %v659 = vmul.f32 %v547, %v581
      %v660 = vmul.f32 %v548, %v585
      %v661 = vmul.f32 %v549, %v589
      %v662 = vmul.f32 %v550, %v593
      %v663 = vmul.f32 %v551, %v597
      %v664 = vmul.f32 %v552, %v601
      %v665 = vmul.f32 %v553, %v605
      %v666 = vmul.f32 %v554, %v609
      %v667 = vmul.f32 %v555, %v613
      %v668 = vmul.f32 %v556, %v617
      %v669 = vmul.f32 %v557, %v621
      %v670 = vmul.f32 %v558, %v577
      %v671 = vmul.f32 %v559, %v581
      %v672 = vmul.f32 %v560, %v585
      %v673 = vmul.f32 %v561, %v589
      %v674 = vmul.f32 %v562, %v593
      %v675 = vmul.f32 %v563, %v597
      %v676 = vmul.f32 %v564, %v601
      %v677 = vmul.f32 %v565, %v605
      %v678 = vmul.f32 %v566, %v609
      %v679 = vmul.f32 %v567, %v613
      %v680 = vmul.f32 %v568, %v617
      %v681 = vmul.f32 %v569, %v621
      %v682 = vld [vmem:[%s4] sm:$0xf]
      %v683 = vpack.c.bf16 %v646, %v634
      %v684 = vpack.c.bf16 %v647, %v635
      %v685 = vpack.c.bf16 %v648, %v636
      %v686 = vpack.c.bf16 %v649, %v637
      %v687 = vpack.c.bf16 %v650, %v638
      %v688 = vpack.c.bf16 %v651, %v639
      %v689 = vpack.c.bf16 %v652, %v640
      %v690 = vpack.c.bf16 %v653, %v641
      %v691 = vpack.c.bf16 %v654, %v642
      %v692 = vpack.c.bf16 %v655, %v643
      %v693 = vpack.c.bf16 %v656, %v644
      %v694 = vpack.c.bf16 %v657, %v645
      %v695 = vpack.c.bf16 %v670, %v658
      %v696 = vpack.c.bf16 %v671, %v659
      %v697 = vpack.c.bf16 %v672, %v660
      %v698 = vpack.c.bf16 %v673, %v661
      %v699 = vpack.c.bf16 %v674, %v662
      %v700 = vpack.c.bf16 %v675, %v663
      %v701 = vpack.c.bf16 %v676, %v664
      %v702 = vpack.c.bf16 %v677, %v665
      %v703 = vpack.c.bf16 %v678, %v666
      %v704 = vpack.c.bf16 %v679, %v667
      %v705 = vpack.c.bf16 %v680, %v668
      %v706 = vpack.c.bf16 %v681, %v669
      %vm707 = vcmask 261120
      %v709 = vsel %vm707, %v682, 0
      %711 = vmatprep.subr.bf16.mxu0 0
      %712 = vmatpush1.bf16.msra.mxu0 0
      %713 = vmatprep.subr.bf16.mxu0 0
      %714 = vmatpush1.bf16.msra.mxu0 0
      %715 = vmatprep.subr.bf16.mxu0 0
      %716 = vmatpush1.bf16.msra.mxu0 0
      %717 = vmatprep.subr.bf16.mxu0 0
      %718 = vmatpush1.bf16.msra.mxu0 0
      %719 = vmatprep.subr.bf16.mxu0 0
      %720 = vmatpush1.bf16.msra.mxu0 0
      %721 = vmatprep.subr.bf16.mxu0 0
      %722 = vmatpush1.bf16.msra.mxu0 0
      %723 = vmatprep.subr.bf16.mxu0 %v696
      %724 = vmatpush1.bf16.msra.mxu0 %v695
      %725 = vmatprep.subr.bf16.mxu0 %v684
      %726 = vmatpush1.bf16.msra.mxu0 %v683
      %727 = vmatprep.subr.bf16.mxu0 0
      %728 = vmatpush2.bf16.msra.mxu0 0
      %729 = vmatprep.subr.bf16.mxu0 0
      %730 = vmatpush2.bf16.msra.mxu0 0
      %731 = vmatprep.subr.bf16.mxu0 0
      %732 = vmatpush2.bf16.msra.mxu0 0
      %733 = vmatprep.subr.bf16.mxu0 0
      %734 = vmatpush2.bf16.msra.mxu0 0
      %735 = vmatprep.subr.bf16.mxu0 0
      %736 = vmatpush2.bf16.msra.mxu0 0
      %737 = vmatprep.subr.bf16.mxu0 0
      %738 = vmatpush2.bf16.msra.mxu0 0
      %739 = vmatprep.subr.bf16.mxu0 0
      %740 = vmatpush2.bf16.msra.mxu0 0
      %741 = vmatprep.subr.bf16.mxu0 0
      %742 = vmatpush2.bf16.msra.mxu0 0
      %743 = vmatprep.mubr.bf16.mxu0 0
      %744 = vmatmul.mubr.bf16.gmra.mxu0 %v709
      %v745 = vpop.f32.mrf.mxu0
      %v746 = vadd.f32 0.0, %v745
      %v747 = vpop.f32.mrf.mxu0
      %v748 = vadd.f32 0.0, %v747
      %v749 = vpop.f32.mrf.mxu0
      %v750 = vpop.f32.mrf.mxu0
      %751 = vdwg.mxu0
      %752 = vmatprep.subr.bf16.mxu0 0
      %753 = vmatpush1.bf16.msra.mxu0 0
      %754 = vmatprep.subr.bf16.mxu0 0
      %755 = vmatpush1.bf16.msra.mxu0 0
      %756 = vmatprep.subr.bf16.mxu0 0
      %757 = vmatpush1.bf16.msra.mxu0 0
      %758 = vmatprep.subr.bf16.mxu0 0
      %759 = vmatpush1.bf16.msra.mxu0 0
      %760 = vmatprep.subr.bf16.mxu0 0
      %761 = vmatpush1.bf16.msra.mxu0 0
      %762 = vmatprep.subr.bf16.mxu0 0
      %763 = vmatpush1.bf16.msra.mxu0 0
      %764 = vmatprep.subr.bf16.mxu0 %v698
      %765 = vmatpush1.bf16.msra.mxu0 %v697
      %766 = vmatprep.subr.bf16.mxu0 %v686
      %767 = vmatpush1.bf16.msra.mxu0 %v685
      %768 = vmatprep.subr.bf16.mxu0 0
      %769 = vmatpush2.bf16.msra.mxu0 0
      %770 = vmatprep.subr.bf16.mxu0 0
      %771 = vmatpush2.bf16.msra.mxu0 0
      %772 = vmatprep.subr.bf16.mxu0 0
      %773 = vmatpush2.bf16.msra.mxu0 0
      %774 = vmatprep.subr.bf16.mxu0 0
      %775 = vmatpush2.bf16.msra.mxu0 0
      %776 = vmatprep.subr.bf16.mxu0 0
      %777 = vmatpush2.bf16.msra.mxu0 0
      %778 = vmatprep.subr.bf16.mxu0 0
      %779 = vmatpush2.bf16.msra.mxu0 0
      %780 = vmatprep.subr.bf16.mxu0 0
      %781 = vmatpush2.bf16.msra.mxu0 0
      %782 = vmatprep.subr.bf16.mxu0 0
      %783 = vmatpush2.bf16.msra.mxu0 0
      %784 = vmatprep.mubr.bf16.mxu0 0
      %785 = vmatmul.mubr.bf16.gmra.mxu0 %v709
      %v786 = vpop.f32.mrf.mxu0
      %v787 = vadd.f32 0.0, %v786
      %v788 = vpop.f32.mrf.mxu0
      %v789 = vadd.f32 0.0, %v788
      %v790 = vpop.f32.mrf.mxu0
      %v791 = vpop.f32.mrf.mxu0
      %792 = vdwg.mxu0
      %793 = vmatprep.subr.bf16.mxu0 0
      %794 = vmatpush1.bf16.msra.mxu0 0
      %795 = vmatprep.subr.bf16.mxu0 0
      %796 = vmatpush1.bf16.msra.mxu0 0
      %797 = vmatprep.subr.bf16.mxu0 0
      %798 = vmatpush1.bf16.msra.mxu0 0
      %799 = vmatprep.subr.bf16.mxu0 0
      %800 = vmatpush1.bf16.msra.mxu0 0
      %801 = vmatprep.subr.bf16.mxu0 0
      %802 = vmatpush1.bf16.msra.mxu0 0
      %803 = vmatprep.subr.bf16.mxu0 0
      %804 = vmatpush1.bf16.msra.mxu0 0
      %805 = vmatprep.subr.bf16.mxu0 %v700
      %806 = vmatpush1.bf16.msra.mxu0 %v699
      %807 = vmatprep.subr.bf16.mxu0 %v688
      %808 = vmatpush1.bf16.msra.mxu0 %v687
      %809 = vmatprep.subr.bf16.mxu0 0
      %810 = vmatpush2.bf16.msra.mxu0 0
      %811 = vmatprep.subr.bf16.mxu0 0
      %812 = vmatpush2.bf16.msra.mxu0 0
      %813 = vmatprep.subr.bf16.mxu0 0
      %814 = vmatpush2.bf16.msra.mxu0 0
      %815 = vmatprep.subr.bf16.mxu0 0
      %816 = vmatpush2.bf16.msra.mxu0 0
      %817 = vmatprep.subr.bf16.mxu0 0
      %818 = vmatpush2.bf16.msra.mxu0 0
      %819 = vmatprep.subr.bf16.mxu0 0
      %820 = vmatpush2.bf16.msra.mxu0 0
      %821 = vmatprep.subr.bf16.mxu0 0
      %822 = vmatpush2.bf16.msra.mxu0 0
      %823 = vmatprep.subr.bf16.mxu0 0
      %824 = vmatpush2.bf16.msra.mxu0 0
      %825 = vmatprep.mubr.bf16.mxu0 0
      %826 = vmatmul.mubr.bf16.gmra.mxu0 %v709
      %v827 = vpop.f32.mrf.mxu0
      %v828 = vadd.f32 0.0, %v827
      %v829 = vpop.f32.mrf.mxu0
      %v830 = vadd.f32 0.0, %v829
      %v831 = vpop.f32.mrf.mxu0
      %v832 = vpop.f32.mrf.mxu0
      %833 = vdwg.mxu0
      %834 = vmatprep.subr.bf16.mxu0 0
      %835 = vmatpush1.bf16.msra.mxu0 0
      %836 = vmatprep.subr.bf16.mxu0 0
      %837 = vmatpush1.bf16.msra.mxu0 0
      %838 = vmatprep.subr.bf16.mxu0 0
      %839 = vmatpush1.bf16.msra.mxu0 0
      %840 = vmatprep.subr.bf16.mxu0 0
      %841 = vmatpush1.bf16.msra.mxu0 0
      %842 = vmatprep.subr.bf16.mxu0 0
      %843 = vmatpush1.bf16.msra.mxu0 0
      %844 = vmatprep.subr.bf16.mxu0 0
      %845 = vmatpush1.bf16.msra.mxu0 0
      %846 = vmatprep.subr.bf16.mxu0 %v702
      %847 = vmatpush1.bf16.msra.mxu0 %v701
      %848 = vmatprep.subr.bf16.mxu0 %v690
      %849 = vmatpush1.bf16.msra.mxu0 %v689
      %850 = vmatprep.subr.bf16.mxu0 0
      %851 = vmatpush2.bf16.msra.mxu0 0
      %852 = vmatprep.subr.bf16.mxu0 0
      %853 = vmatpush2.bf16.msra.mxu0 0
      %854 = vmatprep.subr.bf16.mxu0 0
      %855 = vmatpush2.bf16.msra.mxu0 0
      %856 = vmatprep.subr.bf16.mxu0 0
      %857 = vmatpush2.bf16.msra.mxu0 0
      %858 = vmatprep.subr.bf16.mxu0 0
      %859 = vmatpush2.bf16.msra.mxu0 0
      %860 = vmatprep.subr.bf16.mxu0 0
      %861 = vmatpush2.bf16.msra.mxu0 0
      %862 = vmatprep.subr.bf16.mxu0 0
      %863 = vmatpush2.bf16.msra.mxu0 0
      %864 = vmatprep.subr.bf16.mxu0 0
      %865 = vmatpush2.bf16.msra.mxu0 0
      %866 = vmatprep.mubr.bf16.mxu0 0
      %867 = vmatmul.mubr.bf16.gmra.mxu0 %v709
      %v868 = vpop.f32.mrf.mxu0
      %v869 = vadd.f32 0.0, %v868
      %v870 = vpop.f32.mrf.mxu0
      %v871 = vadd.f32 0.0, %v870
      %v872 = vpop.f32.mrf.mxu0
      %v873 = vpop.f32.mrf.mxu0
      %874 = vdwg.mxu0
      %875 = vmatprep.subr.bf16.mxu0 0
      %876 = vmatpush1.bf16.msra.mxu0 0
      %877 = vmatprep.subr.bf16.mxu0 0
      %878 = vmatpush1.bf16.msra.mxu0 0
      %879 = vmatprep.subr.bf16.mxu0 0
      %880 = vmatpush1.bf16.msra.mxu0 0
      %881 = vmatprep.subr.bf16.mxu0 0
      %882 = vmatpush1.bf16.msra.mxu0 0
      %883 = vmatprep.subr.bf16.mxu0 0
      %884 = vmatpush1.bf16.msra.mxu0 0
      %885 = vmatprep.subr.bf16.mxu0 0
      %886 = vmatpush1.bf16.msra.mxu0 0
      %887 = vmatprep.subr.bf16.mxu0 %v704
      %888 = vmatpush1.bf16.msra.mxu0 %v703
      %889 = vmatprep.subr.bf16.mxu0 %v692
      %890 = vmatpush1.bf16.msra.mxu0 %v691
      %891 = vmatprep.subr.bf16.mxu0 0
      %892 = vmatpush2.bf16.msra.mxu0 0
      %893 = vmatprep.subr.bf16.mxu0 0
      %894 = vmatpush2.bf16.msra.mxu0 0
      %895 = vmatprep.subr.bf16.mxu0 0
      %896 = vmatpush2.bf16.msra.mxu0 0
      %897 = vmatprep.subr.bf16.mxu0 0
      %898 = vmatpush2.bf16.msra.mxu0 0
      %899 = vmatprep.subr.bf16.mxu0 0
      %900 = vmatpush2.bf16.msra.mxu0 0
      %901 = vmatprep.subr.bf16.mxu0 0
      %902 = vmatpush2.bf16.msra.mxu0 0
      %903 = vmatprep.subr.bf16.mxu0 0
      %904 = vmatpush2.bf16.msra.mxu0 0
      %905 = vmatprep.subr.bf16.mxu0 0
      %906 = vmatpush2.bf16.msra.mxu0 0
      %907 = vmatprep.mubr.bf16.mxu0 0
      %908 = vmatmul.mubr.bf16.gmra.mxu0 %v709
      %v909 = vpop.f32.mrf.mxu0
      %v910 = vadd.f32 0.0, %v909
      %v911 = vpop.f32.mrf.mxu0
      %v912 = vadd.f32 0.0, %v911
      %v913 = vpop.f32.mrf.mxu0
      %v914 = vpop.f32.mrf.mxu0
      %915 = vdwg.mxu0
      %916 = vmatprep.subr.bf16.mxu0 0
      %917 = vmatpush1.bf16.msra.mxu0 0
      %918 = vmatprep.subr.bf16.mxu0 0
      %919 = vmatpush1.bf16.msra.mxu0 0
      %920 = vmatprep.subr.bf16.mxu0 0
      %921 = vmatpush1.bf16.msra.mxu0 0
      %922 = vmatprep.subr.bf16.mxu0 0
      %923 = vmatpush1.bf16.msra.mxu0 0
      %924 = vmatprep.subr.bf16.mxu0 0
      %925 = vmatpush1.bf16.msra.mxu0 0
      %926 = vmatprep.subr.bf16.mxu0 0
      %927 = vmatpush1.bf16.msra.mxu0 0
      %928 = vmatprep.subr.bf16.mxu0 %v706
      %929 = vmatpush1.bf16.msra.mxu0 %v705
      %930 = vmatprep.subr.bf16.mxu0 %v694
      %931 = vmatpush1.bf16.msra.mxu0 %v693
      %932 = vmatprep.subr.bf16.mxu0 0
      %933 = vmatpush2.bf16.msra.mxu0 0
      %934 = vmatprep.subr.bf16.mxu0 0
      %935 = vmatpush2.bf16.msra.mxu0 0
      %936 = vmatprep.subr.bf16.mxu0 0
      %937 = vmatpush2.bf16.msra.mxu0 0
      %938 = vmatprep.subr.bf16.mxu0 0
      %939 = vmatpush2.bf16.msra.mxu0 0
      %940 = vmatprep.subr.bf16.mxu0 0
      %941 = vmatpush2.bf16.msra.mxu0 0
      %942 = vmatprep.subr.bf16.mxu0 0
      %943 = vmatpush2.bf16.msra.mxu0 0
      %944 = vmatprep.subr.bf16.mxu0 0
      %945 = vmatpush2.bf16.msra.mxu0 0
      %946 = vmatprep.subr.bf16.mxu0 0
      %947 = vmatpush2.bf16.msra.mxu0 0
      %948 = vmatprep.mubr.bf16.mxu0 0
      %949 = vmatmul.mubr.bf16.gmra.mxu0 %v709
      %v950 = vpop.f32.mrf.mxu0
      %v951 = vadd.f32 0.0, %v950
      %v952 = vpop.f32.mrf.mxu0
      %v953 = vadd.f32 0.0, %v952
      %v954 = vpop.f32.mrf.mxu0
      %v955 = vpop.f32.mrf.mxu0
      %956 = vdwg.mxu0
      %v957 = vpack.c.bf16 %v746, %v746
      %v958 = vpack.c.bf16 %v748, %v748
      %v959 = vpack.c.bf16 %v787, %v787
      %v960 = vpack.c.bf16 %v789, %v789
      %v961 = vpack.c.bf16 %v828, %v828
      %v962 = vpack.c.bf16 %v830, %v830
      %v963 = vpack.c.bf16 %v869, %v869
      %v964 = vpack.c.bf16 %v871, %v871
      %v965 = vpack.c.bf16 %v910, %v910
      %v966 = vpack.c.bf16 %v912, %v912
      %v967 = vpack.c.bf16 %v951, %v951
      %v968 = vpack.c.bf16 %v953, %v953
      %v981 = vunpack.c.l.b16 %v957
      %v982 = vunpack.c.l.b16 %v958
      %v983 = vunpack.c.l.b16 %v959
      %v984 = vunpack.c.l.b16 %v960
      %v985 = vunpack.c.l.b16 %v961
      %v986 = vunpack.c.l.b16 %v962
      %v987 = vunpack.c.l.b16 %v963
      %v988 = vunpack.c.l.b16 %v964
      %v989 = vunpack.c.l.b16 %v965
      %v990 = vunpack.c.l.b16 %v966
      %v991 = vunpack.c.l.b16 %v967
      %v992 = vunpack.c.l.b16 %v968
      %v993 = vpack.c.b16 %v982, %v981
      %v994 = vpack.c.b16 %v984, %v983
      %v995 = vpack.c.b16 %v986, %v985
      %v996 = vpack.c.b16 %v988, %v987
      %v997 = vpack.c.b16 %v990, %v989
      %v998 = vpack.c.b16 %v992, %v991
      %1005 = vst [vmem:[%s320] sm:$0xff] %v993
      %1006 = vst [vmem:[%s320 + $0x8] sm:$0xff] %v994
      %1007 = vst [vmem:[%s320 + $0x10] sm:$0xff] %v995
      %1008 = vst [vmem:[%s320 + $0x18] sm:$0xff] %v996
      %1009 = vst [vmem:[%s320 + $0x20] sm:$0xff] %v997
      %1010 = vst [vmem:[%s320 + $0x28] sm:$0xff] %v998
      %v1011 = vadd.f32 %v746, %v748
      %v1012 = vadd.f32 %v1011, %v787
      %v1013 = vadd.f32 %v1012, %v789
      %v1014 = vadd.f32 %v1013, %v828
      %v1015 = vadd.f32 %v1014, %v830
      %v1016 = vadd.f32 %v1015, %v869
      %v1017 = vadd.f32 %v1016, %v871
      %v1018 = vadd.f32 %v1017, %v910
      %v1019 = vadd.f32 %v1018, %v912
      %v1020 = vadd.f32 %v1019, %v951
      %v1021 = vadd.f32 %v1020, %v953
      %1022 = vadd.xlane.f32.xlu0 %v1021
      %v1023 = vpop.xlane.xlu0 %1022
      %v1024 = vmul.f32 %v746, %v746
      %v1025 = vmul.f32 %v748, %v748
      %v1026 = vmul.f32 %v787, %v787
      %v1027 = vmul.f32 %v789, %v789
      %v1028 = vmul.f32 %v828, %v828
      %v1029 = vmul.f32 %v830, %v830
      %v1030 = vmul.f32 %v869, %v869
      %v1031 = vmul.f32 %v871, %v871
      %v1032 = vmul.f32 %v910, %v910
      %v1033 = vmul.f32 %v912, %v912
      %v1034 = vmul.f32 %v951, %v951
      %v1035 = vmul.f32 %v953, %v953
      %v1036 = vadd.f32 %v1024, %v1025
      %v1037 = vadd.f32 %v1036, %v1026
      %v1038 = vadd.f32 %v1037, %v1027
      %v1039 = vadd.f32 %v1038, %v1028
      %v1040 = vadd.f32 %v1039, %v1029
      %v1041 = vadd.f32 %v1040, %v1030
      %v1042 = vadd.f32 %v1041, %v1031
      %v1043 = vadd.f32 %v1042, %v1032
      %v1044 = vadd.f32 %v1043, %v1033
      %v1045 = vadd.f32 %v1044, %v1034
      %v1046 = vadd.f32 %v1045, %v1035
      %1047 = vadd.xlane.f32.xlu0 %v1046
      %v1048 = vpop.xlane.xlu0 %1047
      %vm1049 = vcmask 7168
      %v1050 = vsel %vm1049, %v1023, %v1048
      %vm1051 = vcmask 15360
      %1052 = vst.msk [vmem:[%s328] sm:$0xff] %vm1051, %v1050
      %s1053 = smul.u32 12, %s23
      %p1054 = scmp.lt.s32.totalorder %s22, 1
      %s1055 = scalar_select %p1054, %s22, 1
      %p1056 = scmp.lt.s32.totalorder %s1053, 11
      %s1057 = scalar_select %p1056, %s1053, 11
      %s1058 = smul.addr %s1055, 12
      %s1059 = sadd.s32 %s1057, %s1058
      %s1060 = smul.addr %s1059, 4
      %s1061 = scalar_lea.vmem %s5, %s1060
      %p1062 = scmp.lt.s32.totalorder %s22, 1
      %s1063 = scalar_select %p1062, %s22, 1
      %p1064 = scmp.lt.s32.totalorder %s23, 0
      %s1065 = scalar_select %p1064, %s23, 0
      %s1066 = sadd.s32 %s1065, %s1063
      %s1067 = smul.addr %s1066, 8
      %s1068 = scalar_lea.vmem %s6, %s1067
      // Predicated region
      $region41: #{pre_activation_bottleneck.3} parent=39 // pred_check
        %p1069 = pneg %p167
      $region42: #{pre_activation_bottleneck.3} parent=39 // pred_check_branch
        %1071 = sbr.rel (%p1069) target = $region44
      $region43: #{pre_activation_bottleneck.3} parent=39 // pred_region
        %s1072 = smul.u32 12, %s23
      $region44: #{pre_activation_bottleneck.3} parent=39 // pred_fallthru
        _
      // Predicated region
      $region45: #{pre_activation_bottleneck.3} parent=39 // pred_check
        %p1073 = pneg %p195
      $region46: #{pre_activation_bottleneck.3} parent=39 // pred_check_branch
        %1075 = sbr.rel (%p1073) target = $region48
      $region47: #{pre_activation_bottleneck.3} parent=39 // pred_region
        _
      $region48: #{pre_activation_bottleneck.3} parent=39 // pred_fallthru
        _
    $region40: #{pre_activation_bottleneck.3} parent=5 // pred_fallthru
      _
    %p1076 = scmp.le.s32.totalorder 2, %s13
    // Predicated region
    $region49: #{pre_activation_bottleneck.3} parent=5 // pred_check
      %p1077 = pneg %p1076
    $region50: #{pre_activation_bottleneck.3} parent=5 // pred_check_branch
      %1079 = sbr.rel (%p1077) target = $region52
    $region51: #{pre_activation_bottleneck.3} parent=5 // pred_region
      %s1080 = ssub.s32 %s13, 2
      // Predicated region
      $region53: #{pre_activation_bottleneck.3} parent=51 // pred_check
        %p1081 = pneg %p173
      $region54: #{pre_activation_bottleneck.3} parent=51 // pred_check_branch
        %1083 = sbr.rel (%p1081) target = $region56
      $region55: #{pre_activation_bottleneck.3} parent=51 // pred_region
        %s1084 = smul.u32 12, %s25
        %p1085 = scmp.lt.s32.totalorder %s24, 1
        %s1086 = scalar_select %p1085, %s24, 1
        %p1087 = scmp.lt.s32.totalorder %s1084, 11
        %s1088 = scalar_select %p1087, %s1084, 11
        %s1089 = smul.addr %s1086, 12
        %s1090 = sadd.s32 %s1088, %s1089
        %s1091 = smul.addr %s1090, 4
        %s1092 = scalar_lea.vmem %s5, %s1091
      $region56: #{pre_activation_bottleneck.3} parent=51 // pred_fallthru
        _
      // Predicated region
      $region57: #{pre_activation_bottleneck.3} parent=51 // pred_check
        %p1093 = pneg %p201
      $region58: #{pre_activation_bottleneck.3} parent=51 // pred_check_branch
        %1095 = sbr.rel (%p1093) target = $region60
      $region59: #{pre_activation_bottleneck.3} parent=51 // pred_region
        %p1096 = scmp.lt.s32.totalorder %s24, 1
        %s1097 = scalar_select %p1096, %s24, 1
        %p1098 = scmp.lt.s32.totalorder %s25, 0
        %s1099 = scalar_select %p1098, %s25, 0
        %s1100 = sadd.s32 %s1099, %s1097
        %s1101 = smul.addr %s1100, 8
        %s1102 = scalar_lea.vmem %s6, %s1101
      $region60: #{pre_activation_bottleneck.3} parent=51 // pred_fallthru
        _
    $region52: #{pre_activation_bottleneck.3} parent=5 // pred_fallthru
      _
  $region6: #{pre_activation_bottleneck.3} parent=0 // loop_footer
    %s17 = sadd.s32 1, %s13
  $region7: #{pre_activation_bottleneck.3} parent=0 // loop_footer_branch
    %12 = sbr.rel target = $region3
  $region8: #{pre_activation_bottleneck.3} parent=0 // loop_exit
    _

// kernel: pre_activation_bottleneck.5
$region0: #{pre_activation_bottleneck.5}
  #allocation0 [shape = 'u32[]', space=smem, size = 0x4, offset = 0x4, fixed_abs, tag = 'smem constant byte address 0x4 - core index']
  #allocation1 [shape = 'u32[144,128]{1,0:T(1,128)}', space=vmem, size = 0x12000, scoped, tag = 'internal scratch']
  %s0 = inlined_call_operand.vmem [shape: bf16[2,8,1024], index: 0, kind: input, shape index: {}]
  %s1 = inlined_call_operand.vmem [shape: f32[8,1], index: 1, kind: input, shape index: {}]
  %s2 = inlined_call_operand.vmem [shape: f32[8,1], index: 2, kind: input, shape index: {}]
  %s3 = inlined_call_operand.vmem [shape: bf16[32,8], index: 3, kind: input, shape index: {}]
  %s4 = inlined_call_operand.vmem [shape: f32[2,32,1024], index: 4, kind: output, shape index: {}]
  %s5 = sld [smem:[#allocation0]]
  $region49: #{pre_activation_bottleneck.5} parent=0
    _
  %s7 = ssub.s32 1, %s5
  %s8 = scalar_select 0, %s7, %s5
  loop: start=0, step=1, limit=4
  $region2: #{pre_activation_bottleneck.5} parent=0 // loop_pre_header
    _
  $region3: #{pre_activation_bottleneck.5} parent=0 // loop_header
    %s10 = sphi 0, %s14
    %p11 = scmp.ge.s32.totalorder %s10, 4
    %s17 = sphi 0, %s29
    %s18 = sphi 0, %s25
    %s19 = sphi 0, %s17
    %s20 = sphi 0, %s18
    %s21 = sphi 0, %s19
    %s22 = sphi 0, %s20
    %s34 = sphi 0, %s36
    %s37 = sphi 0, %s34
    %s38 = sphi 0, %s37
    %s54 = sphi 0, %s38
    %s58 = sphi 0, %s58
    %s60 = sphi 0, %s58
    %s61 = sphi 0, %s60
    %s75 = sphi 0, %s61
    %s79 = sphi 0, %s79
    %s81 = sphi 0, %s79
    %s82 = sphi 0, %s81
    %s96 = sphi 0, %s82
    %s100 = sphi 0, %s100
    %s102 = sphi 0, %s100
    %s103 = sphi 0, %s102
    %s117 = sphi 0, %s103
    %s125 = sphi 0, %s127
    %s128 = sphi 0, %s125
    %s129 = sphi 0, %s128
    %s145 = sphi 0, %s129
  $region4: #{pre_activation_bottleneck.5} parent=0 // loop_header_branch
    %13 = sbr.rel (%p11) target = $region8
  $region5: #{pre_activation_bottleneck.5} parent=0 // loop_body
    %s15 = ssub.s32 %s10, 1
    %s16 = ssub.s32 %s10, 2
    %s23 = sadd.s32 1, %s18
    %p24 = scmp.ge.s32.totalorder %s23, 1
    %s25 = scalar_select %p24, 0, %s23
    %s26 = sadd.s32 1, %s17
    %s27 = scalar_select %p24, %s26, %s17
    %p28 = scmp.ge.s32.totalorder %s27, 2
    %s29 = scalar_select %p28, 0, %s27
    %s30 = ssub.s32 %s17, %s29
    %s31 = ssub.s32 %s18, %s25
    %s32 = sor.u32 %s30, %s31
    %p33 = scmp.eq.s32.totalorder %s32, 0
    %s35 = sadd.s32 %s34, 1
    %s36 = scalar_select %p33, %s34, %s35
    %p39 = pneg %p33
    %p40 = scmp.eq.s32.totalorder %s10, 1
    %p41 = por %p39, %p40
    %p42 = scmp.ne.s32.totalorder %s34, %s37
    %p43 = scmp.eq.s32.totalorder %s10, 0
    %p44 = por %p42, %p43
    %p45 = scmp.ne.s32.totalorder %s34, %s37
    %p46 = scmp.eq.s32.totalorder %s15, 1
    %p47 = por %p45, %p46
    %p48 = scmp.ne.s32.totalorder %s37, %s38
    %p49 = scmp.eq.s32.totalorder %s15, 0
    %p50 = por %p48, %p49
    %p51 = scmp.ne.s32.totalorder %s37, %s38
    %p52 = scmp.eq.s32.totalorder %s16, 1
    %p53 = por %p51, %p52
    %p55 = scmp.ne.s32.totalorder %s38, %s54
    %p56 = scmp.eq.s32.totalorder %s16, 0
    %p57 = por %p55, %p56
    %s59 = sadd.s32 %s58, 1
    %p62 = scmp.eq.s32.totalorder %s10, 1
    %p63 = scmp.ne.s32.totalorder %s58, %s60
    %p64 = scmp.eq.s32.totalorder %s10, 0
    %p65 = por %p63, %p64
    %p66 = scmp.ne.s32.totalorder %s58, %s60
    %p67 = scmp.eq.s32.totalorder %s15, 1
    %p68 = por %p66, %p67
    %p69 = scmp.ne.s32.totalorder %s60, %s61
    %p70 = scmp.eq.s32.totalorder %s15, 0
    %p71 = por %p69, %p70
    %p72 = scmp.ne.s32.totalorder %s60, %s61
    %p73 = scmp.eq.s32.totalorder %s16, 1
    %p74 = por %p72, %p73
    %p76 = scmp.ne.s32.totalorder %s61, %s75
    %p77 = scmp.eq.s32.totalorder %s16, 0
    %p78 = por %p76, %p77
    %s80 = sadd.s32 %s79, 1
    %p83 = scmp.eq.s32.totalorder %s10, 1
    %p84 = scmp.ne.s32.totalorder %s79, %s81
    %p85 = scmp.eq.s32.totalorder %s10, 0
    %p86 = por %p84, %p85
    %p87 = scmp.ne.s32.totalorder %s79, %s81
    %p88 = scmp.eq.s32.totalorder %s15, 1
    %p89 = por %p87, %p88
    %p90 = scmp.ne.s32.totalorder %s81, %s82
    %p91 = scmp.eq.s32.totalorder %s15, 0
    %p92 = por %p90, %p91
    %p93 = scmp.ne.s32.totalorder %s81, %s82
    %p94 = scmp.eq.s32.totalorder %s16, 1
    %p95 = por %p93, %p94
    %p97 = scmp.ne.s32.totalorder %s82, %s96
    %p98 = scmp.eq.s32.totalorder %s16, 0
    %p99 = por %p97, %p98
    %s101 = sadd.s32 %s100, 1
    %p104 = scmp.eq.s32.totalorder %s10, 1
    %p105 = scmp.ne.s32.totalorder %s100, %s102
    %p106 = scmp.eq.s32.totalorder %s10, 0
    %p107 = por %p105, %p106
    %p108 = scmp.ne.s32.totalorder %s100, %s102
    %p109 = scmp.eq.s32.totalorder %s15, 1
    %p110 = por %p108, %p109
    %p111 = scmp.ne.s32.totalorder %s102, %s103
    %p112 = scmp.eq.s32.totalorder %s15, 0
    %p113 = por %p111, %p112
    %p114 = scmp.ne.s32.totalorder %s102, %s103
    %p115 = scmp.eq.s32.totalorder %s16, 1
    %p116 = por %p114, %p115
    %p118 = scmp.ne.s32.totalorder %s103, %s117
    %p119 = scmp.eq.s32.totalorder %s16, 0
    %p120 = por %p118, %p119
    %s121 = ssub.s32 %s17, %s29
    %s122 = ssub.s32 %s18, %s25
    %s123 = sor.u32 %s121, %s122
    %p124 = scmp.eq.s32.totalorder %s123, 0
    %s126 = sadd.s32 %s125, 1
    %s127 = scalar_select %p124, %s125, %s126
    %p130 = pneg %p124
    %p131 = scmp.eq.s32.totalorder %s10, 1
    %p132 = por %p130, %p131
    %p133 = scmp.ne.s32.totalorder %s125, %s128
    %p134 = scmp.eq.s32.totalorder %s10, 0
    %p135 = por %p133, %p134
    %p136 = scmp.ne.s32.totalorder %s125, %s128
    %p137 = scmp.eq.s32.totalorder %s15, 1
    %p138 = por %p136, %p137
    %p139 = scmp.ne.s32.totalorder %s128, %s129
    %p140 = scmp.eq.s32.totalorder %s15, 0
    %p141 = por %p139, %p140
    %p142 = scmp.ne.s32.totalorder %s128, %s129
    %p143 = scmp.eq.s32.totalorder %s16, 1
    %p144 = por %p142, %p143
    %p146 = scmp.ne.s32.totalorder %s129, %s145
    %p147 = scmp.eq.s32.totalorder %s16, 0
    %p148 = por %p146, %p147
    %p149 = scmp.le.s32.totalorder 1, %s10
    %p150 = scmp.lt.s32.totalorder %s10, 3
    %p151 = pnand %p149, %p150
    %p152 = pneg %p151
    // Predicated region
    $region9: #{pre_activation_bottleneck.5} parent=5 // pred_check
      _
    $region10: #{pre_activation_bottleneck.5} parent=5 // pred_check_branch
      %154 = sbr.rel (%p151) target = $region12
    $region11: #{pre_activation_bottleneck.5} parent=5 // pred_region
      %s155 = ssub.s32 %s10, 1
      // Predicated region
      $region13: #{pre_activation_bottleneck.5} parent=11 // pred_check
        %p156 = pneg %p71
      $region14: #{pre_activation_bottleneck.5} parent=11 // pred_check_branch
        %158 = sbr.rel (%p156) target = $region16
      $region15: #{pre_activation_bottleneck.5} parent=11 // pred_region
        _
      $region16: #{pre_activation_bottleneck.5} parent=11 // pred_fallthru
        _
      // Predicated region
      $region17: #{pre_activation_bottleneck.5} parent=11 // pred_check
        %p159 = pneg %p92
      $region18: #{pre_activation_bottleneck.5} parent=11 // pred_check_branch
        %161 = sbr.rel (%p159) target = $region20
      $region19: #{pre_activation_bottleneck.5} parent=11 // pred_region
        _
      $region20: #{pre_activation_bottleneck.5} parent=11 // pred_fallthru
        _
      // Predicated region
      $region21: #{pre_activation_bottleneck.5} parent=11 // pred_check
        %p162 = pneg %p113
      $region22: #{pre_activation_bottleneck.5} parent=11 // pred_check_branch
        %164 = sbr.rel (%p162) target = $region24
      $region23: #{pre_activation_bottleneck.5} parent=11 // pred_region
        _
      $region24: #{pre_activation_bottleneck.5} parent=11 // pred_fallthru
        _
    $region12: #{pre_activation_bottleneck.5} parent=5 // pred_fallthru
      _
    %p165 = scmp.lt.s32.totalorder %s10, 2
    // Predicated region
    $region25: #{pre_activation_bottleneck.5} parent=5 // pred_check
      %p166 = pneg %p165
    $region26: #{pre_activation_bottleneck.5} parent=5 // pred_check_branch
      %168 = sbr.rel (%p166) target = $region28
    $region27: #{pre_activation_bottleneck.5} parent=5 // pred_region
      // Predicated region
      $region29: #{pre_activation_bottleneck.5} parent=27 // pred_check
        %p169 = pneg %p44
      $region30: #{pre_activation_bottleneck.5} parent=27 // pred_check_branch
        %171 = sbr.rel (%p169) target = $region32
      $region31: #{pre_activation_bottleneck.5} parent=27 // pred_region
        %s172 = smul.u32 8, %s18
        %p173 = scmp.lt.s32.totalorder %s17, 1
        %s174 = scalar_select %p173, %s17, 1
        %p175 = scmp.lt.s32.totalorder %s172, 7
        %s176 = scalar_select %p175, %s172, 7
        %s177 = smul.addr %s174, 8
        %s178 = sadd.s32 %s176, %s177
        %s179 = smul.addr %s178, 4
        %s180 = scalar_lea.vmem %s0, %s179
        %s181 = smul.u32 8, %s18
      $region32: #{pre_activation_bottleneck.5} parent=27 // pred_fallthru
        _
    $region28: #{pre_activation_bottleneck.5} parent=5 // pred_fallthru
      _
    %p182 = scmp.le.s32.totalorder 1, %s10
    %p183 = scmp.lt.s32.totalorder %s10, 3
    %p184 = pnand %p182, %p183
    %p185 = pneg %p184
    // Predicated region
    $region33: #{pre_activation_bottleneck.5} parent=5 // pred_check
      _
    $region34: #{pre_activation_bottleneck.5} parent=5 // pred_check_branch
      %187 = sbr.rel (%p184) target = $region36
    $region35: #{pre_activation_bottleneck.5} parent=5 // pred_region
      %s188 = ssub.s32 %s10, 1
      %s189 = smul.u32 8, %s20
      %p190 = scmp.lt.s32.totalorder %s19, 1
      %s191 = scalar_select %p190, %s19, 1
      %p192 = scmp.lt.s32.totalorder %s189, 7
      %s193 = scalar_select %p192, %s189, 7
      %s194 = smul.addr %s191, 8
      %s195 = sadd.s32 %s193, %s194
      %s196 = smul.addr %s195, 4
      %s197 = scalar_lea.vmem %s0, %s196
      %p198 = pneg %p50
      %p199 = pneg %p47
      %p200 = pneg %p71
      %p201 = pneg %p68
      %p202 = pneg %p92
      %p203 = pneg %p89
      %p204 = pneg %p113
      %p205 = pneg %p110
      %p206 = pneg %p141
      %p207 = pneg %p138
      %s208 = smul.u32 8, %s20
      %p209 = scmp.lt.s32.totalorder %s19, 1
      %s210 = scalar_select %p209, %s19, 1
      %p211 = scmp.lt.s32.totalorder %s208, 7
      %s212 = scalar_select %p211, %s208, 7
      %s213 = smul.addr %s210, 32
      %s214 = sadd.s32 %s212, %s213
      %s215 = smul.addr %s214, 8
      %s216 = scalar_lea.vmem %s4, %s215
      %s217 = smul.u32 8, %s20
      %p218 = scmp.lt.s32.totalorder %s19, 1
      %s219 = scalar_select %p218, %s19, 1
      %p220 = scmp.lt.s32.totalorder %s217, 7
      %s221 = scalar_select %p220, %s217, 7
      %s222 = smul.addr %s219, 8
      %s223 = sadd.s32 %s221, %s222
      %s224 = smul.addr %s223, 4
      %s225 = scalar_lea.vmem %s0, %s224
      %s226 = smul.u32 8, %s20
      %s227 = smul.u32 8, %s20
      %p228 = scmp.lt.s32.totalorder %s19, 1
      %s229 = scalar_select %p228, %s19, 1
      %p230 = scmp.lt.s32.totalorder %s227, 7
      %s231 = scalar_select %p230, %s227, 7
      %s232 = smul.addr %s229, 32
      %s233 = sadd.s32 %s231, %s232
      %s234 = smul.addr %s233, 8
      %s235 = scalar_lea.vmem %s4, %s234
      %s236 = smul.u32 8, %s20
      %v238 = vld [vmem:[%s225] sm:$0xff]
      %v239 = vld [vmem:[%s225 + $0x8] sm:$0xff]
      %v240 = vld [vmem:[%s225 + $0x10] sm:$0xff]
      %v241 = vld [vmem:[%s225 + $0x18] sm:$0xff]
      %v242 = vunpack.c.l.bf16 %v238
      %v243 = vunpack.c.h.bf16 %v238
      %v244 = vunpack.c.l.bf16 %v239
      %v245 = vunpack.c.h.bf16 %v239
      %v246 = vunpack.c.l.bf16 %v240
      %v247 = vunpack.c.h.bf16 %v240
      %v248 = vunpack.c.l.bf16 %v241
      %v249 = vunpack.c.h.bf16 %v241
      %v250 = vld [vmem:[%s1] sm:$0xff]
      %252 = vset.pattern.permute.xlu0 0
      %253 = vperm.xlu0 %252, %v250
      %v254 = vpop.permute.xlu0 %253
      %v256 = vmul.f32 %v242, %v254
      %v257 = vmul.f32 %v243, %v254
      %v258 = vmul.f32 %v244, %v254
      %v259 = vmul.f32 %v245, %v254
      %v260 = vmul.f32 %v246, %v254
      %v261 = vmul.f32 %v247, %v254
      %v262 = vmul.f32 %v248, %v254
      %v263 = vmul.f32 %v249, %v254
      %v264 = vld [vmem:[%s2] sm:$0xff]
      %266 = vset.pattern.permute.xlu0 0
      %267 = vperm.xlu0 %266, %v264
      %v268 = vpop.permute.xlu0 %267
      %v270 = vadd.f32 %v256, %v268
      %v271 = vadd.f32 %v257, %v268
      %v272 = vadd.f32 %v258, %v268
      %v273 = vadd.f32 %v259, %v268
      %v274 = vadd.f32 %v260, %v268
      %v275 = vadd.f32 %v261, %v268
      %v276 = vadd.f32 %v262, %v268
      %v277 = vadd.f32 %v263, %v268
      %v278 = vmax.f32 %v270, 0.0
      %v279 = vmax.f32 %v271, 0.0
      %v280 = vmax.f32 %v272, 0.0
      %v281 = vmax.f32 %v273, 0.0
      %v282 = vmax.f32 %v274, 0.0
      %v283 = vmax.f32 %v275, 0.0
      %v284 = vmax.f32 %v276, 0.0
      %v285 = vmax.f32 %v277, 0.0
      %v286 = vld [vmem:[%s3] sm:$0xf]
      %v287 = vld [vmem:[%s3 + $0x4] sm:$0xf]
      %v288 = vld [vmem:[%s3 + $0x8] sm:$0xf]
      %v289 = vld [vmem:[%s3 + $0xc] sm:$0xf]
      %v290 = vpack.c.bf16 %v278, %v278
      %v291 = vpack.c.bf16 %v279, %v279
      %v292 = vpack.c.bf16 %v280, %v280
      %v293 = vpack.c.bf16 %v281, %v281
      %v294 = vpack.c.bf16 %v282, %v282
      %v295 = vpack.c.bf16 %v283, %v283
      %v296 = vpack.c.bf16 %v284, %v284
      %v297 = vpack.c.bf16 %v285, %v285
      %v302 = vunpack.c.l.b16 %v286
      %v303 = vunpack.c.l.b16 %v287
      %v304 = vunpack.c.l.b16 %v288
      %v305 = vunpack.c.l.b16 %v289
      %v306 = vpack.c.b16 %v303, %v302
      %v307 = vpack.c.b16 %v305, %v304
      %vm308 = vcmask 64512
      %v310 = vsel %vm308, %v306, 0
      %v313 = vsel %vm308, %v307, 0
      %vm315 = vcmask 1043456
      %v317 = vsel %vm315, %v290, 0
      %v320 = vsel %vm315, %v291, 0
      %v323 = vsel %vm315, %v292, 0
      %v326 = vsel %vm315, %v293, 0
      %v329 = vsel %vm315, %v294, 0
      %v332 = vsel %vm315, %v295, 0
      %v335 = vsel %vm315, %v296, 0
      %v338 = vsel %vm315, %v297, 0
      %340 = vmatprep.subr.bf16.mxu0 0
      %341 = vmatpush1.bf16.msra.mxu0 0
      %342 = vmatprep.subr.bf16.mxu0 0
      %343 = vmatpush1.bf16.msra.mxu0 0
      %344 = vmatprep.subr.bf16.mxu0 0
      %345 = vmatpush1.bf16.msra.mxu0 0
      %346 = vmatprep.subr.bf16.mxu0 0
      %347 = vmatpush1.bf16.msra.mxu0 0
      %348 = vmatprep.subr.bf16.mxu0 0
      %349 = vmatpush1.bf16.msra.mxu0 0
      %350 = vmatprep.subr.bf16.mxu0 0
      %351 = vmatpush1.bf16.msra.mxu0 0
      %352 = vmatprep.subr.bf16.mxu0 0
      %353 = vmatpush1.bf16.msra.mxu0 0
      %354 = vmatprep.subr.bf16.mxu0 %v320
      %355 = vmatpush1.bf16.msra.mxu0 %v317
      %356 = vmatprep.subr.bf16.mxu0 0
      %357 = vmatpush2.bf16.msra.mxu0 0
      %358 = vmatprep.subr.bf16.mxu0 0
      %359 = vmatpush2.bf16.msra.mxu0 0
      %360 = vmatprep.subr.bf16.mxu0 0
      %361 = vmatpush2.bf16.msra.mxu0 0
      %362 = vmatprep.subr.bf16.mxu0 0
      %363 = vmatpush2.bf16.msra.mxu0 0
      %364 = vmatprep.subr.bf16.mxu0 0
      %365 = vmatpush2.bf16.msra.mxu0 0
      %366 = vmatprep.subr.bf16.mxu0 0
      %367 = vmatpush2.bf16.msra.mxu0 0
      %368 = vmatprep.subr.bf16.mxu0 0
      %369 = vmatpush2.bf16.msra.mxu0 0
      %370 = vmatprep.subr.bf16.mxu0 0
      %371 = vmatpush2.bf16.msra.mxu0 0
      %372 = vmatprep.mubr.bf16.mxu0 0
      %373 = vmatmul.mubr.bf16.gmra.mxu0 %v310
      %v374 = vpop.f32.mrf.mxu0
      %v375 = vadd.f32 0.0, %v374
      %v376 = vpop.f32.mrf.mxu0
      %v377 = vadd.f32 0.0, %v376
      %v378 = vpop.f32.mrf.mxu0
      %v379 = vadd.f32 0.0, %v378
      %v380 = vpop.f32.mrf.mxu0
      %v381 = vadd.f32 0.0, %v380
      %382 = vmatprep.mubr.bf16.mxu0 0
      %383 = vmatmul.mubr.bf16.gmra.mxu0 %v313
      %v384 = vpop.f32.mrf.mxu0
      %v385 = vadd.f32 0.0, %v384
      %v386 = vpop.f32.mrf.mxu0
      %v387 = vadd.f32 0.0, %v386
      %v388 = vpop.f32.mrf.mxu0
      %v389 = vadd.f32 0.0, %v388
      %v390 = vpop.f32.mrf.mxu0
      %v391 = vadd.f32 0.0, %v390
      %392 = vdwg.mxu0
      %393 = vmatprep.subr.bf16.mxu0 0
      %394 = vmatpush1.bf16.msra.mxu0 0
      %395 = vmatprep.subr.bf16.mxu0 0
      %396 = vmatpush1.bf16.msra.mxu0 0
      %397 = vmatprep.subr.bf16.mxu0 0
      %398 = vmatpush1.bf16.msra.mxu0 0
      %399 = vmatprep.subr.bf16.mxu0 0
      %400 = vmatpush1.bf16.msra.mxu0 0
      %401 = vmatprep.subr.bf16.mxu0 0
      %402 = vmatpush1.bf16.msra.mxu0 0
      %403 = vmatprep.subr.bf16.mxu0 0
      %404 = vmatpush1.bf16.msra.mxu0 0
      %405 = vmatprep.subr.bf16.mxu0 0
      %406 = vmatpush1.bf16.msra.mxu0 0
      %407 = vmatprep.subr.bf16.mxu0 %v326
      %408 = vmatpush1.bf16.msra.mxu0 %v323
      %409 = vmatprep.subr.bf16.mxu0 0
      %410 = vmatpush2.bf16.msra.mxu0 0
      %411 = vmatprep.subr.bf16.mxu0 0
      %412 = vmatpush2.bf16.msra.mxu0 0
      %413 = vmatprep.subr.bf16.mxu0 0
      %414 = vmatpush2.bf16.msra.mxu0 0
      %415 = vmatprep.subr.bf16.mxu0 0
      %416 = vmatpush2.bf16.msra.mxu0 0
      %417 = vmatprep.subr.bf16.mxu0 0
      %418 = vmatpush2.bf16.msra.mxu0 0
      %419 = vmatprep.subr.bf16.mxu0 0
      %420 = vmatpush2.bf16.msra.mxu0 0
      %421 = vmatprep.subr.bf16.mxu0 0
      %422 = vmatpush2.bf16.msra.mxu0 0
      %423 = vmatprep.subr.bf16.mxu0 0
      %424 = vmatpush2.bf16.msra.mxu0 0
      %425 = vmatprep.mubr.bf16.mxu0 0
      %426 = vmatmul.mubr.bf16.gmra.mxu0 %v310
      %v427 = vpop.f32.mrf.mxu0
      %v428 = vadd.f32 0.0, %v427
      %v429 = vpop.f32.mrf.mxu0
      %v430 = vadd.f32 0.0, %v429
      %v431 = vpop.f32.mrf.mxu0
      %v432 = vadd.f32 0.0, %v431
      %v433 = vpop.f32.mrf.mxu0
      %v434 = vadd.f32 0.0, %v433
      %435 = vmatprep.mubr.bf16.mxu0 0
      %436 = vmatmul.mubr.bf16.gmra.mxu0 %v313
      %v437 = vpop.f32.mrf.mxu0
      %v438 = vadd.f32 0.0, %v437
      %v439 = vpop.f32.mrf.mxu0
      %v440 = vadd.f32 0.0, %v439
      %v441 = vpop.f32.mrf.mxu0
      %v442 = vadd.f32 0.0, %v441
      %v443 = vpop.f32.mrf.mxu0
      %v444 = vadd.f32 0.0, %v443
      %445 = vdwg.mxu0
      %446 = vmatprep.subr.bf16.mxu0 0
      %447 = vmatpush1.bf16.msra.mxu0 0
      %448 = vmatprep.subr.bf16.mxu0 0
      %449 = vmatpush1.bf16.msra.mxu0 0
      %450 = vmatprep.subr.bf16.mxu0 0
      %451 = vmatpush1.bf16.msra.mxu0 0
      %452 = vmatprep.subr.bf16.mxu0 0
      %453 = vmatpush1.bf16.msra.mxu0 0
      %454 = vmatprep.subr.bf16.mxu0 0
      %455 = vmatpush1.bf16.msra.mxu0 0
      %456 = vmatprep.subr.bf16.mxu0 0
      %457 = vmatpush1.bf16.msra.mxu0 0
      %458 = vmatprep.subr.bf16.mxu0 0
      %459 = vmatpush1.bf16.msra.mxu0 0
      %460 = vmatprep.subr.bf16.mxu0 %v332
      %461 = vmatpush1.bf16.msra.mxu0 %v329
      %462 = vmatprep.subr.bf16.mxu0 0
      %463 = vmatpush2.bf16.msra.mxu0 0
      %464 = vmatprep.subr.bf16.mxu0 0
      %465 = vmatpush2.bf16.msra.mxu0 0
      %466 = vmatprep.subr.bf16.mxu0 0
      %467 = vmatpush2.bf16.msra.mxu0 0
      %468 = vmatprep.subr.bf16.mxu0 0
      %469 = vmatpush2.bf16.msra.mxu0 0
      %470 = vmatprep.subr.bf16.mxu0 0
      %471 = vmatpush2.bf16.msra.mxu0 0
      %472 = vmatprep.subr.bf16.mxu0 0
      %473 = vmatpush2.bf16.msra.mxu0 0
      %474 = vmatprep.subr.bf16.mxu0 0
      %475 = vmatpush2.bf16.msra.mxu0 0
      %476 = vmatprep.subr.bf16.mxu0 0
      %477 = vmatpush2.bf16.msra.mxu0 0
      %478 = vmatprep.mubr.bf16.mxu0 0
      %479 = vmatmul.mubr.bf16.gmra.mxu0 %v310
      %v480 = vpop.f32.mrf.mxu0
      %v481 = vadd.f32 0.0, %v480
      %v482 = vpop.f32.mrf.mxu0
      %v483 = vadd.f32 0.0, %v482
      %v484 = vpop.f32.mrf.mxu0
      %v485 = vadd.f32 0.0, %v484
      %v486 = vpop.f32.mrf.mxu0
      %v487 = vadd.f32 0.0, %v486
      %488 = vmatprep.mubr.bf16.mxu0 0
      %489 = vmatmul.mubr.bf16.gmra.mxu0 %v313
      %v490 = vpop.f32.mrf.mxu0
      %v491 = vadd.f32 0.0, %v490
      %v492 = vpop.f32.mrf.mxu0
      %v493 = vadd.f32 0.0, %v492
      %v494 = vpop.f32.mrf.mxu0
      %v495 = vadd.f32 0.0, %v494
      %v496 = vpop.f32.mrf.mxu0
      %v497 = vadd.f32 0.0, %v496
      %498 = vdwg.mxu0
      %499 = vmatprep.subr.bf16.mxu0 0
      %500 = vmatpush1.bf16.msra.mxu0 0
      %501 = vmatprep.subr.bf16.mxu0 0
      %502 = vmatpush1.bf16.msra.mxu0 0
      %503 = vmatprep.subr.bf16.mxu0 0
      %504 = vmatpush1.bf16.msra.mxu0 0
      %505 = vmatprep.subr.bf16.mxu0 0
      %506 = vmatpush1.bf16.msra.mxu0 0
      %507 = vmatprep.subr.bf16.mxu0 0
      %508 = vmatpush1.bf16.msra.mxu0 0
      %509 = vmatprep.subr.bf16.mxu0 0
      %510 = vmatpush1.bf16.msra.mxu0 0
      %511 = vmatprep.subr.bf16.mxu0 0
      %512 = vmatpush1.bf16.msra.mxu0 0
      %513 = vmatprep.subr.bf16.mxu0 %v338
      %514 = vmatpush1.bf16.msra.mxu0 %v335
      %515 = vmatprep.subr.bf16.mxu0 0
      %516 = vmatpush2.bf16.msra.mxu0 0
      %517 = vmatprep.subr.bf16.mxu0 0
      %518 = vmatpush2.bf16.msra.mxu0 0
      %519 = vmatprep.subr.bf16.mxu0 0
      %520 = vmatpush2.bf16.msra.mxu0 0
      %521 = vmatprep.subr.bf16.mxu0 0
      %522 = vmatpush2.bf16.msra.mxu0 0
      %523 = vmatprep.subr.bf16.mxu0 0
      %524 = vmatpush2.bf16.msra.mxu0 0
      %525 = vmatprep.subr.bf16.mxu0 0
      %526 = vmatpush2.bf16.msra.mxu0 0
      %527 = vmatprep.subr.bf16.mxu0 0
      %528 = vmatpush2.bf16.msra.mxu0 0
      %529 = vmatprep.subr.bf16.mxu0 0
      %530 = vmatpush2.bf16.msra.mxu0 0
      %531 = vmatprep.mubr.bf16.mxu0 0
      %532 = vmatmul.mubr.bf16.gmra.mxu0 %v310
      %v533 = vpop.f32.mrf.mxu0
      %v534 = vadd.f32 0.0, %v533
      %v535 = vpop.f32.mrf.mxu0
      %v536 = vadd.f32 0.0, %v535
      %v537 = vpop.f32.mrf.mxu0
      %v538 = vadd.f32 0.0, %v537
      %v539 = vpop.f32.mrf.mxu0
      %v540 = vadd.f32 0.0, %v539
      %541 = vmatprep.mubr.bf16.mxu0 0
      %542 = vmatmul.mubr.bf16.gmra.mxu0 %v313
      %v543 = vpop.f32.mrf.mxu0
      %v544 = vadd.f32 0.0, %v543
      %v545 = vpop.f32.mrf.mxu0
      %v546 = vadd.f32 0.0, %v545
      %v547 = vpop.f32.mrf.mxu0
      %v548 = vadd.f32 0.0, %v547
      %v549 = vpop.f32.mrf.mxu0
      %v550 = vadd.f32 0.0, %v549
      %551 = vdwg.mxu0
      %552 = vst [vmem:[%s235] sm:$0xff] %v375
      %553 = vst [vmem:[%s235 + $0x8] sm:$0xff] %v377
      %554 = vst [vmem:[%s235 + $0x10] sm:$0xff] %v428
      %555 = vst [vmem:[%s235 + $0x18] sm:$0xff] %v430
      %556 = vst [vmem:[%s235 + $0x20] sm:$0xff] %v481
      %557 = vst [vmem:[%s235 + $0x28] sm:$0xff] %v483
      %558 = vst [vmem:[%s235 + $0x30] sm:$0xff] %v534
      %559 = vst [vmem:[%s235 + $0x38] sm:$0xff] %v536
      %560 = vst [vmem:[%s235 + $0x40] sm:$0xff] %v379
      %561 = vst [vmem:[%s235 + $0x48] sm:$0xff] %v381
      %562 = vst [vmem:[%s235 + $0x50] sm:$0xff] %v432
      %563 = vst [vmem:[%s235 + $0x58] sm:$0xff] %v434
      %564 = vst [vmem:[%s235 + $0x60] sm:$0xff] %v485
      %565 = vst [vmem:[%s235 + $0x68] sm:$0xff] %v487
      %566 = vst [vmem:[%s235 + $0x70] sm:$0xff] %v538
      %567 = vst [vmem:[%s235 + $0x78] sm:$0xff] %v540
      %568 = vst [vmem:[%s235 + $0x80] sm:$0xff] %v385
      %569 = vst [vmem:[%s235 + $0x88] sm:$0xff] %v387
      %570 = vst [vmem:[%s235 + $0x90] sm:$0xff] %v438
      %571 = vst [vmem:[%s235 + $0x98] sm:$0xff] %v440
      %572 = vst [vmem:[%s235 + $0xa0] sm:$0xff] %v491
      %573 = vst [vmem:[%s235 + $0xa8] sm:$0xff] %v493
      %574 = vst [vmem:[%s235 + $0xb0] sm:$0xff] %v544
      %575 = vst [vmem:[%s235 + $0xb8] sm:$0xff] %v546
      %576 = vst [vmem:[%s235 + $0xc0] sm:$0xff] %v389
      %577 = vst [vmem:[%s235 + $0xc8] sm:$0xff] %v391
      %578 = vst [vmem:[%s235 + $0xd0] sm:$0xff] %v442
      %579 = vst [vmem:[%s235 + $0xd8] sm:$0xff] %v444
      %580 = vst [vmem:[%s235 + $0xe0] sm:$0xff] %v495
      %581 = vst [vmem:[%s235 + $0xe8] sm:$0xff] %v497
      %582 = vst [vmem:[%s235 + $0xf0] sm:$0xff] %v548
      %583 = vst [vmem:[%s235 + $0xf8] sm:$0xff] %v550
      %s584 = smul.u32 8, %s20
      %p585 = scmp.lt.s32.totalorder %s19, 1
      %s586 = scalar_select %p585, %s19, 1
      %p587 = scmp.lt.s32.totalorder %s584, 7
      %s588 = scalar_select %p587, %s584, 7
      %s589 = smul.addr %s586, 32
      %s590 = sadd.s32 %s588, %s589
      %s591 = smul.addr %s590, 8
      %s592 = scalar_lea.vmem %s4, %s591
      // Predicated region
      $region37: #{pre_activation_bottleneck.5} parent=35 // pred_check
        %p593 = pneg %p138
      $region38: #{pre_activation_bottleneck.5} parent=35 // pred_check_branch
        %595 = sbr.rel (%p593) target = $region40
      $region39: #{pre_activation_bottleneck.5} parent=35 // pred_region
        %s596 = smul.u32 8, %s20
      $region40: #{pre_activation_bottleneck.5} parent=35 // pred_fallthru
        _
    $region36: #{pre_activation_bottleneck.5} parent=5 // pred_fallthru
      _
    %p597 = scmp.le.s32.totalorder 2, %s10
    // Predicated region
    $region41: #{pre_activation_bottleneck.5} parent=5 // pred_check
      %p598 = pneg %p597
    $region42: #{pre_activation_bottleneck.5} parent=5 // pred_check_branch
      %600 = sbr.rel (%p598) target = $region44
    $region43: #{pre_activation_bottleneck.5} parent=5 // pred_region
      %s601 = ssub.s32 %s10, 2
      // Predicated region
      $region45: #{pre_activation_bottleneck.5} parent=43 // pred_check
        %p602 = pneg %p144
      $region46: #{pre_activation_bottleneck.5} parent=43 // pred_check_branch
        %604 = sbr.rel (%p602) target = $region48
      $region47: #{pre_activation_bottleneck.5} parent=43 // pred_region
        %s605 = smul.u32 8, %s22
        %p606 = scmp.lt.s32.totalorder %s21, 1
        %s607 = scalar_select %p606, %s21, 1
        %p608 = scmp.lt.s32.totalorder %s605, 7
        %s609 = scalar_select %p608, %s605, 7
        %s610 = smul.addr %s607, 32
        %s611 = sadd.s32 %s609, %s610
        %s612 = smul.addr %s611, 8
        %s613 = scalar_lea.vmem %s4, %s612
      $region48: #{pre_activation_bottleneck.5} parent=43 // pred_fallthru
        _
    $region44: #{pre_activation_bottleneck.5} parent=5 // pred_fallthru
      _
  $region6: #{pre_activation_bottleneck.5} parent=0 // loop_footer
    %s14 = sadd.s32 1, %s10
  $region7: #{pre_activation_bottleneck.5} parent=0 // loop_footer_branch
    %9 = sbr.rel target = $region3
  $region8: #{pre_activation_bottleneck.5} parent=0 // loop_exit
    _

// kernel: pre_activation_bottleneck.4
$region0: #{pre_activation_bottleneck.4}
  #allocation0 [shape = 'u32[]', space=smem, size = 0x4, offset = 0x4, fixed_abs, tag = 'smem constant byte address 0x4 - core index']
  #allocation1 [shape = 'u32[144,128]{1,0:T(1,128)}', space=vmem, size = 0x12000, scoped, tag = 'internal scratch']
  %s0 = inlined_call_operand.vmem [shape: bf16[2,8,1536], index: 0, kind: input, shape index: {}]
  %s1 = inlined_call_operand.vmem [shape: f32[1,1536], index: 1, kind: input, shape index: {}]
  %s2 = inlined_call_operand.vmem [shape: f32[1,1024], index: 2, kind: input, shape index: {}]
  %s3 = inlined_call_operand.vmem [shape: f32[8,1], index: 3, kind: input, shape index: {}]
  %s4 = inlined_call_operand.vmem [shape: f32[8,1], index: 4, kind: input, shape index: {}]
  %s5 = inlined_call_operand.vmem [shape: bf16[8,216], index: 5, kind: input, shape index: {}]
  %s6 = inlined_call_operand.vmem [shape: bf16[2,8,1024], index: 6, kind: output, shape index: {0}]
  %s7 = inlined_call_operand.vmem [shape: f32[2,1,8,2], index: 7, kind: output, shape index: {1}]
  %8 = xla_tuple %s6, %s7
  %s9 = sld [smem:[#allocation0]]
  $region65: #{pre_activation_bottleneck.4} parent=0
    _
  %s11 = ssub.s32 1, %s9
  %s12 = scalar_select 0, %s11, %s9
  loop: start=0, step=1, limit=4
  $region2: #{pre_activation_bottleneck.4} parent=0 // loop_pre_header
    _
  $region3: #{pre_activation_bottleneck.4} parent=0 // loop_header
    %s14 = sphi 0, %s18
    %p15 = scmp.ge.s32.totalorder %s14, 4
    %s21 = sphi 0, %s33
    %s22 = sphi 0, %s29
    %s23 = sphi 0, %s21
    %s24 = sphi 0, %s22
    %s25 = sphi 0, %s23
    %s26 = sphi 0, %s24
    %s36 = sphi 0, %s38
    %s39 = sphi 0, %s36
    %s40 = sphi 0, %s39
    %s56 = sphi 0, %s40
    %s60 = sphi 0, %s60
    %s62 = sphi 0, %s60
    %s63 = sphi 0, %s62
    %s77 = sphi 0, %s63
    %s81 = sphi 0, %s81
    %s83 = sphi 0, %s81
    %s84 = sphi 0, %s83
    %s98 = sphi 0, %s84
    %s102 = sphi 0, %s102
    %s104 = sphi 0, %s102
    %s105 = sphi 0, %s104
    %s119 = sphi 0, %s105
    %s123 = sphi 0, %s123
    %s125 = sphi 0, %s123
    %s126 = sphi 0, %s125
    %s140 = sphi 0, %s126
    %s144 = sphi 0, %s144
    %s146 = sphi 0, %s144
    %s147 = sphi 0, %s146
    %s161 = sphi 0, %s147
    %s169 = sphi 0, %s171
    %s172 = sphi 0, %s169
    %s173 = sphi 0, %s172
    %s189 = sphi 0, %s173
    %s197 = sphi 0, %s199
    %s200 = sphi 0, %s197
    %s201 = sphi 0, %s200
    %s217 = sphi 0, %s201
  $region4: #{pre_activation_bottleneck.4} parent=0 // loop_header_branch
    %17 = sbr.rel (%p15) target = $region8
  $region5: #{pre_activation_bottleneck.4} parent=0 // loop_body
    %s19 = ssub.s32 %s14, 1
    %s20 = ssub.s32 %s14, 2
    %s27 = sadd.s32 1, %s22
    %p28 = scmp.ge.s32.totalorder %s27, 1
    %s29 = scalar_select %p28, 0, %s27
    %s30 = sadd.s32 1, %s21
    %s31 = scalar_select %p28, %s30, %s21
    %p32 = scmp.ge.s32.totalorder %s31, 2
    %s33 = scalar_select %p32, 0, %s31
    %s34 = ssub.s32 %s21, %s33
    %p35 = scmp.eq.s32.totalorder %s34, 0
    %s37 = sadd.s32 %s36, 1
    %s38 = scalar_select %p35, %s36, %s37
    %p41 = pneg %p35
    %p42 = scmp.eq.s32.totalorder %s14, 1
    %p43 = por %p41, %p42
    %p44 = scmp.ne.s32.totalorder %s36, %s39
    %p45 = scmp.eq.s32.totalorder %s14, 0
    %p46 = por %p44, %p45
    %p47 = scmp.ne.s32.totalorder %s36, %s39
    %p48 = scmp.eq.s32.totalorder %s19, 1
    %p49 = por %p47, %p48
    %p50 = scmp.ne.s32.totalorder %s39, %s40
    %p51 = scmp.eq.s32.totalorder %s19, 0
    %p52 = por %p50, %p51
    %p53 = scmp.ne.s32.totalorder %s39, %s40
    %p54 = scmp.eq.s32.totalorder %s20, 1
    %p55 = por %p53, %p54
    %p57 = scmp.ne.s32.totalorder %s40, %s56
    %p58 = scmp.eq.s32.totalorder %s20, 0
    %p59 = por %p57, %p58
    %s61 = sadd.s32 %s60, 1
    %p64 = scmp.eq.s32.totalorder %s14, 1
    %p65 = scmp.ne.s32.totalorder %s60, %s62
    %p66 = scmp.eq.s32.totalorder %s14, 0
    %p67 = por %p65, %p66
    %p68 = scmp.ne.s32.totalorder %s60, %s62
    %p69 = scmp.eq.s32.totalorder %s19, 1
    %p70 = por %p68, %p69
    %p71 = scmp.ne.s32.totalorder %s62, %s63
    %p72 = scmp.eq.s32.totalorder %s19, 0
    %p73 = por %p71, %p72
    %p74 = scmp.ne.s32.totalorder %s62, %s63
    %p75 = scmp.eq.s32.totalorder %s20, 1
    %p76 = por %p74, %p75
    %p78 = scmp.ne.s32.totalorder %s63, %s77
    %p79 = scmp.eq.s32.totalorder %s20, 0
    %p80 = por %p78, %p79
    %s82 = sadd.s32 %s81, 1
    %p85 = scmp.eq.s32.totalorder %s14, 1
    %p86 = scmp.ne.s32.totalorder %s81, %s83
    %p87 = scmp.eq.s32.totalorder %s14, 0
    %p88 = por %p86, %p87
    %p89 = scmp.ne.s32.totalorder %s81, %s83
    %p90 = scmp.eq.s32.totalorder %s19, 1
    %p91 = por %p89, %p90
    %p92 = scmp.ne.s32.totalorder %s83, %s84
    %p93 = scmp.eq.s32.totalorder %s19, 0
    %p94 = por %p92, %p93
    %p95 = scmp.ne.s32.totalorder %s83, %s84
    %p96 = scmp.eq.s32.totalorder %s20, 1
    %p97 = por %p95, %p96
    %p99 = scmp.ne.s32.totalorder %s84, %s98
    %p100 = scmp.eq.s32.totalorder %s20, 0
    %p101 = por %p99, %p100
    %s103 = sadd.s32 %s102, 1
    %p106 = scmp.eq.s32.totalorder %s14, 1
    %p107 = scmp.ne.s32.totalorder %s102, %s104
    %p108 = scmp.eq.s32.totalorder %s14, 0
    %p109 = por %p107, %p108
    %p110 = scmp.ne.s32.totalorder %s102, %s104
    %p111 = scmp.eq.s32.totalorder %s19, 1
    %p112 = por %p110, %p111
    %p113 = scmp.ne.s32.totalorder %s104, %s105
    %p114 = scmp.eq.s32.totalorder %s19, 0
    %p115 = por %p113, %p114
    %p116 = scmp.ne.s32.totalorder %s104, %s105
    %p117 = scmp.eq.s32.totalorder %s20, 1
    %p118 = por %p116, %p117
    %p120 = scmp.ne.s32.totalorder %s105, %s119
    %p121 = scmp.eq.s32.totalorder %s20, 0
    %p122 = por %p120, %p121
    %s124 = sadd.s32 %s123, 1
    %p127 = scmp.eq.s32.totalorder %s14, 1
    %p128 = scmp.ne.s32.totalorder %s123, %s125
    %p129 = scmp.eq.s32.totalorder %s14, 0
    %p130 = por %p128, %p129
    %p131 = scmp.ne.s32.totalorder %s123, %s125
    %p132 = scmp.eq.s32.totalorder %s19, 1
    %p133 = por %p131, %p132
    %p134 = scmp.ne.s32.totalorder %s125, %s126
    %p135 = scmp.eq.s32.totalorder %s19, 0
    %p136 = por %p134, %p135
    %p137 = scmp.ne.s32.totalorder %s125, %s126
    %p138 = scmp.eq.s32.totalorder %s20, 1
    %p139 = por %p137, %p138
    %p141 = scmp.ne.s32.totalorder %s126, %s140
    %p142 = scmp.eq.s32.totalorder %s20, 0
    %p143 = por %p141, %p142
    %s145 = sadd.s32 %s144, 1
    %p148 = scmp.eq.s32.totalorder %s14, 1
    %p149 = scmp.ne.s32.totalorder %s144, %s146
    %p150 = scmp.eq.s32.totalorder %s14, 0
    %p151 = por %p149, %p150
    %p152 = scmp.ne.s32.totalorder %s144, %s146
    %p153 = scmp.eq.s32.totalorder %s19, 1
    %p154 = por %p152, %p153
    %p155 = scmp.ne.s32.totalorder %s146, %s147
    %p156 = scmp.eq.s32.totalorder %s19, 0
    %p157 = por %p155, %p156
    %p158 = scmp.ne.s32.totalorder %s146, %s147
    %p159 = scmp.eq.s32.totalorder %s20, 1
    %p160 = por %p158, %p159
    %p162 = scmp.ne.s32.totalorder %s147, %s161
    %p163 = scmp.eq.s32.totalorder %s20, 0
    %p164 = por %p162, %p163
    %s165 = ssub.s32 %s21, %s33
    %s166 = ssub.s32 %s22, %s29
    %s167 = sor.u32 %s165, %s166
    %p168 = scmp.eq.s32.totalorder %s167, 0
    %s170 = sadd.s32 %s169, 1
    %s171 = scalar_select %p168, %s169, %s170
    %p174 = pneg %p168
    %p175 = scmp.eq.s32.totalorder %s14, 1
    %p176 = por %p174, %p175
    %p177 = scmp.ne.s32.totalorder %s169, %s172
    %p178 = scmp.eq.s32.totalorder %s14, 0
    %p179 = por %p177, %p178
    %p180 = scmp.ne.s32.totalorder %s169, %s172
    %p181 = scmp.eq.s32.totalorder %s19, 1
    %p182 = por %p180, %p181
    %p183 = scmp.ne.s32.totalorder %s172, %s173
    %p184 = scmp.eq.s32.totalorder %s19, 0
    %p185 = por %p183, %p184
    %p186 = scmp.ne.s32.totalorder %s172, %s173
    %p187 = scmp.eq.s32.totalorder %s20, 1
    %p188 = por %p186, %p187
    %p190 = scmp.ne.s32.totalorder %s173, %s189
    %p191 = scmp.eq.s32.totalorder %s20, 0
    %p192 = por %p190, %p191
    %s193 = ssub.s32 %s21, %s33
    %s194 = ssub.s32 %s22, %s29
    %s195 = sor.u32 %s193, %s194
    %p196 = scmp.eq.s32.totalorder %s195, 0
    %s198 = sadd.s32 %s197, 1
    %s199 = scalar_select %p196, %s197, %s198
    %p202 = pneg %p196
    %p203 = scmp.eq.s32.totalorder %s14, 1
    %p204 = por %p202, %p203
    %p205 = scmp.ne.s32.totalorder %s197, %s200
    %p206 = scmp.eq.s32.totalorder %s14, 0
    %p207 = por %p205, %p206
    %p208 = scmp.ne.s32.totalorder %s197, %s200
    %p209 = scmp.eq.s32.totalorder %s19, 1
    %p210 = por %p208, %p209
    %p211 = scmp.ne.s32.totalorder %s200, %s201
    %p212 = scmp.eq.s32.totalorder %s19, 0
    %p213 = por %p211, %p212
    %p214 = scmp.ne.s32.totalorder %s200, %s201
    %p215 = scmp.eq.s32.totalorder %s20, 1
    %p216 = por %p214, %p215
    %p218 = scmp.ne.s32.totalorder %s201, %s217
    %p219 = scmp.eq.s32.totalorder %s20, 0
    %p220 = por %p218, %p219
    %p221 = scmp.le.s32.totalorder 1, %s14
    %p222 = scmp.lt.s32.totalorder %s14, 3
    %p223 = pnand %p221, %p222
    %p224 = pneg %p223
    // Predicated region
    $region9: #{pre_activation_bottleneck.4} parent=5 // pred_check
      _
    $region10: #{pre_activation_bottleneck.4} parent=5 // pred_check_branch
      %226 = sbr.rel (%p223) target = $region12
    $region11: #{pre_activation_bottleneck.4} parent=5 // pred_region
      %s227 = ssub.s32 %s14, 1
      // Predicated region
      $region13: #{pre_activation_bottleneck.4} parent=11 // pred_check
        %p228 = pneg %p73
      $region14: #{pre_activation_bottleneck.4} parent=11 // pred_check_branch
        %230 = sbr.rel (%p228) target = $region16
      $region15: #{pre_activation_bottleneck.4} parent=11 // pred_region
        _
      $region16: #{pre_activation_bottleneck.4} parent=11 // pred_fallthru
        _
      // Predicated region
      $region17: #{pre_activation_bottleneck.4} parent=11 // pred_check
        %p231 = pneg %p94
      $region18: #{pre_activation_bottleneck.4} parent=11 // pred_check_branch
        %233 = sbr.rel (%p231) target = $region20
      $region19: #{pre_activation_bottleneck.4} parent=11 // pred_region
        _
      $region20: #{pre_activation_bottleneck.4} parent=11 // pred_fallthru
        _
      // Predicated region
      $region21: #{pre_activation_bottleneck.4} parent=11 // pred_check
        %p234 = pneg %p115
      $region22: #{pre_activation_bottleneck.4} parent=11 // pred_check_branch
        %236 = sbr.rel (%p234) target = $region24
      $region23: #{pre_activation_bottleneck.4} parent=11 // pred_region
        _
      $region24: #{pre_activation_bottleneck.4} parent=11 // pred_fallthru
        _
      // Predicated region
      $region25: #{pre_activation_bottleneck.4} parent=11 // pred_check
        %p237 = pneg %p136
      $region26: #{pre_activation_bottleneck.4} parent=11 // pred_check_branch
        %239 = sbr.rel (%p237) target = $region28
      $region27: #{pre_activation_bottleneck.4} parent=11 // pred_region
        _
      $region28: #{pre_activation_bottleneck.4} parent=11 // pred_fallthru
        _
      // Predicated region
      $region29: #{pre_activation_bottleneck.4} parent=11 // pred_check
        %p240 = pneg %p157
      $region30: #{pre_activation_bottleneck.4} parent=11 // pred_check_branch
        %242 = sbr.rel (%p240) target = $region32
      $region31: #{pre_activation_bottleneck.4} parent=11 // pred_region
        _
      $region32: #{pre_activation_bottleneck.4} parent=11 // pred_fallthru
        _
    $region12: #{pre_activation_bottleneck.4} parent=5 // pred_fallthru
      _
    %p243 = scmp.lt.s32.totalorder %s14, 2
    // Predicated region
    $region33: #{pre_activation_bottleneck.4} parent=5 // pred_check
      %p244 = pneg %p243
    $region34: #{pre_activation_bottleneck.4} parent=5 // pred_check_branch
      %246 = sbr.rel (%p244) target = $region36
    $region35: #{pre_activation_bottleneck.4} parent=5 // pred_region
      // Predicated region
      $region37: #{pre_activation_bottleneck.4} parent=35 // pred_check
        %p247 = pneg %p46
      $region38: #{pre_activation_bottleneck.4} parent=35 // pred_check_branch
        %249 = sbr.rel (%p247) target = $region40
      $region39: #{pre_activation_bottleneck.4} parent=35 // pred_region
        %p250 = scmp.lt.s32.totalorder %s21, 1
        %s251 = scalar_select %p250, %s21, 1
        %s252 = smul.addr %s251, 12
        %s253 = smul.addr %s252, 4
        %s254 = scalar_lea.vmem %s0, %s253
      $region40: #{pre_activation_bottleneck.4} parent=35 // pred_fallthru
        _
    $region36: #{pre_activation_bottleneck.4} parent=5 // pred_fallthru
      _
    %p255 = scmp.le.s32.totalorder 1, %s14
    %p256 = scmp.lt.s32.totalorder %s14, 3
    %p257 = pnand %p255, %p256
    %p258 = pneg %p257
    // Predicated region
    $region41: #{pre_activation_bottleneck.4} parent=5 // pred_check
      _
    $region42: #{pre_activation_bottleneck.4} parent=5 // pred_check_branch
      %260 = sbr.rel (%p257) target = $region44
    $region43: #{pre_activation_bottleneck.4} parent=5 // pred_region
      %s261 = ssub.s32 %s14, 1
      %p262 = scmp.lt.s32.totalorder %s23, 1
      %s263 = scalar_select %p262, %s23, 1
      %s264 = smul.addr %s263, 12
      %s265 = smul.addr %s264, 4
      %s266 = scalar_lea.vmem %s0, %s265
      %p267 = pneg %p52
      %p268 = pneg %p49
      %p269 = pneg %p73
      %p270 = pneg %p70
      %p271 = pneg %p94
      %p272 = pneg %p91
      %p273 = pneg %p115
      %p274 = pneg %p112
      %p275 = pneg %p136
      %p276 = pneg %p133
      %p277 = pneg %p157
      %p278 = pneg %p154
      %p279 = pneg %p185
      %p280 = pneg %p182
      %s281 = smul.u32 8, %s24
      %p282 = scmp.lt.s32.totalorder %s23, 1
      %s283 = scalar_select %p282, %s23, 1
      %p284 = scmp.lt.s32.totalorder %s281, 7
      %s285 = scalar_select %p284, %s281, 7
      %s286 = smul.addr %s283, 8
      %s287 = sadd.s32 %s285, %s286
      %s288 = smul.addr %s287, 4
      %s289 = scalar_lea.vmem %s6, %s288
      %p290 = pneg %p213
      %p291 = pneg %p210
      %p292 = scmp.lt.s32.totalorder %s23, 1
      %s293 = scalar_select %p292, %s23, 1
      %p294 = scmp.lt.s32.totalorder %s24, 0
      %s295 = scalar_select %p294, %s24, 0
      %s296 = sadd.s32 %s295, %s293
      %s297 = smul.addr %s296, 8
      %s298 = scalar_lea.vmem %s7, %s297
      %p299 = scmp.lt.s32.totalorder %s23, 1
      %s300 = scalar_select %p299, %s23, 1
      %s301 = smul.addr %s300, 12
      %s302 = smul.addr %s301, 4
      %s303 = scalar_lea.vmem %s0, %s302
      %s304 = smul.u32 8, %s24
      %p305 = scmp.lt.s32.totalorder %s23, 1
      %s306 = scalar_select %p305, %s23, 1
      %p307 = scmp.lt.s32.totalorder %s304, 7
      %s308 = scalar_select %p307, %s304, 7
      %s309 = smul.addr %s306, 8
      %s310 = sadd.s32 %s308, %s309
      %s311 = smul.addr %s310, 4
      %s312 = scalar_lea.vmem %s6, %s311
      %s313 = smul.u32 8, %s24
      %p314 = scmp.lt.s32.totalorder %s23, 1
      %s315 = scalar_select %p314, %s23, 1
      %p316 = scmp.lt.s32.totalorder %s24, 0
      %s317 = scalar_select %p316, %s24, 0
      %s318 = sadd.s32 %s317, %s315
      %s319 = smul.addr %s318, 8
      %s320 = scalar_lea.vmem %s7, %s319
      %s322 = smul.u32 %s24, 1024
      %s323 = sshra.s32 %s322, 7
      %s324 = sand.u32 %s322, 127
      %s325 = smul.addr %s323, 4
      %s326 = scalar_lea.vmem %s303, %s325
      %v327 = vld [vmem:[%s326] sm:$0xff]
      %v328 = vld [vmem:[%s326 + $0x8] sm:$0xff]
      %v329 = vld [vmem:[%s326 + $0x10] sm:$0xff]
      %v330 = vld [vmem:[%s326 + $0x18] sm:$0xff]
      %v331 = vld [vmem:[%s326 + $0x20] sm:$0xff]
      %v332 = vld [vmem:[%s326 + $0x28] sm:$0xff]
      %v333 = vunpack.c.l.bf16 %v327
      %v334 = vunpack.c.h.bf16 %v327
      %v335 = vunpack.c.l.bf16 %v328
      %v336 = vunpack.c.h.bf16 %v328
      %v337 = vunpack.c.l.bf16 %v329
      %v338 = vunpack.c.h.bf16 %v329
      %v339 = vunpack.c.l.bf16 %v330
      %v340 = vunpack.c.h.bf16 %v330
      %v341 = vunpack.c.l.bf16 %v331
      %v342 = vunpack.c.h.bf16 %v331
      %v343 = vunpack.c.l.bf16 %v332
      %v344 = vunpack.c.h.bf16 %v332
      %s345 = scalar_lea.vmem %s1, %s323
      %v346 = vld [vmem:[%s345] sm:$0xff]
      %v347 = vld [vmem:[%s345 + $0x8] sm:$0xf]
      %v348 = vld [vmem:[%s3] sm:$0xff]
      %350 = vset.pattern.permute.xlu0 0
      %351 = vperm.xlu0 %350, %v348
      %v352 = vpop.permute.xlu0 %351
      %v354 = vmul.f32 %v333, %v352
      %v355 = vmul.f32 %v334, %v352
      %v356 = vmul.f32 %v335, %v352
      %v357 = vmul.f32 %v336, %v352
      %v358 = vmul.f32 %v337, %v352
      %v359 = vmul.f32 %v338, %v352
      %v360 = vmul.f32 %v339, %v352
      %v361 = vmul.f32 %v340, %v352
      %v362 = vmul.f32 %v341, %v352
      %v363 = vmul.f32 %v342, %v352
      %v364 = vmul.f32 %v343, %v352
      %v365 = vmul.f32 %v344, %v352
      %v366 = vld [vmem:[%s4] sm:$0xff]
      %368 = vset.pattern.permute.xlu0 0
      %369 = vperm.xlu0 %368, %v366
      %v370 = vpop.permute.xlu0 %369
      %v372 = vadd.f32 %v354, %v370
      %v373 = vadd.f32 %v355, %v370
      %v374 = vadd.f32 %v356, %v370
      %v375 = vadd.f32 %v357, %v370
      %v376 = vadd.f32 %v358, %v370
      %v377 = vadd.f32 %v359, %v370
      %v378 = vadd.f32 %v360, %v370
      %v379 = vadd.f32 %v361, %v370
      %v380 = vadd.f32 %v362, %v370
      %v381 = vadd.f32 %v363, %v370
      %v382 = vadd.f32 %v364, %v370
      %v383 = vadd.f32 %v365, %v370
      %v384 = vmax.f32 %v372, 0.0
      %v385 = vmax.f32 %v373, 0.0
      %v386 = vmax.f32 %v374, 0.0
      %v387 = vmax.f32 %v375, 0.0
      %v388 = vmax.f32 %v376, 0.0
      %v389 = vmax.f32 %v377, 0.0
      %v390 = vmax.f32 %v378, 0.0
      %v391 = vmax.f32 %v379, 0.0
      %v392 = vmax.f32 %v380, 0.0
      %v393 = vmax.f32 %v381, 0.0
      %v394 = vmax.f32 %v382, 0.0
      %v395 = vmax.f32 %v383, 0.0
      %v398 = vlaneseq
      %v399 = vshrl.u32 %v398, 7
      %v400 = vsub.s32 0, %v399
      %v401 = vrot.slane %v346, %v400
      %v402 = vlaneseq
      %v403 = vshrl.u32 %v402, 7
      %v404 = vsub.s32 1, %v403
      %v405 = vrot.slane %v346, %v404
      %v406 = vlaneseq
      %v407 = vshrl.u32 %v406, 7
      %v408 = vsub.s32 2, %v407
      %v409 = vrot.slane %v346, %v408
      %v410 = vlaneseq
      %v411 = vshrl.u32 %v410, 7
      %v412 = vsub.s32 3, %v411
      %v413 = vrot.slane %v346, %v412
      %v414 = vlaneseq
      %v415 = vshrl.u32 %v414, 7
      %v416 = vsub.s32 4, %v415
      %v417 = vrot.slane %v346, %v416
      %v418 = vlaneseq
      %v419 = vshrl.u32 %v418, 7
      %v420 = vsub.s32 5, %v419
      %v421 = vrot.slane %v346, %v420
      %v422 = vlaneseq
      %v423 = vshrl.u32 %v422, 7
      %v424 = vsub.s32 6, %v423
      %v425 = vrot.slane %v346, %v424
      %v426 = vlaneseq
      %v427 = vshrl.u32 %v426, 7
      %v428 = vsub.s32 7, %v427
      %v429 = vrot.slane %v346, %v428
      %v430 = vlaneseq
      %v431 = vshrl.u32 %v430, 7
      %v432 = vsub.s32 0, %v431
      %v433 = vrot.slane %v347, %v432
      %v434 = vlaneseq
      %v435 = vshrl.u32 %v434, 7
      %v436 = vsub.s32 1, %v435
      %v437 = vrot.slane %v347, %v436
      %v438 = vlaneseq
      %v439 = vshrl.u32 %v438, 7
      %v440 = vsub.s32 2, %v439
      %v441 = vrot.slane %v347, %v440
      %v442 = vlaneseq
      %v443 = vshrl.u32 %v442, 7
      %v444 = vsub.s32 3, %v443
      %v445 = vrot.slane %v347, %v444
      %v458 = vmul.f32 %v384, %v401
      %v459 = vmul.f32 %v385, %v405
      %v460 = vmul.f32 %v386, %v409
      %v461 = vmul.f32 %v387, %v413
      %v462 = vmul.f32 %v388, %v417
      %v463 = vmul.f32 %v389, %v421
      %v464 = vmul.f32 %v390, %v425
      %v465 = vmul.f32 %v391, %v429
      %v466 = vmul.f32 %v392, %v433
      %v467 = vmul.f32 %v393, %v437
      %v468 = vmul.f32 %v394, %v441
      %v469 = vmul.f32 %v395, %v445
      %v470 = vpack.c.bf16 %v458, %v458
      %v471 = vpack.c.bf16 %v459, %v459
      %v472 = vpack.c.bf16 %v460, %v460
      %v473 = vpack.c.bf16 %v461, %v461
      %v474 = vpack.c.bf16 %v462, %v462
      %v475 = vpack.c.bf16 %v463, %v463
      %v476 = vpack.c.bf16 %v464, %v464
      %v477 = vpack.c.bf16 %v465, %v465
      %v478 = vpack.c.bf16 %v466, %v466
      %v479 = vpack.c.bf16 %v467, %v467
      %v480 = vpack.c.bf16 %v468, %v468
      %v481 = vpack.c.bf16 %v469, %v469
      %v491 = vrot.slane %v470, 4
      %v492 = vrot.slane %v471, 4
      %v493 = vrot.slane %v472, 4
      %v494 = vrot.slane %v473, 4
      %v495 = vrot.slane %v474, 4
      %v496 = vrot.slane %v475, 4
      %v497 = vrot.slane %v476, 4
      %v498 = vrot.slane %v477, 4
      %v499 = vrot.slane %v478, 4
      %500 = vrot.lane.b32.xlu0 %v491, 127
      %v501 = vpop.permute.xlu0 %500
      %502 = vrot.lane.b32.xlu0 %v492, 127
      %v503 = vpop.permute.xlu0 %502
      %504 = vrot.lane.b32.xlu0 %v493, 127
      %v505 = vpop.permute.xlu0 %504
      %506 = vrot.lane.b32.xlu0 %v494, 127
      %v507 = vpop.permute.xlu0 %506
      %508 = vrot.lane.b32.xlu0 %v495, 127
      %v509 = vpop.permute.xlu0 %508
      %510 = vrot.lane.b32.xlu0 %v496, 127
      %v511 = vpop.permute.xlu0 %510
      %512 = vrot.lane.b32.xlu0 %v497, 127
      %v513 = vpop.permute.xlu0 %512
      %514 = vrot.lane.b32.xlu0 %v498, 127
      %v515 = vpop.permute.xlu0 %514
      %516 = vrot.lane.b32.xlu0 %v499, 127
      %v517 = vpop.permute.xlu0 %516
      %vm518 = vcmask 1039360
      %v519 = vsel %vm518, %v501, %v503
      %v520 = vsel %vm518, %v503, %v505
      %v521 = vsel %vm518, %v505, %v507
      %v522 = vsel %vm518, %v507, %v509
      %v523 = vsel %vm518, %v509, %v511
      %v524 = vsel %vm518, %v511, %v513
      %v525 = vsel %vm518, %v513, %v515
      %v526 = vsel %vm518, %v515, %v517
      %527 = vrot.lane.b32.xlu0 %v470, 126
      %v528 = vpop.permute.xlu0 %527
      %529 = vrot.lane.b32.xlu0 %v471, 126
      %v530 = vpop.permute.xlu0 %529
      %531 = vrot.lane.b32.xlu0 %v472, 126
      %v532 = vpop.permute.xlu0 %531
      %533 = vrot.lane.b32.xlu0 %v473, 126
      %v534 = vpop.permute.xlu0 %533
      %535 = vrot.lane.b32.xlu0 %v474, 126
      %v536 = vpop.permute.xlu0 %535
      %537 = vrot.lane.b32.xlu0 %v475, 126
      %v538 = vpop.permute.xlu0 %537
      %539 = vrot.lane.b32.xlu0 %v476, 126
      %v540 = vpop.permute.xlu0 %539
      %541 = vrot.lane.b32.xlu0 %v477, 126
      %v542 = vpop.permute.xlu0 %541
      %543 = vrot.lane.b32.xlu0 %v478, 126
      %v544 = vpop.permute.xlu0 %543
      %vm545 = vcmask 1031168
      %v546 = vsel %vm545, %v528, %v530
      %v547 = vsel %vm545, %v530, %v532
      %v548 = vsel %vm545, %v532, %v534
      %v549 = vsel %vm545, %v534, %v536
      %v550 = vsel %vm545, %v536, %v538
      %v551 = vsel %vm545, %v538, %v540
      %v552 = vsel %vm545, %v540, %v542
      %v553 = vsel %vm545, %v542, %v544
      %554 = vrot.lane.b32.xlu0 %v491, 118
      %v555 = vpop.permute.xlu0 %554
      %556 = vrot.lane.b32.xlu0 %v492, 118
      %v557 = vpop.permute.xlu0 %556
      %558 = vrot.lane.b32.xlu0 %v493, 118
      %v559 = vpop.permute.xlu0 %558
      %560 = vrot.lane.b32.xlu0 %v494, 118
      %v561 = vpop.permute.xlu0 %560
      %562 = vrot.lane.b32.xlu0 %v495, 118
      %v563 = vpop.permute.xlu0 %562
      %564 = vrot.lane.b32.xlu0 %v496, 118
      %v565 = vpop.permute.xlu0 %564
      %566 = vrot.lane.b32.xlu0 %v497, 118
      %v567 = vpop.permute.xlu0 %566
      %568 = vrot.lane.b32.xlu0 %v498, 118
      %v569 = vpop.permute.xlu0 %568
      %570 = vrot.lane.b32.xlu0 %v499, 118
      %v571 = vpop.permute.xlu0 %570
      %vm572 = vcmask 965632
      %v573 = vsel %vm572, %v555, %v557
      %v574 = vsel %vm572, %v557, %v559
      %v575 = vsel %vm572, %v559, %v561
      %v576 = vsel %vm572, %v561, %v563
      %v577 = vsel %vm572, %v563, %v565
      %v578 = vsel %vm572, %v565, %v567
      %v579 = vsel %vm572, %v567, %v569
      %v580 = vsel %vm572, %v569, %v571
      %581 = vrot.lane.b32.xlu0 %v471, 117
      %v582 = vpop.permute.xlu0 %581
      %583 = vrot.lane.b32.xlu0 %v472, 117
      %v584 = vpop.permute.xlu0 %583
      %585 = vrot.lane.b32.xlu0 %v473, 117
      %v586 = vpop.permute.xlu0 %585
      %587 = vrot.lane.b32.xlu0 %v474, 117
      %v588 = vpop.permute.xlu0 %587
      %589 = vrot.lane.b32.xlu0 %v475, 117
      %v590 = vpop.permute.xlu0 %589
      %591 = vrot.lane.b32.xlu0 %v476, 117
      %v592 = vpop.permute.xlu0 %591
      %593 = vrot.lane.b32.xlu0 %v477, 117
      %v594 = vpop.permute.xlu0 %593
      %595 = vrot.lane.b32.xlu0 %v478, 117
      %v596 = vpop.permute.xlu0 %595
      %vm597 = vcmask 957440
      %v598 = vsel %vm597, %v582, %v584
      %v599 = vsel %vm597, %v584, %v586
      %v600 = vsel %vm597, %v586, %v588
      %v601 = vsel %vm597, %v588, %v590
      %v602 = vsel %vm597, %v590, %v592
      %v603 = vsel %vm597, %v592, %v594
      %v604 = vsel %vm597, %v594, %v596
      %v606 = vrot.slane %v479, 4
      %607 = vrot.lane.b32.xlu0 %v492, 116
      %v608 = vpop.permute.xlu0 %607
      %609 = vrot.lane.b32.xlu0 %v493, 116
      %v610 = vpop.permute.xlu0 %609
      %611 = vrot.lane.b32.xlu0 %v494, 116
      %v612 = vpop.permute.xlu0 %611
      %613 = vrot.lane.b32.xlu0 %v495, 116
      %v614 = vpop.permute.xlu0 %613
      %615 = vrot.lane.b32.xlu0 %v496, 116
      %v616 = vpop.permute.xlu0 %615
      %617 = vrot.lane.b32.xlu0 %v497, 116
      %v618 = vpop.permute.xlu0 %617
      %619 = vrot.lane.b32.xlu0 %v498, 116
      %v620 = vpop.permute.xlu0 %619
      %621 = vrot.lane.b32.xlu0 %v499, 116
      %v622 = vpop.permute.xlu0 %621
      %623 = vrot.lane.b32.xlu0 %v606, 116
      %v624 = vpop.permute.xlu0 %623
      %vm625 = vcmask 949248
      %v626 = vsel %vm625, %v608, %v610
      %v627 = vsel %vm625, %v610, %v612
      %v628 = vsel %vm625, %v612, %v614
      %v629 = vsel %vm625, %v614, %v616
      %v630 = vsel %vm625, %v616, %v618
      %v631 = vsel %vm625, %v618, %v620
      %v632 = vsel %vm625, %v620, %v622
      %v633 = vsel %vm625, %v622, %v624
      %634 = vrot.lane.b32.xlu0 %v471, 108
      %v635 = vpop.permute.xlu0 %634
      %636 = vrot.lane.b32.xlu0 %v472, 108
      %v637 = vpop.permute.xlu0 %636
      %638 = vrot.lane.b32.xlu0 %v473, 108
      %v639 = vpop.permute.xlu0 %638
      %640 = vrot.lane.b32.xlu0 %v474, 108
      %v641 = vpop.permute.xlu0 %640
      %642 = vrot.lane.b32.xlu0 %v475, 108
      %v643 = vpop.permute.xlu0 %642
      %644 = vrot.lane.b32.xlu0 %v476, 108
      %v645 = vpop.permute.xlu0 %644
      %646 = vrot.lane.b32.xlu0 %v477, 108
      %v647 = vpop.permute.xlu0 %646
      %648 = vrot.lane.b32.xlu0 %v478, 108
      %v649 = vpop.permute.xlu0 %648
      %650 = vrot.lane.b32.xlu0 %v479, 108
      %v651 = vpop.permute.xlu0 %650
      %vm652 = vcmask 883712
      %v653 = vsel %vm652, %v635, %v637
      %v654 = vsel %vm652, %v637, %v639
      %v655 = vsel %vm652, %v639, %v641
      %v656 = vsel %vm652, %v641, %v643
      %v657 = vsel %vm652, %v643, %v645
      %v658 = vsel %vm652, %v645, %v647
      %v659 = vsel %vm652, %v647, %v649
      %v660 = vsel %vm652, %v649, %v651
      %661 = vrot.lane.b32.xlu0 %v492, 107
      %v662 = vpop.permute.xlu0 %661
      %663 = vrot.lane.b32.xlu0 %v493, 107
      %v664 = vpop.permute.xlu0 %663
      %665 = vrot.lane.b32.xlu0 %v494, 107
      %v666 = vpop.permute.xlu0 %665
      %667 = vrot.lane.b32.xlu0 %v495, 107
      %v668 = vpop.permute.xlu0 %667
      %669 = vrot.lane.b32.xlu0 %v496, 107
      %v670 = vpop.permute.xlu0 %669
      %671 = vrot.lane.b32.xlu0 %v497, 107
      %v672 = vpop.permute.xlu0 %671
      %673 = vrot.lane.b32.xlu0 %v498, 107
      %v674 = vpop.permute.xlu0 %673
      %675 = vrot.lane.b32.xlu0 %v499, 107
      %v676 = vpop.permute.xlu0 %675
      %677 = vrot.lane.b32.xlu0 %v606, 107
      %v678 = vpop.permute.xlu0 %677
      %vm679 = vcmask 875520
      %v680 = vsel %vm679, %v662, %v664
      %v681 = vsel %vm679, %v664, %v666
      %v682 = vsel %vm679, %v666, %v668
      %v683 = vsel %vm679, %v668, %v670
      %v684 = vsel %vm679, %v670, %v672
      %v685 = vsel %vm679, %v672, %v674
      %v686 = vsel %vm679, %v674, %v676
      %v687 = vsel %vm679, %v676, %v678
      %688 = vrot.lane.b32.xlu0 %v471, 106
      %v689 = vpop.permute.xlu0 %688
      %690 = vrot.lane.b32.xlu0 %v472, 106
      %v691 = vpop.permute.xlu0 %690
      %692 = vrot.lane.b32.xlu0 %v473, 106
      %v693 = vpop.permute.xlu0 %692
      %694 = vrot.lane.b32.xlu0 %v474, 106
      %v695 = vpop.permute.xlu0 %694
      %696 = vrot.lane.b32.xlu0 %v475, 106
      %v697 = vpop.permute.xlu0 %696
      %698 = vrot.lane.b32.xlu0 %v476, 106
      %v699 = vpop.permute.xlu0 %698
      %700 = vrot.lane.b32.xlu0 %v477, 106
      %v701 = vpop.permute.xlu0 %700
      %702 = vrot.lane.b32.xlu0 %v478, 106
      %v703 = vpop.permute.xlu0 %702
      %704 = vrot.lane.b32.xlu0 %v479, 106
      %v705 = vpop.permute.xlu0 %704
      %vm706 = vcmask 867328
      %v707 = vsel %vm706, %v689, %v691
      %v708 = vsel %vm706, %v691, %v693
      %v709 = vsel %vm706, %v693, %v695
      %v710 = vsel %vm706, %v695, %v697
      %v711 = vsel %vm706, %v697, %v699
      %v712 = vsel %vm706, %v699, %v701
      %v713 = vsel %vm706, %v701, %v703
      %v714 = vsel %vm706, %v703, %v705
      %715 = vrot.lane.b32.xlu0 %v471, 127
      %v716 = vpop.permute.xlu0 %715
      %717 = vrot.lane.b32.xlu0 %v472, 127
      %v718 = vpop.permute.xlu0 %717
      %719 = vrot.lane.b32.xlu0 %v473, 127
      %v720 = vpop.permute.xlu0 %719
      %721 = vrot.lane.b32.xlu0 %v474, 127
      %v722 = vpop.permute.xlu0 %721
      %723 = vrot.lane.b32.xlu0 %v475, 127
      %v724 = vpop.permute.xlu0 %723
      %725 = vrot.lane.b32.xlu0 %v476, 127
      %v726 = vpop.permute.xlu0 %725
      %727 = vrot.lane.b32.xlu0 %v477, 127
      %v728 = vpop.permute.xlu0 %727
      %729 = vrot.lane.b32.xlu0 %v478, 127
      %v730 = vpop.permute.xlu0 %729
      %731 = vrot.lane.b32.xlu0 %v479, 127
      %v732 = vpop.permute.xlu0 %731
      %v733 = vsel %vm518, %v716, %v718
      %v734 = vsel %vm518, %v718, %v720
      %v735 = vsel %vm518, %v720, %v722
      %v736 = vsel %vm518, %v722, %v724
      %v737 = vsel %vm518, %v724, %v726
      %v738 = vsel %vm518, %v726, %v728
      %v739 = vsel %vm518, %v728, %v730
      %v740 = vsel %vm518, %v730, %v732
      %741 = vrot.lane.b32.xlu0 %v492, 126
      %v742 = vpop.permute.xlu0 %741
      %743 = vrot.lane.b32.xlu0 %v493, 126
      %v744 = vpop.permute.xlu0 %743
      %745 = vrot.lane.b32.xlu0 %v494, 126
      %v746 = vpop.permute.xlu0 %745
      %747 = vrot.lane.b32.xlu0 %v495, 126
      %v748 = vpop.permute.xlu0 %747
      %749 = vrot.lane.b32.xlu0 %v496, 126
      %v750 = vpop.permute.xlu0 %749
      %751 = vrot.lane.b32.xlu0 %v497, 126
      %v752 = vpop.permute.xlu0 %751
      %753 = vrot.lane.b32.xlu0 %v498, 126
      %v754 = vpop.permute.xlu0 %753
      %755 = vrot.lane.b32.xlu0 %v499, 126
      %v756 = vpop.permute.xlu0 %755
      %757 = vrot.lane.b32.xlu0 %v606, 126
      %v758 = vpop.permute.xlu0 %757
      %v759 = vsel %vm545, %v742, %v744
      %v760 = vsel %vm545, %v744, %v746
      %v761 = vsel %vm545, %v746, %v748
      %v762 = vsel %vm545, %v748, %v750
      %v763 = vsel %vm545, %v750, %v752
      %v764 = vsel %vm545, %v752, %v754
      %v765 = vsel %vm545, %v754, %v756
      %v766 = vsel %vm545, %v756, %v758
      %767 = vrot.lane.b32.xlu0 %v471, 118
      %v768 = vpop.permute.xlu0 %767
      %769 = vrot.lane.b32.xlu0 %v472, 118
      %v770 = vpop.permute.xlu0 %769
      %771 = vrot.lane.b32.xlu0 %v473, 118
      %v772 = vpop.permute.xlu0 %771
      %773 = vrot.lane.b32.xlu0 %v474, 118
      %v774 = vpop.permute.xlu0 %773
      %775 = vrot.lane.b32.xlu0 %v475, 118
      %v776 = vpop.permute.xlu0 %775
      %777 = vrot.lane.b32.xlu0 %v476, 118
      %v778 = vpop.permute.xlu0 %777
      %779 = vrot.lane.b32.xlu0 %v477, 118
      %v780 = vpop.permute.xlu0 %779
      %781 = vrot.lane.b32.xlu0 %v478, 118
      %v782 = vpop.permute.xlu0 %781
      %783 = vrot.lane.b32.xlu0 %v479, 118
      %v784 = vpop.permute.xlu0 %783
      %v785 = vsel %vm572, %v768, %v770
      %v786 = vsel %vm572, %v770, %v772
      %v787 = vsel %vm572, %v772, %v774
      %v788 = vsel %vm572, %v774, %v776
      %v789 = vsel %vm572, %v776, %v778
      %v790 = vsel %vm572, %v778, %v780
      %v791 = vsel %vm572, %v780, %v782
      %v792 = vsel %vm572, %v782, %v784
      %793 = vrot.lane.b32.xlu0 %v493, 117
      %v794 = vpop.permute.xlu0 %793
      %795 = vrot.lane.b32.xlu0 %v494, 117
      %v796 = vpop.permute.xlu0 %795
      %797 = vrot.lane.b32.xlu0 %v495, 117
      %v798 = vpop.permute.xlu0 %797
      %799 = vrot.lane.b32.xlu0 %v496, 117
      %v800 = vpop.permute.xlu0 %799
      %801 = vrot.lane.b32.xlu0 %v497, 117
      %v802 = vpop.permute.xlu0 %801
      %803 = vrot.lane.b32.xlu0 %v498, 117
      %v804 = vpop.permute.xlu0 %803
      %805 = vrot.lane.b32.xlu0 %v499, 117
      %v806 = vpop.permute.xlu0 %805
      %807 = vrot.lane.b32.xlu0 %v606, 117
      %v808 = vpop.permute.xlu0 %807
      %v809 = vsel %vm597, %v794, %v796
      %v810 = vsel %vm597, %v796, %v798
      %v811 = vsel %vm597, %v798, %v800
      %v812 = vsel %vm597, %v800, %v802
      %v813 = vsel %vm597, %v802, %v804
      %v814 = vsel %vm597, %v804, %v806
      %v815 = vsel %vm597, %v806, %v808
      %817 = vrot.lane.b32.xlu0 %v472, 116
      %v818 = vpop.permute.xlu0 %817
      %819 = vrot.lane.b32.xlu0 %v473, 116
      %v820 = vpop.permute.xlu0 %819
      %821 = vrot.lane.b32.xlu0 %v474, 116
      %v822 = vpop.permute.xlu0 %821
      %823 = vrot.lane.b32.xlu0 %v475, 116
      %v824 = vpop.permute.xlu0 %823
      %825 = vrot.lane.b32.xlu0 %v476, 116
      %v826 = vpop.permute.xlu0 %825
      %827 = vrot.lane.b32.xlu0 %v477, 116
      %v828 = vpop.permute.xlu0 %827
      %829 = vrot.lane.b32.xlu0 %v478, 116
      %v830 = vpop.permute.xlu0 %829
      %831 = vrot.lane.b32.xlu0 %v479, 116
      %v832 = vpop.permute.xlu0 %831
      %833 = vrot.lane.b32.xlu0 %v480, 116
      %v834 = vpop.permute.xlu0 %833
      %v835 = vsel %vm625, %v818, %v820
      %v836 = vsel %vm625, %v820, %v822
      %v837 = vsel %vm625, %v822, %v824
      %v838 = vsel %vm625, %v824, %v826
      %v839 = vsel %vm625, %v826, %v828
      %v840 = vsel %vm625, %v828, %v830
      %v841 = vsel %vm625, %v830, %v832
      %v842 = vsel %vm625, %v832, %v834
      %v843 = vrot.slane %v480, 4
      %844 = vrot.lane.b32.xlu0 %v493, 108
      %v845 = vpop.permute.xlu0 %844
      %846 = vrot.lane.b32.xlu0 %v494, 108
      %v847 = vpop.permute.xlu0 %846
      %848 = vrot.lane.b32.xlu0 %v495, 108
      %v849 = vpop.permute.xlu0 %848
      %850 = vrot.lane.b32.xlu0 %v496, 108
      %v851 = vpop.permute.xlu0 %850
      %852 = vrot.lane.b32.xlu0 %v497, 108
      %v853 = vpop.permute.xlu0 %852
      %854 = vrot.lane.b32.xlu0 %v498, 108
      %v855 = vpop.permute.xlu0 %854
      %856 = vrot.lane.b32.xlu0 %v499, 108
      %v857 = vpop.permute.xlu0 %856
      %858 = vrot.lane.b32.xlu0 %v606, 108
      %v859 = vpop.permute.xlu0 %858
      %860 = vrot.lane.b32.xlu0 %v843, 108
      %v861 = vpop.permute.xlu0 %860
      %v862 = vsel %vm652, %v845, %v847
      %v863 = vsel %vm652, %v847, %v849
      %v864 = vsel %vm652, %v849, %v851
      %v865 = vsel %vm652, %v851, %v853
      %v866 = vsel %vm652, %v853, %v855
      %v867 = vsel %vm652, %v855, %v857
      %v868 = vsel %vm652, %v857, %v859
      %v869 = vsel %vm652, %v859, %v861
      %vm870 = vcmask 1043456
      %v873 = vsel %vm870, %v470, %v519
      %v876 = vsel %vm870, %v471, %v520
      %v879 = vsel %vm870, %v472, %v521
      %v882 = vsel %vm870, %v473, %v522
      %v885 = vsel %vm870, %v474, %v523
      %v888 = vsel %vm870, %v475, %v524
      %v891 = vsel %vm870, %v476, %v525
      %v894 = vsel %vm870, %v477, %v526
      %v897 = vsel %vm870, %v478, %v517
      %v900 = vsel %vm870, %v546, %v573
      %v903 = vsel %vm870, %v547, %v574
      %v906 = vsel %vm870, %v548, %v575
      %v909 = vsel %vm870, %v549, %v576
      %v912 = vsel %vm870, %v550, %v577
      %v915 = vsel %vm870, %v551, %v578
      %v918 = vsel %vm870, %v552, %v579
      %v921 = vsel %vm870, %v553, %v580
      %v924 = vsel %vm870, %v544, %v571
      %v927 = vsel %vm870, %v582, %v608
      %v930 = vsel %vm870, %v598, %v626
      %v933 = vsel %vm870, %v599, %v627
      %v936 = vsel %vm870, %v600, %v628
      %v939 = vsel %vm870, %v601, %v629
      %v942 = vsel %vm870, %v602, %v630
      %v945 = vsel %vm870, %v603, %v631
      %v948 = vsel %vm870, %v604, %v632
      %v951 = vsel %vm870, %v596, %v633
      %v954 = vsel %vm870, %v635, %v662
      %v957 = vsel %vm870, %v653, %v680
      %v960 = vsel %vm870, %v654, %v681
      %v963 = vsel %vm870, %v655, %v682
      %v966 = vsel %vm870, %v656, %v683
      %v969 = vsel %vm870, %v657, %v684
      %v972 = vsel %vm870, %v658, %v685
      %v975 = vsel %vm870, %v659, %v686
      %v978 = vsel %vm870, %v660, %v687
      %v981 = vsel %vm870, %v689, %v492
      %v984 = vsel %vm870, %v707, %v493
      %v987 = vsel %vm870, %v708, %v494
      %v990 = vsel %vm870, %v709, %v495
      %v993 = vsel %vm870, %v710, %v496
      %v996 = vsel %vm870, %v711, %v497
      %v999 = vsel %vm870, %v712, %v498
      %v1002 = vsel %vm870, %v713, %v499
      %v1005 = vsel %vm870, %v714, %v606
      %v1008 = vsel %vm870, %v733, %v759
      %v1011 = vsel %vm870, %v734, %v760
      %v1014 = vsel %vm870, %v735, %v761
      %v1017 = vsel %vm870, %v736, %v762
      %v1020 = vsel %vm870, %v737, %v763
      %v1023 = vsel %vm870, %v738, %v764
      %v1026 = vsel %vm870, %v739, %v765
      %v1029 = vsel %vm870, %v740, %v766
      %v1032 = vsel %vm870, %v732, %v758
      %v1035 = vsel %vm870, %v785, %v794
      %v1038 = vsel %vm870, %v786, %v809
      %v1041 = vsel %vm870, %v787, %v810
      %v1044 = vsel %vm870, %v788, %v811
      %v1047 = vsel %vm870, %v789, %v812
      %v1050 = vsel %vm870, %v790, %v813
      %v1053 = vsel %vm870, %v791, %v814
      %v1056 = vsel %vm870, %v792, %v815
      %v1059 = vsel %vm870, %v784, %v808
      %v1062 = vsel %vm870, %v818, %v845
      %v1065 = vsel %vm870, %v835, %v862
      %v1068 = vsel %vm870, %v836, %v863
      %v1071 = vsel %vm870, %v837, %v864
      %v1074 = vsel %vm870, %v838, %v865
      %v1077 = vsel %vm870, %v839, %v866
      %v1080 = vsel %vm870, %v840, %v867
      %v1083 = vsel %vm870, %v841, %v868
      %v1086 = vsel %vm870, %v842, %v869
      %1087 = vrot.lane.b32.xlu0 %v606, 127
      %v1088 = vpop.permute.xlu0 %1087
      %1089 = vrot.lane.b32.xlu0 %v843, 127
      %v1090 = vpop.permute.xlu0 %1089
      %v1091 = vsel %vm518, %v517, %v1088
      %v1092 = vsel %vm518, %v1088, %v1090
      %1093 = vrot.lane.b32.xlu0 %v472, 21
      %v1094 = vpop.permute.xlu0 %1093
      %1095 = vrot.lane.b32.xlu0 %v473, 21
      %v1096 = vpop.permute.xlu0 %1095
      %1097 = vrot.lane.b32.xlu0 %v474, 21
      %v1098 = vpop.permute.xlu0 %1097
      %1099 = vrot.lane.b32.xlu0 %v475, 21
      %v1100 = vpop.permute.xlu0 %1099
      %1101 = vrot.lane.b32.xlu0 %v476, 21
      %v1102 = vpop.permute.xlu0 %1101
      %1103 = vrot.lane.b32.xlu0 %v477, 21
      %v1104 = vpop.permute.xlu0 %1103
      %1105 = vrot.lane.b32.xlu0 %v478, 21
      %v1106 = vpop.permute.xlu0 %1105
      %1107 = vrot.lane.b32.xlu0 %v479, 21
      %v1108 = vpop.permute.xlu0 %1107
      %1109 = vrot.lane.b32.xlu0 %v480, 21
      %v1110 = vpop.permute.xlu0 %1109
      %vm1111 = vcmask 171008
      %v1112 = vsel %vm1111, %v1094, %v1096
      %v1113 = vsel %vm1111, %v1096, %v1098
      %v1114 = vsel %vm1111, %v1098, %v1100
      %v1115 = vsel %vm1111, %v1100, %v1102
      %v1116 = vsel %vm1111, %v1102, %v1104
      %v1117 = vsel %vm1111, %v1104, %v1106
      %v1118 = vsel %vm1111, %v1106, %v1108
      %v1119 = vsel %vm1111, %v1108, %v1110
      %1120 = vrot.lane.b32.xlu0 %v493, 20
      %v1121 = vpop.permute.xlu0 %1120
      %1122 = vrot.lane.b32.xlu0 %v494, 20
      %v1123 = vpop.permute.xlu0 %1122
      %1124 = vrot.lane.b32.xlu0 %v495, 20
      %v1125 = vpop.permute.xlu0 %1124
      %1126 = vrot.lane.b32.xlu0 %v496, 20
      %v1127 = vpop.permute.xlu0 %1126
      %1128 = vrot.lane.b32.xlu0 %v497, 20
      %v1129 = vpop.permute.xlu0 %1128
      %1130 = vrot.lane.b32.xlu0 %v498, 20
      %v1131 = vpop.permute.xlu0 %1130
      %1132 = vrot.lane.b32.xlu0 %v499, 20
      %v1133 = vpop.permute.xlu0 %1132
      %1134 = vrot.lane.b32.xlu0 %v606, 20
      %v1135 = vpop.permute.xlu0 %1134
      %1136 = vrot.lane.b32.xlu0 %v843, 20
      %v1137 = vpop.permute.xlu0 %1136
      %vm1138 = vcmask 162816
      %v1139 = vsel %vm1138, %v1121, %v1123
      %v1140 = vsel %vm1138, %v1123, %v1125
      %v1141 = vsel %vm1138, %v1125, %v1127
      %v1142 = vsel %vm1138, %v1127, %v1129
      %v1143 = vsel %vm1138, %v1129, %v1131
      %v1144 = vsel %vm1138, %v1131, %v1133
      %v1145 = vsel %vm1138, %v1133, %v1135
      %v1146 = vsel %vm1138, %v1135, %v1137
      %1147 = vrot.lane.b32.xlu0 %v472, 19
      %v1148 = vpop.permute.xlu0 %1147
      %1149 = vrot.lane.b32.xlu0 %v473, 19
      %v1150 = vpop.permute.xlu0 %1149
      %1151 = vrot.lane.b32.xlu0 %v474, 19
      %v1152 = vpop.permute.xlu0 %1151
      %1153 = vrot.lane.b32.xlu0 %v475, 19
      %v1154 = vpop.permute.xlu0 %1153
      %1155 = vrot.lane.b32.xlu0 %v476, 19
      %v1156 = vpop.permute.xlu0 %1155
      %1157 = vrot.lane.b32.xlu0 %v477, 19
      %v1158 = vpop.permute.xlu0 %1157
      %1159 = vrot.lane.b32.xlu0 %v478, 19
      %v1160 = vpop.permute.xlu0 %1159
      %1161 = vrot.lane.b32.xlu0 %v479, 19
      %v1162 = vpop.permute.xlu0 %1161
      %1163 = vrot.lane.b32.xlu0 %v480, 19
      %v1164 = vpop.permute.xlu0 %1163
      %vm1165 = vcmask 154624
      %v1166 = vsel %vm1165, %v1148, %v1150
      %v1167 = vsel %vm1165, %v1150, %v1152
      %v1168 = vsel %vm1165, %v1152, %v1154
      %v1169 = vsel %vm1165, %v1154, %v1156
      %v1170 = vsel %vm1165, %v1156, %v1158
      %v1171 = vsel %vm1165, %v1158, %v1160
      %v1172 = vsel %vm1165, %v1160, %v1162
      %v1173 = vsel %vm1165, %v1162, %v1164
      %1174 = vrot.lane.b32.xlu0 %v493, 11
      %v1175 = vpop.permute.xlu0 %1174
      %1176 = vrot.lane.b32.xlu0 %v494, 11
      %v1177 = vpop.permute.xlu0 %1176
      %1178 = vrot.lane.b32.xlu0 %v495, 11
      %v1179 = vpop.permute.xlu0 %1178
      %1180 = vrot.lane.b32.xlu0 %v496, 11
      %v1181 = vpop.permute.xlu0 %1180
      %1182 = vrot.lane.b32.xlu0 %v497, 11
      %v1183 = vpop.permute.xlu0 %1182
      %1184 = vrot.lane.b32.xlu0 %v498, 11
      %v1185 = vpop.permute.xlu0 %1184
      %1186 = vrot.lane.b32.xlu0 %v499, 11
      %v1187 = vpop.permute.xlu0 %1186
      %1188 = vrot.lane.b32.xlu0 %v606, 11
      %v1189 = vpop.permute.xlu0 %1188
      %1190 = vrot.lane.b32.xlu0 %v843, 11
      %v1191 = vpop.permute.xlu0 %1190
      %vm1192 = vcmask 89088
      %v1193 = vsel %vm1192, %v1175, %v1177
      %v1194 = vsel %vm1192, %v1177, %v1179
      %v1195 = vsel %vm1192, %v1179, %v1181
      %v1196 = vsel %vm1192, %v1181, %v1183
      %v1197 = vsel %vm1192, %v1183, %v1185
      %v1198 = vsel %vm1192, %v1185, %v1187
      %v1199 = vsel %vm1192, %v1187, %v1189
      %v1200 = vsel %vm1192, %v1189, %v1191
      %1201 = vrot.lane.b32.xlu0 %v473, 10
      %v1202 = vpop.permute.xlu0 %1201
      %1203 = vrot.lane.b32.xlu0 %v474, 10
      %v1204 = vpop.permute.xlu0 %1203
      %1205 = vrot.lane.b32.xlu0 %v475, 10
      %v1206 = vpop.permute.xlu0 %1205
      %1207 = vrot.lane.b32.xlu0 %v476, 10
      %v1208 = vpop.permute.xlu0 %1207
      %1209 = vrot.lane.b32.xlu0 %v477, 10
      %v1210 = vpop.permute.xlu0 %1209
      %1211 = vrot.lane.b32.xlu0 %v478, 10
      %v1212 = vpop.permute.xlu0 %1211
      %1213 = vrot.lane.b32.xlu0 %v479, 10
      %v1214 = vpop.permute.xlu0 %1213
      %1215 = vrot.lane.b32.xlu0 %v480, 10
      %v1216 = vpop.permute.xlu0 %1215
      %vm1217 = vcmask 80896
      %v1218 = vsel %vm1217, %v1202, %v1204
      %v1219 = vsel %vm1217, %v1204, %v1206
      %v1220 = vsel %vm1217, %v1206, %v1208
      %v1221 = vsel %vm1217, %v1208, %v1210
      %v1222 = vsel %vm1217, %v1210, %v1212
      %v1223 = vsel %vm1217, %v1212, %v1214
      %v1224 = vsel %vm1217, %v1214, %v1216
      %v1226 = vrot.slane %v481, 4
      %1227 = vrot.lane.b32.xlu0 %v494, 9
      %v1228 = vpop.permute.xlu0 %1227
      %1229 = vrot.lane.b32.xlu0 %v495, 9
      %v1230 = vpop.permute.xlu0 %1229
      %1231 = vrot.lane.b32.xlu0 %v496, 9
      %v1232 = vpop.permute.xlu0 %1231
      %1233 = vrot.lane.b32.xlu0 %v497, 9
      %v1234 = vpop.permute.xlu0 %1233
      %1235 = vrot.lane.b32.xlu0 %v498, 9
      %v1236 = vpop.permute.xlu0 %1235
      %1237 = vrot.lane.b32.xlu0 %v499, 9
      %v1238 = vpop.permute.xlu0 %1237
      %1239 = vrot.lane.b32.xlu0 %v606, 9
      %v1240 = vpop.permute.xlu0 %1239
      %1241 = vrot.lane.b32.xlu0 %v843, 9
      %v1242 = vpop.permute.xlu0 %1241
      %1243 = vrot.lane.b32.xlu0 %v1226, 9
      %v1244 = vpop.permute.xlu0 %1243
      %vm1245 = vcmask 72704
      %v1246 = vsel %vm1245, %v1228, %v1230
      %v1247 = vsel %vm1245, %v1230, %v1232
      %v1248 = vsel %vm1245, %v1232, %v1234
      %v1249 = vsel %vm1245, %v1234, %v1236
      %v1250 = vsel %vm1245, %v1236, %v1238
      %v1251 = vsel %vm1245, %v1238, %v1240
      %v1252 = vsel %vm1245, %v1240, %v1242
      %v1253 = vsel %vm1245, %v1242, %v1244
      %1254 = vrot.lane.b32.xlu0 %v473, 1
      %v1255 = vpop.permute.xlu0 %1254
      %1256 = vrot.lane.b32.xlu0 %v474, 1
      %v1257 = vpop.permute.xlu0 %1256
      %1258 = vrot.lane.b32.xlu0 %v475, 1
      %v1259 = vpop.permute.xlu0 %1258
      %1260 = vrot.lane.b32.xlu0 %v476, 1
      %v1261 = vpop.permute.xlu0 %1260
      %1262 = vrot.lane.b32.xlu0 %v477, 1
      %v1263 = vpop.permute.xlu0 %1262
      %1264 = vrot.lane.b32.xlu0 %v478, 1
      %v1265 = vpop.permute.xlu0 %1264
      %1266 = vrot.lane.b32.xlu0 %v479, 1
      %v1267 = vpop.permute.xlu0 %1266
      %1268 = vrot.lane.b32.xlu0 %v480, 1
      %v1269 = vpop.permute.xlu0 %1268
      %1270 = vrot.lane.b32.xlu0 %v481, 1
      %v1271 = vpop.permute.xlu0 %1270
      %vm1272 = vcmask 7168
      %v1273 = vsel %vm1272, %v1255, %v1257
      %v1274 = vsel %vm1272, %v1257, %v1259
      %v1275 = vsel %vm1272, %v1259, %v1261
      %v1276 = vsel %vm1272, %v1261, %v1263
      %v1277 = vsel %vm1272, %v1263, %v1265
      %v1278 = vsel %vm1272, %v1265, %v1267
      %v1279 = vsel %vm1272, %v1267, %v1269
      %v1280 = vsel %vm1272, %v1269, %v1271
      %1281 = vrot.lane.b32.xlu0 %v480, 127
      %v1282 = vpop.permute.xlu0 %1281
      %1283 = vrot.lane.b32.xlu0 %v481, 127
      %v1284 = vpop.permute.xlu0 %1283
      %v1285 = vsel %vm518, %v732, %v1282
      %v1286 = vsel %vm518, %v1282, %v1284
      %v1288 = vsel %vm870, %v478, %v1091
      %v1291 = vsel %vm870, %v479, %v1092
      %v1294 = vsel %vm870, %v480, %v1090
      %v1297 = vsel %vm870, %v1112, %v1139
      %v1300 = vsel %vm870, %v1113, %v1140
      %v1303 = vsel %vm870, %v1114, %v1141
      %v1306 = vsel %vm870, %v1115, %v1142
      %v1309 = vsel %vm870, %v1116, %v1143
      %v1312 = vsel %vm870, %v1117, %v1144
      %v1315 = vsel %vm870, %v1118, %v1145
      %v1318 = vsel %vm870, %v1119, %v1146
      %v1321 = vsel %vm870, %v1110, %v1137
      %v1324 = vsel %vm870, %v1166, %v1193
      %v1327 = vsel %vm870, %v1167, %v1194
      %v1330 = vsel %vm870, %v1168, %v1195
      %v1333 = vsel %vm870, %v1169, %v1196
      %v1336 = vsel %vm870, %v1170, %v1197
      %v1339 = vsel %vm870, %v1171, %v1198
      %v1342 = vsel %vm870, %v1172, %v1199
      %v1345 = vsel %vm870, %v1173, %v1200
      %v1348 = vsel %vm870, %v1164, %v1191
      %v1351 = vsel %vm870, %v1202, %v1228
      %v1354 = vsel %vm870, %v1218, %v1246
      %v1357 = vsel %vm870, %v1219, %v1247
      %v1360 = vsel %vm870, %v1220, %v1248
      %v1363 = vsel %vm870, %v1221, %v1249
      %v1366 = vsel %vm870, %v1222, %v1250
      %v1369 = vsel %vm870, %v1223, %v1251
      %v1372 = vsel %vm870, %v1224, %v1252
      %v1375 = vsel %vm870, %v1216, %v1253
      %v1377 = vsel %vm870, %v1255, %v494
      %v1379 = vsel %vm870, %v1273, %v495
      %v1381 = vsel %vm870, %v1274, %v496
      %v1383 = vsel %vm870, %v1275, %v497
      %v1385 = vsel %vm870, %v1276, %v498
      %v1387 = vsel %vm870, %v1277, %v499
      %v1389 = vsel %vm870, %v1278, %v606
      %v1392 = vsel %vm870, %v1279, %v843
      %v1395 = vsel %vm870, %v1280, %v1226
      %1441 = vrot.lane.b32.xlu0 %v879, 107
      %v1442 = vpop.permute.xlu0 %1441
      %1443 = vrot.lane.b32.xlu0 %v882, 107
      %v1444 = vpop.permute.xlu0 %1443
      %1445 = vrot.lane.b32.xlu0 %v885, 107
      %v1446 = vpop.permute.xlu0 %1445
      %1447 = vrot.lane.b32.xlu0 %v888, 107
      %v1448 = vpop.permute.xlu0 %1447
      %1449 = vrot.lane.b32.xlu0 %v891, 107
      %v1450 = vpop.permute.xlu0 %1449
      %1451 = vrot.lane.b32.xlu0 %v894, 107
      %v1452 = vpop.permute.xlu0 %1451
      %1453 = vrot.lane.b32.xlu0 %v1288, 107
      %v1454 = vpop.permute.xlu0 %1453
      %1455 = vrot.lane.b32.xlu0 %v1291, 107
      %v1456 = vpop.permute.xlu0 %1455
      %1457 = vrot.lane.b32.xlu0 %v1294, 107
      %v1458 = vpop.permute.xlu0 %1457
      %1459 = vrot.lane.b32.xlu0 %v1297, 107
      %v1460 = vpop.permute.xlu0 %1459
      %1461 = vrot.lane.b32.xlu0 %v1300, 107
      %v1462 = vpop.permute.xlu0 %1461
      %1463 = vrot.lane.b32.xlu0 %v1303, 107
      %v1464 = vpop.permute.xlu0 %1463
      %1465 = vrot.lane.b32.xlu0 %v1306, 107
      %v1466 = vpop.permute.xlu0 %1465
      %1467 = vrot.lane.b32.xlu0 %v1309, 107
      %v1468 = vpop.permute.xlu0 %1467
      %1469 = vrot.lane.b32.xlu0 %v1312, 107
      %v1470 = vpop.permute.xlu0 %1469
      %1471 = vrot.lane.b32.xlu0 %v1315, 107
      %v1472 = vpop.permute.xlu0 %1471
      %1473 = vrot.lane.b32.xlu0 %v1318, 107
      %v1474 = vpop.permute.xlu0 %1473
      %1475 = vrot.lane.b32.xlu0 %v1321, 107
      %v1476 = vpop.permute.xlu0 %1475
      %1477 = vrot.lane.b32.xlu0 %v1324, 107
      %v1478 = vpop.permute.xlu0 %1477
      %1479 = vrot.lane.b32.xlu0 %v1327, 107
      %v1480 = vpop.permute.xlu0 %1479
      %1481 = vrot.lane.b32.xlu0 %v1330, 107
      %v1482 = vpop.permute.xlu0 %1481
      %1483 = vrot.lane.b32.xlu0 %v1333, 107
      %v1484 = vpop.permute.xlu0 %1483
      %1485 = vrot.lane.b32.xlu0 %v1336, 107
      %v1486 = vpop.permute.xlu0 %1485
      %1487 = vrot.lane.b32.xlu0 %v1339, 107
      %v1488 = vpop.permute.xlu0 %1487
      %1489 = vrot.lane.b32.xlu0 %v1342, 107
      %v1490 = vpop.permute.xlu0 %1489
      %1491 = vrot.lane.b32.xlu0 %v1345, 107
      %v1492 = vpop.permute.xlu0 %1491
      %1493 = vrot.lane.b32.xlu0 %v1348, 107
      %v1494 = vpop.permute.xlu0 %1493
      %1495 = vrot.lane.b32.xlu0 %v1351, 107
      %v1496 = vpop.permute.xlu0 %1495
      %1497 = vrot.lane.b32.xlu0 %v1354, 107
      %v1498 = vpop.permute.xlu0 %1497
      %1499 = vrot.lane.b32.xlu0 %v1357, 107
      %v1500 = vpop.permute.xlu0 %1499
      %1501 = vrot.lane.b32.xlu0 %v1360, 107
      %v1502 = vpop.permute.xlu0 %1501
      %1503 = vrot.lane.b32.xlu0 %v1363, 107
      %v1504 = vpop.permute.xlu0 %1503
      %1505 = vrot.lane.b32.xlu0 %v1366, 107
      %v1506 = vpop.permute.xlu0 %1505
      %1507 = vrot.lane.b32.xlu0 %v1369, 107
      %v1508 = vpop.permute.xlu0 %1507
      %1509 = vrot.lane.b32.xlu0 %v1372, 107
      %v1510 = vpop.permute.xlu0 %1509
      %1511 = vrot.lane.b32.xlu0 %v1375, 107
      %v1512 = vpop.permute.xlu0 %1511
      %1513 = vrot.lane.b32.xlu0 %v1377, 107
      %v1514 = vpop.permute.xlu0 %1513
      %1515 = vrot.lane.b32.xlu0 %v1379, 107
      %v1516 = vpop.permute.xlu0 %1515
      %1517 = vrot.lane.b32.xlu0 %v1381, 107
      %v1518 = vpop.permute.xlu0 %1517
      %1519 = vrot.lane.b32.xlu0 %v1383, 107
      %v1520 = vpop.permute.xlu0 %1519
      %1521 = vrot.lane.b32.xlu0 %v1385, 107
      %v1522 = vpop.permute.xlu0 %1521
      %1523 = vrot.lane.b32.xlu0 %v1387, 107
      %v1524 = vpop.permute.xlu0 %1523
      %1525 = vrot.lane.b32.xlu0 %v1389, 107
      %v1526 = vpop.permute.xlu0 %1525
      %1527 = vrot.lane.b32.xlu0 %v1392, 107
      %v1528 = vpop.permute.xlu0 %1527
      %1529 = vrot.lane.b32.xlu0 %v1395, 107
      %v1530 = vpop.permute.xlu0 %1529
      %1531 = vrot.lane.b32.xlu0 %v735, 107
      %v1532 = vpop.permute.xlu0 %1531
      %1533 = vrot.lane.b32.xlu0 %v736, 107
      %v1534 = vpop.permute.xlu0 %1533
      %1535 = vrot.lane.b32.xlu0 %v737, 107
      %v1536 = vpop.permute.xlu0 %1535
      %1537 = vrot.lane.b32.xlu0 %v738, 107
      %v1538 = vpop.permute.xlu0 %1537
      %1539 = vrot.lane.b32.xlu0 %v739, 107
      %v1540 = vpop.permute.xlu0 %1539
      %1541 = vrot.lane.b32.xlu0 %v740, 107
      %v1542 = vpop.permute.xlu0 %1541
      %1543 = vrot.lane.b32.xlu0 %v1285, 107
      %v1544 = vpop.permute.xlu0 %1543
      %1545 = vrot.lane.b32.xlu0 %v1286, 107
      %v1546 = vpop.permute.xlu0 %1545
      %1547 = vrot.lane.b32.xlu0 %v1284, 107
      %v1548 = vpop.permute.xlu0 %1547
      %v1549 = vsel %vm679, %v1442, %v1444
      %v1550 = vsel %vm679, %v1444, %v1446
      %v1551 = vsel %vm679, %v1446, %v1448
      %v1552 = vsel %vm679, %v1448, %v1450
      %v1553 = vsel %vm679, %v1450, %v1452
      %v1554 = vsel %vm679, %v1452, %v1454
      %v1555 = vsel %vm679, %v1454, %v1456
      %v1556 = vsel %vm679, %v1456, %v1458
      %v1557 = vsel %vm679, %v1460, %v1462
      %v1558 = vsel %vm679, %v1462, %v1464
      %v1559 = vsel %vm679, %v1464, %v1466
      %v1560 = vsel %vm679, %v1466, %v1468
      %v1561 = vsel %vm679, %v1468, %v1470
      %v1562 = vsel %vm679, %v1470, %v1472
      %v1563 = vsel %vm679, %v1472, %v1474
      %v1564 = vsel %vm679, %v1474, %v1476
      %v1565 = vsel %vm679, %v1478, %v1480
      %v1566 = vsel %vm679, %v1480, %v1482
      %v1567 = vsel %vm679, %v1482, %v1484
      %v1568 = vsel %vm679, %v1484, %v1486
      %v1569 = vsel %vm679, %v1486, %v1488
      %v1570 = vsel %vm679, %v1488, %v1490
      %v1571 = vsel %vm679, %v1490, %v1492
      %v1572 = vsel %vm679, %v1492, %v1494
      %v1573 = vsel %vm679, %v1496, %v1498
      %v1574 = vsel %vm679, %v1498, %v1500
      %v1575 = vsel %vm679, %v1500, %v1502
      %v1576 = vsel %vm679, %v1502, %v1504
      %v1577 = vsel %vm679, %v1504, %v1506
      %v1578 = vsel %vm679, %v1506, %v1508
      %v1579 = vsel %vm679, %v1508, %v1510
      %v1580 = vsel %vm679, %v1510, %v1512
      %v1581 = vsel %vm679, %v1514, %v1516
      %v1582 = vsel %vm679, %v1516, %v1518
      %v1583 = vsel %vm679, %v1518, %v1520
      %v1584 = vsel %vm679, %v1520, %v1522
      %v1585 = vsel %vm679, %v1522, %v1524
      %v1586 = vsel %vm679, %v1524, %v1526
      %v1587 = vsel %vm679, %v1526, %v1528
      %v1588 = vsel %vm679, %v1528, %v1530
      %v1589 = vsel %vm679, %v1532, %v1534
      %v1590 = vsel %vm679, %v1534, %v1536
      %v1591 = vsel %vm679, %v1536, %v1538
      %v1592 = vsel %vm679, %v1538, %v1540
      %v1593 = vsel %vm679, %v1540, %v1542
      %v1594 = vsel %vm679, %v1542, %v1544
      %v1595 = vsel %vm679, %v1544, %v1546
      %v1596 = vsel %vm679, %v1546, %v1548
      %v1597 = vld [vmem:[%s5] sm:$0xff]
      %v1599 = vunpack.c.l.b16 %v1597
      %v1600 = vunpack.c.h.b16 %v1597
      %v1601 = vpack.c.b16 %v1599, %v1599
      %v1602 = vpack.c.b16 %v1600, %v1600
      %1670 = vrot.lane.b32.xlu0 %v873, 11
      %v1671 = vpop.permute.xlu0 %1670
      %1672 = vrot.lane.b32.xlu0 %v876, 11
      %v1673 = vpop.permute.xlu0 %1672
      %1674 = vrot.lane.b32.xlu0 %v879, 11
      %v1675 = vpop.permute.xlu0 %1674
      %1676 = vrot.lane.b32.xlu0 %v882, 11
      %v1677 = vpop.permute.xlu0 %1676
      %1678 = vrot.lane.b32.xlu0 %v885, 11
      %v1679 = vpop.permute.xlu0 %1678
      %1680 = vrot.lane.b32.xlu0 %v888, 11
      %v1681 = vpop.permute.xlu0 %1680
      %1682 = vrot.lane.b32.xlu0 %v891, 11
      %v1683 = vpop.permute.xlu0 %1682
      %1684 = vrot.lane.b32.xlu0 %v894, 11
      %v1685 = vpop.permute.xlu0 %1684
      %1686 = vrot.lane.b32.xlu0 %v897, 11
      %v1687 = vpop.permute.xlu0 %1686
      %1688 = vrot.lane.b32.xlu0 %v900, 11
      %v1689 = vpop.permute.xlu0 %1688
      %1690 = vrot.lane.b32.xlu0 %v903, 11
      %v1691 = vpop.permute.xlu0 %1690
      %1692 = vrot.lane.b32.xlu0 %v906, 11
      %v1693 = vpop.permute.xlu0 %1692
      %1694 = vrot.lane.b32.xlu0 %v909, 11
      %v1695 = vpop.permute.xlu0 %1694
      %1696 = vrot.lane.b32.xlu0 %v912, 11
      %v1697 = vpop.permute.xlu0 %1696
      %1698 = vrot.lane.b32.xlu0 %v915, 11
      %v1699 = vpop.permute.xlu0 %1698
      %1700 = vrot.lane.b32.xlu0 %v918, 11
      %v1701 = vpop.permute.xlu0 %1700
      %1702 = vrot.lane.b32.xlu0 %v921, 11
      %v1703 = vpop.permute.xlu0 %1702
      %1704 = vrot.lane.b32.xlu0 %v924, 11
      %v1705 = vpop.permute.xlu0 %1704
      %1706 = vrot.lane.b32.xlu0 %v927, 11
      %v1707 = vpop.permute.xlu0 %1706
      %1708 = vrot.lane.b32.xlu0 %v930, 11
      %v1709 = vpop.permute.xlu0 %1708
      %1710 = vrot.lane.b32.xlu0 %v933, 11
      %v1711 = vpop.permute.xlu0 %1710
      %1712 = vrot.lane.b32.xlu0 %v936, 11
      %v1713 = vpop.permute.xlu0 %1712
      %1714 = vrot.lane.b32.xlu0 %v939, 11
      %v1715 = vpop.permute.xlu0 %1714
      %1716 = vrot.lane.b32.xlu0 %v942, 11
      %v1717 = vpop.permute.xlu0 %1716
      %1718 = vrot.lane.b32.xlu0 %v945, 11
      %v1719 = vpop.permute.xlu0 %1718
      %1720 = vrot.lane.b32.xlu0 %v948, 11
      %v1721 = vpop.permute.xlu0 %1720
      %1722 = vrot.lane.b32.xlu0 %v951, 11
      %v1723 = vpop.permute.xlu0 %1722
      %1724 = vrot.lane.b32.xlu0 %v954, 11
      %v1725 = vpop.permute.xlu0 %1724
      %1726 = vrot.lane.b32.xlu0 %v957, 11
      %v1727 = vpop.permute.xlu0 %1726
      %1728 = vrot.lane.b32.xlu0 %v960, 11
      %v1729 = vpop.permute.xlu0 %1728
      %1730 = vrot.lane.b32.xlu0 %v963, 11
      %v1731 = vpop.permute.xlu0 %1730
      %1732 = vrot.lane.b32.xlu0 %v966, 11
      %v1733 = vpop.permute.xlu0 %1732
      %1734 = vrot.lane.b32.xlu0 %v969, 11
      %v1735 = vpop.permute.xlu0 %1734
      %1736 = vrot.lane.b32.xlu0 %v972, 11
      %v1737 = vpop.permute.xlu0 %1736
      %1738 = vrot.lane.b32.xlu0 %v975, 11
      %v1739 = vpop.permute.xlu0 %1738
      %1740 = vrot.lane.b32.xlu0 %v978, 11
      %v1741 = vpop.permute.xlu0 %1740
      %1742 = vrot.lane.b32.xlu0 %v981, 11
      %v1743 = vpop.permute.xlu0 %1742
      %1744 = vrot.lane.b32.xlu0 %v984, 11
      %v1745 = vpop.permute.xlu0 %1744
      %1746 = vrot.lane.b32.xlu0 %v987, 11
      %v1747 = vpop.permute.xlu0 %1746
      %1748 = vrot.lane.b32.xlu0 %v990, 11
      %v1749 = vpop.permute.xlu0 %1748
      %1750 = vrot.lane.b32.xlu0 %v993, 11
      %v1751 = vpop.permute.xlu0 %1750
      %1752 = vrot.lane.b32.xlu0 %v996, 11
      %v1753 = vpop.permute.xlu0 %1752
      %1754 = vrot.lane.b32.xlu0 %v999, 11
      %v1755 = vpop.permute.xlu0 %1754
      %1756 = vrot.lane.b32.xlu0 %v1002, 11
      %v1757 = vpop.permute.xlu0 %1756
      %1758 = vrot.lane.b32.xlu0 %v1005, 11
      %v1759 = vpop.permute.xlu0 %1758
      %1760 = vrot.lane.b32.xlu0 %v1008, 11
      %v1761 = vpop.permute.xlu0 %1760
      %1762 = vrot.lane.b32.xlu0 %v1011, 11
      %v1763 = vpop.permute.xlu0 %1762
      %1764 = vrot.lane.b32.xlu0 %v1014, 11
      %v1765 = vpop.permute.xlu0 %1764
      %1766 = vrot.lane.b32.xlu0 %v1017, 11
      %v1767 = vpop.permute.xlu0 %1766
      %1768 = vrot.lane.b32.xlu0 %v1020, 11
      %v1769 = vpop.permute.xlu0 %1768
      %1770 = vrot.lane.b32.xlu0 %v1023, 11
      %v1771 = vpop.permute.xlu0 %1770
      %1772 = vrot.lane.b32.xlu0 %v1026, 11
      %v1773 = vpop.permute.xlu0 %1772
      %1774 = vrot.lane.b32.xlu0 %v1029, 11
      %v1775 = vpop.permute.xlu0 %1774
      %1776 = vrot.lane.b32.xlu0 %v1032, 11
      %v1777 = vpop.permute.xlu0 %1776
      %1778 = vrot.lane.b32.xlu0 %v1035, 11
      %v1779 = vpop.permute.xlu0 %1778
      %1780 = vrot.lane.b32.xlu0 %v1038, 11
      %v1781 = vpop.permute.xlu0 %1780
      %1782 = vrot.lane.b32.xlu0 %v1041, 11
      %v1783 = vpop.permute.xlu0 %1782
      %1784 = vrot.lane.b32.xlu0 %v1044, 11
      %v1785 = vpop.permute.xlu0 %1784
      %1786 = vrot.lane.b32.xlu0 %v1047, 11
      %v1787 = vpop.permute.xlu0 %1786
      %1788 = vrot.lane.b32.xlu0 %v1050, 11
      %v1789 = vpop.permute.xlu0 %1788
      %1790 = vrot.lane.b32.xlu0 %v1053, 11
      %v1791 = vpop.permute.xlu0 %1790
      %1792 = vrot.lane.b32.xlu0 %v1056, 11
      %v1793 = vpop.permute.xlu0 %1792
      %1794 = vrot.lane.b32.xlu0 %v1059, 11
      %v1795 = vpop.permute.xlu0 %1794
      %1796 = vrot.lane.b32.xlu0 %v1062, 11
      %v1797 = vpop.permute.xlu0 %1796
      %1798 = vrot.lane.b32.xlu0 %v1065, 11
      %v1799 = vpop.permute.xlu0 %1798
      %1800 = vrot.lane.b32.xlu0 %v1068, 11
      %v1801 = vpop.permute.xlu0 %1800
      %1802 = vrot.lane.b32.xlu0 %v1071, 11
      %v1803 = vpop.permute.xlu0 %1802
      %1804 = vrot.lane.b32.xlu0 %v1074, 11
      %v1805 = vpop.permute.xlu0 %1804
      %1806 = vrot.lane.b32.xlu0 %v1077, 11
      %v1807 = vpop.permute.xlu0 %1806
      %1808 = vrot.lane.b32.xlu0 %v1080, 11
      %v1809 = vpop.permute.xlu0 %1808
      %1810 = vrot.lane.b32.xlu0 %v1083, 11
      %v1811 = vpop.permute.xlu0 %1810
      %1812 = vrot.lane.b32.xlu0 %v1086, 11
      %v1813 = vpop.permute.xlu0 %1812
      %1814 = vrot.lane.b32.xlu0 %v1442, 11
      %v1815 = vpop.permute.xlu0 %1814
      %1816 = vrot.lane.b32.xlu0 %v1549, 11
      %v1817 = vpop.permute.xlu0 %1816
      %1818 = vrot.lane.b32.xlu0 %v1550, 11
      %v1819 = vpop.permute.xlu0 %1818
      %1820 = vrot.lane.b32.xlu0 %v1551, 11
      %v1821 = vpop.permute.xlu0 %1820
      %1822 = vrot.lane.b32.xlu0 %v1552, 11
      %v1823 = vpop.permute.xlu0 %1822
      %1824 = vrot.lane.b32.xlu0 %v1553, 11
      %v1825 = vpop.permute.xlu0 %1824
      %1826 = vrot.lane.b32.xlu0 %v1554, 11
      %v1827 = vpop.permute.xlu0 %1826
      %1828 = vrot.lane.b32.xlu0 %v1555, 11
      %v1829 = vpop.permute.xlu0 %1828
      %1830 = vrot.lane.b32.xlu0 %v1556, 11
      %v1831 = vpop.permute.xlu0 %1830
      %1832 = vrot.lane.b32.xlu0 %v1460, 11
      %v1833 = vpop.permute.xlu0 %1832
      %1834 = vrot.lane.b32.xlu0 %v1557, 11
      %v1835 = vpop.permute.xlu0 %1834
      %1836 = vrot.lane.b32.xlu0 %v1558, 11
      %v1837 = vpop.permute.xlu0 %1836
      %1838 = vrot.lane.b32.xlu0 %v1559, 11
      %v1839 = vpop.permute.xlu0 %1838
      %1840 = vrot.lane.b32.xlu0 %v1560, 11
      %v1841 = vpop.permute.xlu0 %1840
      %1842 = vrot.lane.b32.xlu0 %v1561, 11
      %v1843 = vpop.permute.xlu0 %1842
      %1844 = vrot.lane.b32.xlu0 %v1562, 11
      %v1845 = vpop.permute.xlu0 %1844
      %1846 = vrot.lane.b32.xlu0 %v1563, 11
      %v1847 = vpop.permute.xlu0 %1846
      %1848 = vrot.lane.b32.xlu0 %v1564, 11
      %v1849 = vpop.permute.xlu0 %1848
      %1850 = vrot.lane.b32.xlu0 %v1478, 11
      %v1851 = vpop.permute.xlu0 %1850
      %1852 = vrot.lane.b32.xlu0 %v1565, 11
      %v1853 = vpop.permute.xlu0 %1852
      %1854 = vrot.lane.b32.xlu0 %v1566, 11
      %v1855 = vpop.permute.xlu0 %1854
      %1856 = vrot.lane.b32.xlu0 %v1567, 11
      %v1857 = vpop.permute.xlu0 %1856
      %1858 = vrot.lane.b32.xlu0 %v1568, 11
      %v1859 = vpop.permute.xlu0 %1858
      %1860 = vrot.lane.b32.xlu0 %v1569, 11
      %v1861 = vpop.permute.xlu0 %1860
      %1862 = vrot.lane.b32.xlu0 %v1570, 11
      %v1863 = vpop.permute.xlu0 %1862
      %1864 = vrot.lane.b32.xlu0 %v1571, 11
      %v1865 = vpop.permute.xlu0 %1864
      %1866 = vrot.lane.b32.xlu0 %v1572, 11
      %v1867 = vpop.permute.xlu0 %1866
      %1868 = vrot.lane.b32.xlu0 %v1496, 11
      %v1869 = vpop.permute.xlu0 %1868
      %1870 = vrot.lane.b32.xlu0 %v1573, 11
      %v1871 = vpop.permute.xlu0 %1870
      %1872 = vrot.lane.b32.xlu0 %v1574, 11
      %v1873 = vpop.permute.xlu0 %1872
      %1874 = vrot.lane.b32.xlu0 %v1575, 11
      %v1875 = vpop.permute.xlu0 %1874
      %1876 = vrot.lane.b32.xlu0 %v1576, 11
      %v1877 = vpop.permute.xlu0 %1876
      %1878 = vrot.lane.b32.xlu0 %v1577, 11
      %v1879 = vpop.permute.xlu0 %1878
      %1880 = vrot.lane.b32.xlu0 %v1578, 11
      %v1881 = vpop.permute.xlu0 %1880
      %1882 = vrot.lane.b32.xlu0 %v1579, 11
      %v1883 = vpop.permute.xlu0 %1882
      %1884 = vrot.lane.b32.xlu0 %v1580, 11
      %v1885 = vpop.permute.xlu0 %1884
      %1886 = vrot.lane.b32.xlu0 %v1514, 11
      %v1887 = vpop.permute.xlu0 %1886
      %1888 = vrot.lane.b32.xlu0 %v1581, 11
      %v1889 = vpop.permute.xlu0 %1888
      %1890 = vrot.lane.b32.xlu0 %v1582, 11
      %v1891 = vpop.permute.xlu0 %1890
      %1892 = vrot.lane.b32.xlu0 %v1583, 11
      %v1893 = vpop.permute.xlu0 %1892
      %1894 = vrot.lane.b32.xlu0 %v1584, 11
      %v1895 = vpop.permute.xlu0 %1894
      %1896 = vrot.lane.b32.xlu0 %v1585, 11
      %v1897 = vpop.permute.xlu0 %1896
      %1898 = vrot.lane.b32.xlu0 %v1586, 11
      %v1899 = vpop.permute.xlu0 %1898
      %1900 = vrot.lane.b32.xlu0 %v1587, 11
      %v1901 = vpop.permute.xlu0 %1900
      %1902 = vrot.lane.b32.xlu0 %v1588, 11
      %v1903 = vpop.permute.xlu0 %1902
      %1904 = vrot.lane.b32.xlu0 %v1532, 11
      %v1905 = vpop.permute.xlu0 %1904
      %1906 = vrot.lane.b32.xlu0 %v1589, 11
      %v1907 = vpop.permute.xlu0 %1906
      %1908 = vrot.lane.b32.xlu0 %v1590, 11
      %v1909 = vpop.permute.xlu0 %1908
      %1910 = vrot.lane.b32.xlu0 %v1591, 11
      %v1911 = vpop.permute.xlu0 %1910
      %1912 = vrot.lane.b32.xlu0 %v1592, 11
      %v1913 = vpop.permute.xlu0 %1912
      %1914 = vrot.lane.b32.xlu0 %v1593, 11
      %v1915 = vpop.permute.xlu0 %1914
      %1916 = vrot.lane.b32.xlu0 %v1594, 11
      %v1917 = vpop.permute.xlu0 %1916
      %1918 = vrot.lane.b32.xlu0 %v1595, 11
      %v1919 = vpop.permute.xlu0 %1918
      %1920 = vrot.lane.b32.xlu0 %v1596, 11
      %v1921 = vpop.permute.xlu0 %1920
      %v1922 = vsel %vm1192, %v1671, %v1673
      %v1923 = vsel %vm1192, %v1673, %v1675
      %v1924 = vsel %vm1192, %v1675, %v1677
      %v1925 = vsel %vm1192, %v1677, %v1679
      %v1926 = vsel %vm1192, %v1679, %v1681
      %v1927 = vsel %vm1192, %v1681, %v1683
      %v1928 = vsel %vm1192, %v1683, %v1685
      %v1929 = vsel %vm1192, %v1685, %v1687
      %v1930 = vsel %vm1192, %v1689, %v1691
      %v1931 = vsel %vm1192, %v1691, %v1693
      %v1932 = vsel %vm1192, %v1693, %v1695
      %v1933 = vsel %vm1192, %v1695, %v1697
      %v1934 = vsel %vm1192, %v1697, %v1699
      %v1935 = vsel %vm1192, %v1699, %v1701
      %v1936 = vsel %vm1192, %v1701, %v1703
      %v1937 = vsel %vm1192, %v1703, %v1705
      %v1938 = vsel %vm1192, %v1707, %v1709
      %v1939 = vsel %vm1192, %v1709, %v1711
      %v1940 = vsel %vm1192, %v1711, %v1713
      %v1941 = vsel %vm1192, %v1713, %v1715
      %v1942 = vsel %vm1192, %v1715, %v1717
      %v1943 = vsel %vm1192, %v1717, %v1719
      %v1944 = vsel %vm1192, %v1719, %v1721
      %v1945 = vsel %vm1192, %v1721, %v1723
      %v1946 = vsel %vm1192, %v1725, %v1727
      %v1947 = vsel %vm1192, %v1727, %v1729
      %v1948 = vsel %vm1192, %v1729, %v1731
      %v1949 = vsel %vm1192, %v1731, %v1733
      %v1950 = vsel %vm1192, %v1733, %v1735
      %v1951 = vsel %vm1192, %v1735, %v1737
      %v1952 = vsel %vm1192, %v1737, %v1739
      %v1953 = vsel %vm1192, %v1739, %v1741
      %v1954 = vsel %vm1192, %v1743, %v1745
      %v1955 = vsel %vm1192, %v1745, %v1747
      %v1956 = vsel %vm1192, %v1747, %v1749
      %v1957 = vsel %vm1192, %v1749, %v1751
      %v1958 = vsel %vm1192, %v1751, %v1753
      %v1959 = vsel %vm1192, %v1753, %v1755
      %v1960 = vsel %vm1192, %v1755, %v1757
      %v1961 = vsel %vm1192, %v1757, %v1759
      %v1962 = vsel %vm1192, %v1761, %v1763
      %v1963 = vsel %vm1192, %v1763, %v1765
      %v1964 = vsel %vm1192, %v1765, %v1767
      %v1965 = vsel %vm1192, %v1767, %v1769
      %v1966 = vsel %vm1192, %v1769, %v1771
      %v1967 = vsel %vm1192, %v1771, %v1773
      %v1968 = vsel %vm1192, %v1773, %v1775
      %v1969 = vsel %vm1192, %v1775, %v1777
      %v1970 = vsel %vm1192, %v1779, %v1781
      %v1971 = vsel %vm1192, %v1781, %v1783
      %v1972 = vsel %vm1192, %v1783, %v1785
      %v1973 = vsel %vm1192, %v1785, %v1787
      %v1974 = vsel %vm1192, %v1787, %v1789
      %v1975 = vsel %vm1192, %v1789, %v1791
      %v1976 = vsel %vm1192, %v1791, %v1793
      %v1977 = vsel %vm1192, %v1793, %v1795
      %v1978 = vsel %vm1192, %v1797, %v1799
      %v1979 = vsel %vm1192, %v1799, %v1801
      %v1980 = vsel %vm1192, %v1801, %v1803
      %v1981 = vsel %vm1192, %v1803, %v1805
      %v1982 = vsel %vm1192, %v1805, %v1807
      %v1983 = vsel %vm1192, %v1807, %v1809
      %v1984 = vsel %vm1192, %v1809, %v1811
      %v1985 = vsel %vm1192, %v1811, %v1813
      %v1986 = vsel %vm1192, %v1815, %v1817
      %v1987 = vsel %vm1192, %v1817, %v1819
      %v1988 = vsel %vm1192, %v1819, %v1821
      %v1989 = vsel %vm1192, %v1821, %v1823
      %v1990 = vsel %vm1192, %v1823, %v1825
      %v1991 = vsel %vm1192, %v1825, %v1827
      %v1992 = vsel %vm1192, %v1827, %v1829
      %v1993 = vsel %vm1192, %v1829, %v1831
      %v1994 = vsel %vm1192, %v1833, %v1835
      %v1995 = vsel %vm1192, %v1835, %v1837
      %v1996 = vsel %vm1192, %v1837, %v1839
      %v1997 = vsel %vm1192, %v1839, %v1841
      %v1998 = vsel %vm1192, %v1841, %v1843
      %v1999 = vsel %vm1192, %v1843, %v1845
      %v2000 = vsel %vm1192, %v1845, %v1847
      %v2001 = vsel %vm1192, %v1847, %v1849
      %v2002 = vsel %vm1192, %v1851, %v1853
      %v2003 = vsel %vm1192, %v1853, %v1855
      %v2004 = vsel %vm1192, %v1855, %v1857
      %v2005 = vsel %vm1192, %v1857, %v1859
      %v2006 = vsel %vm1192, %v1859, %v1861
      %v2007 = vsel %vm1192, %v1861, %v1863
      %v2008 = vsel %vm1192, %v1863, %v1865
      %v2009 = vsel %vm1192, %v1865, %v1867
      %v2010 = vsel %vm1192, %v1869, %v1871
      %v2011 = vsel %vm1192, %v1871, %v1873
      %v2012 = vsel %vm1192, %v1873, %v1875
      %v2013 = vsel %vm1192, %v1875, %v1877
      %v2014 = vsel %vm1192, %v1877, %v1879
      %v2015 = vsel %vm1192, %v1879, %v1881
      %v2016 = vsel %vm1192, %v1881, %v1883
      %v2017 = vsel %vm1192, %v1883, %v1885
      %v2018 = vsel %vm1192, %v1887, %v1889
      %v2019 = vsel %vm1192, %v1889, %v1891
      %v2020 = vsel %vm1192, %v1891, %v1893
      %v2021 = vsel %vm1192, %v1893, %v1895
      %v2022 = vsel %vm1192, %v1895, %v1897
      %v2023 = vsel %vm1192, %v1897, %v1899
      %v2024 = vsel %vm1192, %v1899, %v1901
      %v2025 = vsel %vm1192, %v1901, %v1903
      %v2026 = vsel %vm1192, %v1905, %v1907
      %v2027 = vsel %vm1192, %v1907, %v1909
      %v2028 = vsel %vm1192, %v1909, %v1911
      %v2029 = vsel %vm1192, %v1911, %v1913
      %v2030 = vsel %vm1192, %v1913, %v1915
      %v2031 = vsel %vm1192, %v1915, %v1917
      %v2032 = vsel %vm1192, %v1917, %v1919
      %v2033 = vsel %vm1192, %v1919, %v1921
      %vm2138 = vcmask 719872
      %v2140 = vsel %vm2138, %v1602, 0
      %v2143 = vsel %vm870, %v2026, 0
      %v2146 = vsel %vm870, %v2027, 0
      %v2149 = vsel %vm870, %v2028, 0
      %v2152 = vsel %vm870, %v2029, 0
      %v2155 = vsel %vm870, %v2030, 0
      %v2158 = vsel %vm870, %v2031, 0
      %v2161 = vsel %vm870, %v2032, 0
      %v2164 = vsel %vm870, %v2033, 0
      %2166 = vmatprep.subr.bf16.mxu0 %v1979
      %2167 = vmatpush1.bf16.msra.mxu0 %v1978
      %2168 = vmatprep.subr.bf16.mxu0 %v1971
      %2169 = vmatpush1.bf16.msra.mxu0 %v1970
      %2170 = vmatprep.subr.bf16.mxu0 %v1963
      %2171 = vmatpush1.bf16.msra.mxu0 %v1962
      %2172 = vmatprep.subr.bf16.mxu0 %v1955
      %2173 = vmatpush1.bf16.msra.mxu0 %v1954
      %2174 = vmatprep.subr.bf16.mxu0 %v1947
      %2175 = vmatpush1.bf16.msra.mxu0 %v1946
      %2176 = vmatprep.subr.bf16.mxu0 %v1939
      %2177 = vmatpush1.bf16.msra.mxu0 %v1938
      %2178 = vmatprep.subr.bf16.mxu0 %v1931
      %2179 = vmatpush1.bf16.msra.mxu0 %v1930
      %2180 = vmatprep.subr.bf16.mxu0 %v1923
      %2181 = vmatpush1.bf16.msra.mxu0 %v1922
      %2182 = vmatprep.subr.bf16.mxu0 0
      %2183 = vmatpush2.bf16.msra.mxu0 0
      %2184 = vmatprep.subr.bf16.mxu0 0
      %2185 = vmatpush2.bf16.msra.mxu0 0
      %2186 = vmatprep.subr.bf16.mxu0 %v2146
      %2187 = vmatpush2.bf16.msra.mxu0 %v2143
      %2188 = vmatprep.subr.bf16.mxu0 %v2019
      %2189 = vmatpush2.bf16.msra.mxu0 %v2018
      %2190 = vmatprep.subr.bf16.mxu0 %v2011
      %2191 = vmatpush2.bf16.msra.mxu0 %v2010
      %2192 = vmatprep.subr.bf16.mxu0 %v2003
      %2193 = vmatpush2.bf16.msra.mxu0 %v2002
      %2194 = vmatprep.subr.bf16.mxu0 %v1995
      %2195 = vmatpush2.bf16.msra.mxu0 %v1994
      %2196 = vmatprep.subr.bf16.mxu0 %v1987
      %2197 = vmatpush2.bf16.msra.mxu0 %v1986
      %2198 = vmatprep.mubr.bf16.mxu0 %v2140
      %2199 = vmatmul.mubr.bf16.gmra.mxu0 %v1601
      %v2200 = vpop.f32.mrf.mxu0
      %v2201 = vadd.f32 0.0, %v2200
      %v2202 = vpop.f32.mrf.mxu0
      %v2203 = vadd.f32 0.0, %v2202
      %v2204 = vpop.f32.mrf.mxu0
      %v2205 = vpop.f32.mrf.mxu0
      %2206 = vdwg.mxu0
      %2207 = vmatprep.subr.bf16.mxu0 %v1981
      %2208 = vmatpush1.bf16.msra.mxu0 %v1980
      %2209 = vmatprep.subr.bf16.mxu0 %v1973
      %2210 = vmatpush1.bf16.msra.mxu0 %v1972
      %2211 = vmatprep.subr.bf16.mxu0 %v1965
      %2212 = vmatpush1.bf16.msra.mxu0 %v1964
      %2213 = vmatprep.subr.bf16.mxu0 %v1957
      %2214 = vmatpush1.bf16.msra.mxu0 %v1956
      %2215 = vmatprep.subr.bf16.mxu0 %v1949
      %2216 = vmatpush1.bf16.msra.mxu0 %v1948
      %2217 = vmatprep.subr.bf16.mxu0 %v1941
      %2218 = vmatpush1.bf16.msra.mxu0 %v1940
      %2219 = vmatprep.subr.bf16.mxu0 %v1933
      %2220 = vmatpush1.bf16.msra.mxu0 %v1932
      %2221 = vmatprep.subr.bf16.mxu0 %v1925
      %2222 = vmatpush1.bf16.msra.mxu0 %v1924
      %2223 = vmatprep.subr.bf16.mxu0 0
      %2224 = vmatpush2.bf16.msra.mxu0 0
      %2225 = vmatprep.subr.bf16.mxu0 0
      %2226 = vmatpush2.bf16.msra.mxu0 0
      %2227 = vmatprep.subr.bf16.mxu0 %v2152
      %2228 = vmatpush2.bf16.msra.mxu0 %v2149
      %2229 = vmatprep.subr.bf16.mxu0 %v2021
      %2230 = vmatpush2.bf16.msra.mxu0 %v2020
      %2231 = vmatprep.subr.bf16.mxu0 %v2013
      %2232 = vmatpush2.bf16.msra.mxu0 %v2012
      %2233 = vmatprep.subr.bf16.mxu0 %v2005
      %2234 = vmatpush2.bf16.msra.mxu0 %v2004
      %2235 = vmatprep.subr.bf16.mxu0 %v1997
      %2236 = vmatpush2.bf16.msra.mxu0 %v1996
      %2237 = vmatprep.subr.bf16.mxu0 %v1989
      %2238 = vmatpush2.bf16.msra.mxu0 %v1988
      %2239 = vmatprep.mubr.bf16.mxu0 %v2140
      %2240 = vmatmul.mubr.bf16.gmra.mxu0 %v1601
      %v2241 = vpop.f32.mrf.mxu0
      %v2242 = vadd.f32 0.0, %v2241
      %v2243 = vpop.f32.mrf.mxu0
      %v2244 = vadd.f32 0.0, %v2243
      %v2245 = vpop.f32.mrf.mxu0
      %v2246 = vpop.f32.mrf.mxu0
      %2247 = vdwg.mxu0
      %2248 = vmatprep.subr.bf16.mxu0 %v1983
      %2249 = vmatpush1.bf16.msra.mxu0 %v1982
      %2250 = vmatprep.subr.bf16.mxu0 %v1975
      %2251 = vmatpush1.bf16.msra.mxu0 %v1974
      %2252 = vmatprep.subr.bf16.mxu0 %v1967
      %2253 = vmatpush1.bf16.msra.mxu0 %v1966
      %2254 = vmatprep.subr.bf16.mxu0 %v1959
      %2255 = vmatpush1.bf16.msra.mxu0 %v1958
      %2256 = vmatprep.subr.bf16.mxu0 %v1951
      %2257 = vmatpush1.bf16.msra.mxu0 %v1950
      %2258 = vmatprep.subr.bf16.mxu0 %v1943
      %2259 = vmatpush1.bf16.msra.mxu0 %v1942
      %2260 = vmatprep.subr.bf16.mxu0 %v1935
      %2261 = vmatpush1.bf16.msra.mxu0 %v1934
      %2262 = vmatprep.subr.bf16.mxu0 %v1927
      %2263 = vmatpush1.bf16.msra.mxu0 %v1926
      %2264 = vmatprep.subr.bf16.mxu0 0
      %2265 = vmatpush2.bf16.msra.mxu0 0
      %2266 = vmatprep.subr.bf16.mxu0 0
      %2267 = vmatpush2.bf16.msra.mxu0 0
      %2268 = vmatprep.subr.bf16.mxu0 %v2158
      %2269 = vmatpush2.bf16.msra.mxu0 %v2155
      %2270 = vmatprep.subr.bf16.mxu0 %v2023
      %2271 = vmatpush2.bf16.msra.mxu0 %v2022
      %2272 = vmatprep.subr.bf16.mxu0 %v2015
      %2273 = vmatpush2.bf16.msra.mxu0 %v2014
      %2274 = vmatprep.subr.bf16.mxu0 %v2007
      %2275 = vmatpush2.bf16.msra.mxu0 %v2006
      %2276 = vmatprep.subr.bf16.mxu0 %v1999
      %2277 = vmatpush2.bf16.msra.mxu0 %v1998
      %2278 = vmatprep.subr.bf16.mxu0 %v1991
      %2279 = vmatpush2.bf16.msra.mxu0 %v1990
      %2280 = vmatprep.mubr.bf16.mxu0 %v2140
      %2281 = vmatmul.mubr.bf16.gmra.mxu0 %v1601
      %v2282 = vpop.f32.mrf.mxu0
      %v2283 = vadd.f32 0.0, %v2282
      %v2284 = vpop.f32.mrf.mxu0
      %v2285 = vadd.f32 0.0, %v2284
      %v2286 = vpop.f32.mrf.mxu0
      %v2287 = vpop.f32.mrf.mxu0
      %2288 = vdwg.mxu0
      %2289 = vmatprep.subr.bf16.mxu0 %v1985
      %2290 = vmatpush1.bf16.msra.mxu0 %v1984
      %2291 = vmatprep.subr.bf16.mxu0 %v1977
      %2292 = vmatpush1.bf16.msra.mxu0 %v1976
      %2293 = vmatprep.subr.bf16.mxu0 %v1969
      %2294 = vmatpush1.bf16.msra.mxu0 %v1968
      %2295 = vmatprep.subr.bf16.mxu0 %v1961
      %2296 = vmatpush1.bf16.msra.mxu0 %v1960
      %2297 = vmatprep.subr.bf16.mxu0 %v1953
      %2298 = vmatpush1.bf16.msra.mxu0 %v1952
      %2299 = vmatprep.subr.bf16.mxu0 %v1945
      %2300 = vmatpush1.bf16.msra.mxu0 %v1944
      %2301 = vmatprep.subr.bf16.mxu0 %v1937
      %2302 = vmatpush1.bf16.msra.mxu0 %v1936
      %2303 = vmatprep.subr.bf16.mxu0 %v1929
      %2304 = vmatpush1.bf16.msra.mxu0 %v1928
      %2305 = vmatprep.subr.bf16.mxu0 0
      %2306 = vmatpush2.bf16.msra.mxu0 0
      %2307 = vmatprep.subr.bf16.mxu0 0
      %2308 = vmatpush2.bf16.msra.mxu0 0
      %2309 = vmatprep.subr.bf16.mxu0 %v2164
      %2310 = vmatpush2.bf16.msra.mxu0 %v2161
      %2311 = vmatprep.subr.bf16.mxu0 %v2025
      %2312 = vmatpush2.bf16.msra.mxu0 %v2024
      %2313 = vmatprep.subr.bf16.mxu0 %v2017
      %2314 = vmatpush2.bf16.msra.mxu0 %v2016
      %2315 = vmatprep.subr.bf16.mxu0 %v2009
      %2316 = vmatpush2.bf16.msra.mxu0 %v2008
      %2317 = vmatprep.subr.bf16.mxu0 %v2001
      %2318 = vmatpush2.bf16.msra.mxu0 %v2000
      %2319 = vmatprep.subr.bf16.mxu0 %v1993
      %2320 = vmatpush2.bf16.msra.mxu0 %v1992
      %2321 = vmatprep.mubr.bf16.mxu0 %v2140
      %2322 = vmatmul.mubr.bf16.gmra.mxu0 %v1601
      %v2323 = vpop.f32.mrf.mxu0
      %v2324 = vadd.f32 0.0, %v2323
      %v2325 = vpop.f32.mrf.mxu0
      %v2326 = vadd.f32 0.0, %v2325
      %v2327 = vpop.f32.mrf.mxu0
      %v2328 = vpop.f32.mrf.mxu0
      %2329 = vdwg.mxu0
      %v2330 = vld [vmem:[%s2] sm:$0xff]
      %v2332 = vlaneseq
      %v2333 = vshrl.u32 %v2332, 7
      %v2334 = vsub.s32 0, %v2333
      %v2335 = vrot.slane %v2330, %v2334
      %v2336 = vlaneseq
      %v2337 = vshrl.u32 %v2336, 7
      %v2338 = vsub.s32 1, %v2337
      %v2339 = vrot.slane %v2330, %v2338
      %v2340 = vlaneseq
      %v2341 = vshrl.u32 %v2340, 7
      %v2342 = vsub.s32 2, %v2341
      %v2343 = vrot.slane %v2330, %v2342
      %v2344 = vlaneseq
      %v2345 = vshrl.u32 %v2344, 7
      %v2346 = vsub.s32 3, %v2345
      %v2347 = vrot.slane %v2330, %v2346
      %v2348 = vlaneseq
      %v2349 = vshrl.u32 %v2348, 7
      %v2350 = vsub.s32 4, %v2349
      %v2351 = vrot.slane %v2330, %v2350
      %v2352 = vlaneseq
      %v2353 = vshrl.u32 %v2352, 7
      %v2354 = vsub.s32 5, %v2353
      %v2355 = vrot.slane %v2330, %v2354
      %v2356 = vlaneseq
      %v2357 = vshrl.u32 %v2356, 7
      %v2358 = vsub.s32 6, %v2357
      %v2359 = vrot.slane %v2330, %v2358
      %v2360 = vlaneseq
      %v2361 = vshrl.u32 %v2360, 7
      %v2362 = vsub.s32 7, %v2361
      %v2363 = vrot.slane %v2330, %v2362
      %v2372 = vmul.f32 %v2201, %v2335
      %v2373 = vmul.f32 %v2203, %v2339
      %v2374 = vmul.f32 %v2242, %v2343
      %v2375 = vmul.f32 %v2244, %v2347
      %v2376 = vmul.f32 %v2283, %v2351
      %v2377 = vmul.f32 %v2285, %v2355
      %v2378 = vmul.f32 %v2324, %v2359
      %v2379 = vmul.f32 %v2326, %v2363
      %v2380 = vpack.c.bf16 %v2372, %v2372
      %v2381 = vpack.c.bf16 %v2373, %v2373
      %v2382 = vpack.c.bf16 %v2374, %v2374
      %v2383 = vpack.c.bf16 %v2375, %v2375
      %v2384 = vpack.c.bf16 %v2376, %v2376
      %v2385 = vpack.c.bf16 %v2377, %v2377
      %v2386 = vpack.c.bf16 %v2378, %v2378
      %v2387 = vpack.c.bf16 %v2379, %v2379
      %v2396 = vunpack.c.l.b16 %v2380
      %v2397 = vunpack.c.l.b16 %v2381
      %v2398 = vunpack.c.l.b16 %v2382
      %v2399 = vunpack.c.l.b16 %v2383
      %v2400 = vunpack.c.l.b16 %v2384
      %v2401 = vunpack.c.l.b16 %v2385
      %v2402 = vunpack.c.l.b16 %v2386
      %v2403 = vunpack.c.l.b16 %v2387
      %v2404 = vpack.c.b16 %v2397, %v2396
      %v2405 = vpack.c.b16 %v2399, %v2398
      %v2406 = vpack.c.b16 %v2401, %v2400
      %v2407 = vpack.c.b16 %v2403, %v2402
      %2412 = vst [vmem:[%s312] sm:$0xff] %v2404
      %2413 = vst [vmem:[%s312 + $0x8] sm:$0xff] %v2405
      %2414 = vst [vmem:[%s312 + $0x10] sm:$0xff] %v2406
      %2415 = vst [vmem:[%s312 + $0x18] sm:$0xff] %v2407
      %v2416 = vadd.f32 %v2372, %v2373
      %v2417 = vadd.f32 %v2416, %v2374
      %v2418 = vadd.f32 %v2417, %v2375
      %v2419 = vadd.f32 %v2418, %v2376
      %v2420 = vadd.f32 %v2419, %v2377
      %v2421 = vadd.f32 %v2420, %v2378
      %v2422 = vadd.f32 %v2421, %v2379
      %2423 = vadd.xlane.f32.xlu0 %v2422
      %v2424 = vpop.xlane.xlu0 %2423
      %v2425 = vmul.f32 %v2372, %v2372
      %v2426 = vmul.f32 %v2373, %v2373
      %v2427 = vmul.f32 %v2374, %v2374
      %v2428 = vmul.f32 %v2375, %v2375
      %v2429 = vmul.f32 %v2376, %v2376
      %v2430 = vmul.f32 %v2377, %v2377
      %v2431 = vmul.f32 %v2378, %v2378
      %v2432 = vmul.f32 %v2379, %v2379
      %v2433 = vadd.f32 %v2425, %v2426
      %v2434 = vadd.f32 %v2433, %v2427
      %v2435 = vadd.f32 %v2434, %v2428
      %v2436 = vadd.f32 %v2435, %v2429
      %v2437 = vadd.f32 %v2436, %v2430
      %v2438 = vadd.f32 %v2437, %v2431
      %v2439 = vadd.f32 %v2438, %v2432
      %2440 = vadd.xlane.f32.xlu0 %v2439
      %v2441 = vpop.xlane.xlu0 %2440
      %vm2442 = vcmask 7168
      %v2443 = vsel %vm2442, %v2424, %v2441
      %vm2444 = vcmask 15360
      %2445 = vst.msk [vmem:[%s320] sm:$0xff] %vm2444, %v2443
      %s2446 = smul.u32 8, %s24
      %p2447 = scmp.lt.s32.totalorder %s23, 1
      %s2448 = scalar_select %p2447, %s23, 1
      %p2449 = scmp.lt.s32.totalorder %s2446, 7
      %s2450 = scalar_select %p2449, %s2446, 7
      %s2451 = smul.addr %s2448, 8
      %s2452 = sadd.s32 %s2450, %s2451
      %s2453 = smul.addr %s2452, 4
      %s2454 = scalar_lea.vmem %s6, %s2453
      %p2455 = scmp.lt.s32.totalorder %s23, 1
      %s2456 = scalar_select %p2455, %s23, 1
      %p2457 = scmp.lt.s32.totalorder %s24, 0
      %s2458 = scalar_select %p2457, %s24, 0
      %s2459 = sadd.s32 %s2458, %s2456
      %s2460 = smul.addr %s2459, 8
      %s2461 = scalar_lea.vmem %s7, %s2460
      // Predicated region
      $region45: #{pre_activation_bottleneck.4} parent=43 // pred_check
        %p2462 = pneg %p182
      $region46: #{pre_activation_bottleneck.4} parent=43 // pred_check_branch
        %2464 = sbr.rel (%p2462) target = $region48
      $region47: #{pre_activation_bottleneck.4} parent=43 // pred_region
        %s2465 = smul.u32 8, %s24
      $region48: #{pre_activation_bottleneck.4} parent=43 // pred_fallthru
        _
      // Predicated region
      $region49: #{pre_activation_bottleneck.4} parent=43 // pred_check
        %p2466 = pneg %p210
      $region50: #{pre_activation_bottleneck.4} parent=43 // pred_check_branch
        %2468 = sbr.rel (%p2466) target = $region52
      $region51: #{pre_activation_bottleneck.4} parent=43 // pred_region
        _
      $region52: #{pre_activation_bottleneck.4} parent=43 // pred_fallthru
        _
    $region44: #{pre_activation_bottleneck.4} parent=5 // pred_fallthru
      _
    %p2469 = scmp.le.s32.totalorder 2, %s14
    // Predicated region
    $region53: #{pre_activation_bottleneck.4} parent=5 // pred_check
      %p2470 = pneg %p2469
    $region54: #{pre_activation_bottleneck.4} parent=5 // pred_check_branch
      %2472 = sbr.rel (%p2470) target = $region56
    $region55: #{pre_activation_bottleneck.4} parent=5 // pred_region
      %s2473 = ssub.s32 %s14, 2
      // Predicated region
      $region57: #{pre_activation_bottleneck.4} parent=55 // pred_check
        %p2474 = pneg %p188
      $region58: #{pre_activation_bottleneck.4} parent=55 // pred_check_branch
        %2476 = sbr.rel (%p2474) target = $region60
      $region59: #{pre_activation_bottleneck.4} parent=55 // pred_region
        %s2477 = smul.u32 8, %s26
        %p2478 = scmp.lt.s32.totalorder %s25, 1
        %s2479 = scalar_select %p2478, %s25, 1
        %p2480 = scmp.lt.s32.totalorder %s2477, 7
        %s2481 = scalar_select %p2480, %s2477, 7
        %s2482 = smul.addr %s2479, 8
        %s2483 = sadd.s32 %s2481, %s2482
        %s2484 = smul.addr %s2483, 4
        %s2485 = scalar_lea.vmem %s6, %s2484
      $region60: #{pre_activation_bottleneck.4} parent=55 // pred_fallthru
        _
      // Predicated region
      $region61: #{pre_activation_bottleneck.4} parent=55 // pred_check
        %p2486 = pneg %p216
      $region62: #{pre_activation_bottleneck.4} parent=55 // pred_check_branch
        %2488 = sbr.rel (%p2486) target = $region64
      $region63: #{pre_activation_bottleneck.4} parent=55 // pred_region
        %p2489 = scmp.lt.s32.totalorder %s25, 1
        %s2490 = scalar_select %p2489, %s25, 1
        %p2491 = scmp.lt.s32.totalorder %s26, 0
        %s2492 = scalar_select %p2491, %s26, 0
        %s2493 = sadd.s32 %s2492, %s2490
        %s2494 = smul.addr %s2493, 8
        %s2495 = scalar_lea.vmem %s7, %s2494
      $region64: #{pre_activation_bottleneck.4} parent=55 // pred_fallthru
        _
    $region56: #{pre_activation_bottleneck.4} parent=5 // pred_fallthru
      _
  $region6: #{pre_activation_bottleneck.4} parent=0 // loop_footer
    %s18 = sadd.s32 1, %s14
  $region7: #{pre_activation_bottleneck.4} parent=0 // loop_footer_branch
    %13 = sbr.rel target = $region3
  $region8: #{pre_activation_bottleneck.4} parent=0 // loop_exit
    _

</llo_original>
